<compile_context>
chip_gen: v5e
topology: v5e:2x2
jax: 0.10.0
libtpu: 0.0.40
codegen_flags: <defaults>
</compile_context>

<pallas_src>
import math
import jax
import jax.numpy as jnp
from jax import lax
from jax.experimental import pallas as pl
from jax.experimental.pallas import tpu as pltpu

# ----------------------------- configuration --------------------------------
B, CIN, H, W = 2, 3, 16, 16      # input images (B, C, H, W)
P = H * W                        # pixels per image
BP = B * P                       # batch folded into lanes (lane-dense axis)
CF = 32                          # RPN stem feature channels
K = 8                            # proposals kept per image (fixed top-k)
BK = B * K
NREG = 5                         # (dx, dy, dw, dh, dangle)
NH = 1 + NREG                    # fused head rows: [objectness, 5 deltas]
BASE = 8.0                       # anchor base size
MH, MW = W, H                    # mask raster size
MP = MH * MW                     # flattened mask pixels (lane-dense axis)
LOG2_W = W.bit_length() - 1
LOG2_MW = MW.bit_length() - 1
MAX_RATIO = abs(math.log(16.0 / 1000.0))   # mmrotate delta2bbox wh_ratio_clip

assert W & (W - 1) == 0, "W must be a power of two (bit tricks in-kernel)"
assert MW & (MW - 1) == 0 and (1 << LOG2_MW) == MW


# ========================= single fused forward kernel =======================
def obb_rpn_kernel(x_ref, wstem_ref, bstem_ref, whead_ref, bhead_ref,
                   scores_ref, boxes_ref, masks_ref):
    # x_ref:     (CIN, BP)  f32   batch folded into lanes: lane = b*P + h*W + w
    # wstem_ref: (CF, 27)   bf16  3x3 conv weights, col = (kh*3+kw)*CIN + ci
    # bstem_ref: (CF, 1)    f32
    # whead_ref: (NH, CF)   bf16  fused 1x1 cls (row 0) + 1x1 reg (rows 1..5)
    # bhead_ref: (NH, 1)    f32
    # scores_ref:(B, K)     f32   top-K objectness per image
    # boxes_ref: (BK, 4)    f32   axis-aligned x1y1x2y2
    # masks_ref: (BK, MP)   f32   flattened masks (row-major MH x MW)
    x = x_ref[...]                                                  # (CIN, BP)

    lane = lax.broadcasted_iota(jnp.int32, (CIN, BP), 1)
    col_img = lane & (W - 1)                                        # w within image
    row_img = (lane >> LOG2_W) & (H - 1)                            # h within image

    # ---- 3x3 conv via ONE (CF,27)x(27,BP) bf16 matmul (im2col slab) --------
    # roll wraps, so explicit row/col masks provide the zero padding and stop
    # leakage across the per-image seam in the folded lane axis.
    taps = []
    for kh in range(3):
        for kw in range(3):
            off = (kh - 1) * W + (kw - 1)
            sh = x if off == 0 else pltpu.roll(x, shift=(-off) % BP, axis=1)
            valid = None
            if kh == 0:
                valid = row_img >= 1
            elif kh == 2:
                valid = row_img <= H - 2
            if kw == 0:
                vc = col_img >= 1
                valid = vc if valid is None else (valid & vc)
            elif kw == 2:
                vc = col_img <= W - 2
                valid = vc if valid is None else (valid & vc)
            if valid is not None:
                sh = jnp.where(valid, sh, 0.0)
            taps.append(sh)
    slab = jnp.concatenate(taps, axis=0).astype(jnp.bfloat16)       # (27, BP)

    feat = jnp.dot(wstem_ref[...], slab,
                   preferred_element_type=jnp.float32)              # (CF, BP)
    feat = jnp.maximum(feat + bstem_ref[...], 0.0)                  # ReLU

    # ---- fused 1x1 objectness + regression heads ----------------------------
    head = jnp.dot(whead_ref[...], feat.astype(jnp.bfloat16),
                   preferred_element_type=jnp.float32) + bhead_ref[...]  # (NH, BP)

    # ---- in-kernel per-image top-K + delta/anchor gather --------------------
    lane_p = lax.broadcasted_iota(jnp.int32, (1, P), 1)
    lane_rp = lax.broadcasted_iota(jnp.int32, (NREG, P), 1)
    row_bk = lax.broadcasted_iota(jnp.int32, (BK, 1), 0)
    row_b = lax.broadcasted_iota(jnp.int32, (B, K), 0)
    col_k = lax.broadcasted_iota(jnp.int32, (B, K), 1)

    sc_acc = jnp.zeros((B, K), jnp.float32)
    dx_acc = jnp.zeros((BK, 1), jnp.float32)
    dy_acc = jnp.zeros((BK, 1), jnp.float32)
    dw_acc = jnp.zeros((BK, 1), jnp.float32)
    dh_acc = jnp.zeros((BK, 1), jnp.float32)
    ag_acc = jnp.zeros((BK, 1), jnp.float32)
    ax_acc = jnp.zeros((BK, 1), jnp.float32)
    ay_acc = jnp.zeros((BK, 1), jnp.float32)

    for b in range(B):                                   # static, B = 2
        obj = jax.nn.sigmoid(head[0:1, b * P:(b + 1) * P])          # (1, P)
        reg = head[1:NH, b * P:(b + 1) * P]                         # (NREG, P)
        for k in range(K):                               # static, K = 8
            m = jnp.max(obj, axis=1, keepdims=True)                 # (1, 1)
            idx = jnp.min(jnp.where(obj == m, lane_p, P),
                          axis=1, keepdims=True)                    # (1, 1) int32
            d = jnp.sum(jnp.where(lane_rp == idx, reg, 0.0),
                        axis=1, keepdims=True)                      # (NREG, 1)
            obj = jnp.where(lane_p == idx, -1.0, obj)               # mask out winner

            j = b * K + k
            hit = row_bk == j
            dx_acc = jnp.where(hit, d[0:1, :], dx_acc)
            dy_acc = jnp.where(hit, d[1:2, :], dy_acc)
            dw_acc = jnp.where(hit, d[2:3, :], dw_acc)
            dh_acc = jnp.where(hit, d[3:4, :], dh_acc)
            ag_acc = jnp.where(hit, d[4:5, :], ag_acc)
            axv = (idx & (W - 1)).astype(jnp.float32) + 0.5          # anchor center
            ayv = (idx >> LOG2_W).astype(jnp.float32) + 0.5
            ax_acc = jnp.where(hit, axv, ax_acc)
            ay_acc = jnp.where(hit, ayv, ay_acc)
            sc_acc = jnp.where((row_b == b) & (col_k == k), m, sc_acc)

    scores_ref[...] = sc_acc

    # ---- OBB decode (delta2bbox-style) --------------------------------------
    dw_c = jnp.clip(dw_acc, -MAX_RATIO, MAX_RATIO)
    dh_c = jnp.clip(dh_acc, -MAX_RATIO, MAX_RATIO)
    xc = ax_acc + dx_acc * BASE
    yc = ay_acc + dy_acc * BASE
    bw = BASE * jnp.exp(dw_c)
    bh = BASE * jnp.exp(dh_c)

    # convert_to_xyxyxyxy
    ca = jnp.cos(ag_acc)
    sa = jnp.sin(ag_acc)
    wx = 0.5 * bw * ca
    wy = 0.5 * bw * sa
    hx = -0.5 * bh * sa
    hy = 0.5 * bh * ca
    x1, y1 = xc - wx - hx, yc - wy - hy
    x2, y2 = xc + wx - hx, yc + wy - hy
    x3, y3 = xc + wx + hx, yc + wy + hy
    x4, y4 = xc - wx + hx, yc - wy + hy

    # obb_to_bbox: pairwise min/max (no concat + axis-reduce relayout)
    xmin = jnp.minimum(jnp.minimum(x1, x2), jnp.minimum(x3, x4))
    ymin = jnp.minimum(jnp.minimum(y1, y2), jnp.minimum(y3, y4))
    xmax = jnp.maximum(jnp.maximum(x1, x2), jnp.maximum(x3, x4))
    ymax = jnp.maximum(jnp.maximum(y1, y2), jnp.maximum(y3, y4))
    col4 = lax.broadcasted_iota(jnp.int32, (BK, 4), 1)
    boxes_ref[...] = jnp.where(col4 == 0, xmin,
                     jnp.where(col4 == 1, ymin,
                     jnp.where(col4 == 2, xmax, ymax)))

    # generate_masks_from_boxes: all B*K boxes rasterized against one
    # lane-dense (BK, MP) pixel grid; pixel p = row*MW + col.
    pidx = lax.broadcasted_iota(jnp.int32, (BK, MP), 1)
    px = (pidx & (MW - 1)).astype(jnp.float32)                      # column (x)
    py = (pidx >> LOG2_MW).astype(jnp.float32)                      # row    (y)

    def cross(xa, ya, xb, yb):                                      # (BK,1) corners
        return (xb - xa) * (py - ya) - (yb - ya) * (px - xa)

    c0 = cross(x1, y1, x2, y2)
    c1 = cross(x2, y2, x3, y3)
    c2 = cross(x3, y3, x4, y4)
    c3 = cross(x4, y4, x1, y1)
    inside = (((c0 >= 0) & (c1 >= 0) & (c2 >= 0) & (c3 >= 0)) |
              ((c0 <= 0) & (c1 <= 0) & (c2 <= 0) & (c3 <= 0)))
    masks_ref[...] = jnp.where(inside, 1.0, 0.0)


def obb_rpn_fused(x_fold, wstem, bstem, whead, bhead):
    return pl.pallas_call(
        obb_rpn_kernel,
        out_shape=(
            jax.ShapeDtypeStruct((B, K), jnp.float32),
            jax.ShapeDtypeStruct((BK, 4), jnp.float32),
            jax.ShapeDtypeStruct((BK, MP), jnp.float32),
        ),
        grid=(1,),
        in_specs=[
            pl.BlockSpec((CIN, BP), lambda i: (0, 0)),
            pl.BlockSpec((CF, 9 * CIN), lambda i: (0, 0)),
            pl.BlockSpec((CF, 1), lambda i: (0, 0)),
            pl.BlockSpec((NH, CF), lambda i: (0, 0)),
            pl.BlockSpec((NH, 1), lambda i: (0, 0)),
        ],
        out_specs=(
            pl.BlockSpec((B, K), lambda i: (0, 0)),
            pl.BlockSpec((BK, 4), lambda i: (0, 0)),
            pl.BlockSpec((BK, MP), lambda i: (0, 0)),
        ),
        compiler_params=pltpu.CompilerParams(
            dimension_semantics=("arbitrary",)),
    )(x_fold, wstem, bstem, whead, bhead)


# ============================== full forward =================================
def obb_rpn_forward(images, params):
    # fold batch into the lane axis: (B,CIN,H,W) -> (CIN, B*H*W); lane = b*P+h*W+w
    x_fold = jnp.transpose(images, (1, 0, 2, 3)).reshape(CIN, BP)
    scores, boxes, masks = obb_rpn_fused(
        x_fold, params["wstem"], params["bstem"],
        params["whead"], params["bhead"])
    return (boxes.reshape(B, K, 4), scores, masks.reshape(B, K, MH, MW))


def init_params(key):
    # Weight fusion / transposition done ONCE here (hoisted out of the jitted
    # forward); matmul operands pre-cast to bf16 (f32 accumulation in-kernel).
    ks = jax.random.split(key, 3)
    w_conv = jax.random.normal(ks[0], (3, 3, CIN, CF), jnp.float32) \
             * (1.0 / math.sqrt(9 * CIN))
    w_cls = jax.random.normal(ks[1], (1, CF), jnp.float32) * (1.0 / math.sqrt(CF))
    w_reg = jax.random.normal(ks[2], (NREG, CF), jnp.float32) * (1.0 / math.sqrt(CF))
    wstem = jnp.transpose(w_conv.reshape(9 * CIN, CF)).astype(jnp.bfloat16)  # (CF,27)
    whead = jnp.concatenate([w_cls, w_reg], axis=0).astype(jnp.bfloat16)     # (NH,CF)
    bstem = jnp.zeros((CF, 1), jnp.float32)
    bhead = jnp.zeros((NH, 1), jnp.float32)
    return {"wstem": wstem, "bstem": bstem, "whead": whead, "bhead": bhead}


if __name__ == "__main__":
    key = jax.random.PRNGKey(0)
    k_img, k_par = jax.random.split(key)
    images = jax.random.normal(k_img, (B, CIN, H, W), jnp.float32)
    params = init_params(k_par)

    boxes, scores, masks = jax.jit(obb_rpn_forward)(images, params)
    jax.block_until_ready((boxes, scores, masks))

    assert boxes.shape == (B, K, 4)
    assert scores.shape == (B, K)
    assert masks.shape == (B, K, MH, MW)
    assert bool(jnp.all(jnp.isfinite(boxes)))
    assert bool(jnp.all((scores >= 0.0) & (scores <= 1.0)))
    print("KERNEL_OK")
</pallas_src>

<mosaic_0001>
module attributes {stable_mosaic.version = 11 : i64} {
  func.func @obb_rpn_kernel(%arg0: i32, %arg1: memref<3x512xf32, #tpu.memory_space<vmem>>, %arg2: memref<32x27xbf16, #tpu.memory_space<vmem>>, %arg3: memref<32x1xf32, #tpu.memory_space<vmem>>, %arg4: memref<6x32xbf16, #tpu.memory_space<vmem>>, %arg5: memref<6x1xf32, #tpu.memory_space<vmem>>, %arg6: memref<2x8xf32, #tpu.memory_space<vmem>>, %arg7: memref<16x4xf32, #tpu.memory_space<vmem>>, %arg8: memref<16x256xf32, #tpu.memory_space<vmem>>) attributes {dimension_semantics = [#tpu.dimension_semantics<arbitrary>], iteration_bounds = array<i64: 1>, scalar_prefetch = 0 : i64, scratch_operands = 0 : i64, tpu.core_type = #tpu.core_type<tc>, window_params = [{pipeline_mode = #tpu.pipeline_mode<synchronous>, transform_indices = @transform_0, window_bounds = array<i64: 3, 512>}, {pipeline_mode = #tpu.pipeline_mode<synchronous>, transform_indices = @transform_1, window_bounds = array<i64: 32, 27>}, {pipeline_mode = #tpu.pipeline_mode<synchronous>, transform_indices = @transform_2, window_bounds = array<i64: 32, 1>}, {pipeline_mode = #tpu.pipeline_mode<synchronous>, transform_indices = @transform_3, window_bounds = array<i64: 6, 32>}, {pipeline_mode = #tpu.pipeline_mode<synchronous>, transform_indices = @transform_4, window_bounds = array<i64: 6, 1>}, {pipeline_mode = #tpu.pipeline_mode<synchronous>, transform_indices = @transform_5, window_bounds = array<i64: 2, 8>}, {pipeline_mode = #tpu.pipeline_mode<synchronous>, transform_indices = @transform_6, window_bounds = array<i64: 16, 4>}, {pipeline_mode = #tpu.pipeline_mode<synchronous>, transform_indices = @transform_7, window_bounds = array<i64: 16, 256>}]} {
    %c0 = arith.constant 0 : index
    %c0_0 = arith.constant 0 : index
    %0 = vector.load %arg1[%c0, %c0_0] : memref<3x512xf32, #tpu.memory_space<vmem>>, vector<3x512xf32>
    %1 = tpu.iota {dimensions = array<i32: 1>} : vector<3x512xi32>
    %c15_i32 = arith.constant 15 : i32
    %2 = vector.broadcast %c15_i32 : i32 to vector<3x512xi32>
    %3 = arith.andi %1, %2 : vector<3x512xi32>
    %c4_i32 = arith.constant 4 : i32
    %4 = vector.broadcast %c4_i32 : i32 to vector<3x512xi32>
    %5 = arith.shrsi %1, %4 : vector<3x512xi32>
    %c15_i32_1 = arith.constant 15 : i32
    %6 = vector.broadcast %c15_i32_1 : i32 to vector<3x512xi32>
    %7 = arith.andi %5, %6 : vector<3x512xi32>
    %c17_i32 = arith.constant 17 : i32
    %8 = tpu.dynamic_rotate %0 by %c17_i32 dim 1 : vector<3x512xf32>, i32 -> vector<3x512xf32>
    %c1_i32 = arith.constant 1 : i32
    %9 = vector.broadcast %c1_i32 : i32 to vector<3x512xi32>
    %10 = arith.cmpi sge, %7, %9 : vector<3x512xi32>
    %c1_i32_2 = arith.constant 1 : i32
    %11 = vector.broadcast %c1_i32_2 : i32 to vector<3x512xi32>
    %12 = arith.cmpi sge, %3, %11 : vector<3x512xi32>
    %13 = arith.andi %10, %12 : vector<3x512xi1>
    %cst = arith.constant 0.000000e+00 : f32
    %14 = vector.broadcast %cst : f32 to vector<3x512xf32>
    %15 = arith.select %13, %8, %14 : vector<3x512xi1>, vector<3x512xf32>
    %c16_i32 = arith.constant 16 : i32
    %16 = tpu.dynamic_rotate %0 by %c16_i32 dim 1 : vector<3x512xf32>, i32 -> vector<3x512xf32>
    %c1_i32_3 = arith.constant 1 : i32
    %17 = vector.broadcast %c1_i32_3 : i32 to vector<3x512xi32>
    %18 = arith.cmpi sge, %7, %17 : vector<3x512xi32>
    %cst_4 = arith.constant 0.000000e+00 : f32
    %19 = vector.broadcast %cst_4 : f32 to vector<3x512xf32>
    %20 = arith.select %18, %16, %19 : vector<3x512xi1>, vector<3x512xf32>
    %c15_i32_5 = arith.constant 15 : i32
    %21 = tpu.dynamic_rotate %0 by %c15_i32_5 dim 1 : vector<3x512xf32>, i32 -> vector<3x512xf32>
    %c1_i32_6 = arith.constant 1 : i32
    %22 = vector.broadcast %c1_i32_6 : i32 to vector<3x512xi32>
    %23 = arith.cmpi sge, %7, %22 : vector<3x512xi32>
    %c14_i32 = arith.constant 14 : i32
    %24 = vector.broadcast %c14_i32 : i32 to vector<3x512xi32>
    %25 = arith.cmpi sle, %3, %24 : vector<3x512xi32>
    %26 = arith.andi %23, %25 : vector<3x512xi1>
    %cst_7 = arith.constant 0.000000e+00 : f32
    %27 = vector.broadcast %cst_7 : f32 to vector<3x512xf32>
    %28 = arith.select %26, %21, %27 : vector<3x512xi1>, vector<3x512xf32>
    %c1_i32_8 = arith.constant 1 : i32
    %29 = tpu.dynamic_rotate %0 by %c1_i32_8 dim 1 : vector<3x512xf32>, i32 -> vector<3x512xf32>
    %c1_i32_9 = arith.constant 1 : i32
    %30 = vector.broadcast %c1_i32_9 : i32 to vector<3x512xi32>
    %31 = arith.cmpi sge, %3, %30 : vector<3x512xi32>
    %cst_10 = arith.constant 0.000000e+00 : f32
    %32 = vector.broadcast %cst_10 : f32 to vector<3x512xf32>
    %33 = arith.select %31, %29, %32 : vector<3x512xi1>, vector<3x512xf32>
    %c511_i32 = arith.constant 511 : i32
    %34 = tpu.dynamic_rotate %0 by %c511_i32 dim 1 : vector<3x512xf32>, i32 -> vector<3x512xf32>
    %c14_i32_11 = arith.constant 14 : i32
    %35 = vector.broadcast %c14_i32_11 : i32 to vector<3x512xi32>
    %36 = arith.cmpi sle, %3, %35 : vector<3x512xi32>
    %cst_12 = arith.constant 0.000000e+00 : f32
    %37 = vector.broadcast %cst_12 : f32 to vector<3x512xf32>
    %38 = arith.select %36, %34, %37 : vector<3x512xi1>, vector<3x512xf32>
    %c497_i32 = arith.constant 497 : i32
    %39 = tpu.dynamic_rotate %0 by %c497_i32 dim 1 : vector<3x512xf32>, i32 -> vector<3x512xf32>
    %c14_i32_13 = arith.constant 14 : i32
    %40 = vector.broadcast %c14_i32_13 : i32 to vector<3x512xi32>
    %41 = arith.cmpi sle, %7, %40 : vector<3x512xi32>
    %c1_i32_14 = arith.constant 1 : i32
    %42 = vector.broadcast %c1_i32_14 : i32 to vector<3x512xi32>
    %43 = arith.cmpi sge, %3, %42 : vector<3x512xi32>
    %44 = arith.andi %41, %43 : vector<3x512xi1>
    %cst_15 = arith.constant 0.000000e+00 : f32
    %45 = vector.broadcast %cst_15 : f32 to vector<3x512xf32>
    %46 = arith.select %44, %39, %45 : vector<3x512xi1>, vector<3x512xf32>
    %c496_i32 = arith.constant 496 : i32
    %47 = tpu.dynamic_rotate %0 by %c496_i32 dim 1 : vector<3x512xf32>, i32 -> vector<3x512xf32>
    %c14_i32_16 = arith.constant 14 : i32
    %48 = vector.broadcast %c14_i32_16 : i32 to vector<3x512xi32>
    %49 = arith.cmpi sle, %7, %48 : vector<3x512xi32>
    %cst_17 = arith.constant 0.000000e+00 : f32
    %50 = vector.broadcast %cst_17 : f32 to vector<3x512xf32>
    %51 = arith.select %49, %47, %50 : vector<3x512xi1>, vector<3x512xf32>
    %c495_i32 = arith.constant 495 : i32
    %52 = tpu.dynamic_rotate %0 by %c495_i32 dim 1 : vector<3x512xf32>, i32 -> vector<3x512xf32>
    %c14_i32_18 = arith.constant 14 : i32
    %53 = vector.broadcast %c14_i32_18 : i32 to vector<3x512xi32>
    %54 = arith.cmpi sle, %7, %53 : vector<3x512xi32>
    %c14_i32_19 = arith.constant 14 : i32
    %55 = vector.broadcast %c14_i32_19 : i32 to vector<3x512xi32>
    %56 = arith.cmpi sle, %3, %55 : vector<3x512xi32>
    %57 = arith.andi %54, %56 : vector<3x512xi1>
    %cst_20 = arith.constant 0.000000e+00 : f32
    %58 = vector.broadcast %cst_20 : f32 to vector<3x512xf32>
    %59 = arith.select %57, %52, %58 : vector<3x512xi1>, vector<3x512xf32>
    %60 = tpu.concatenate %15, %20, %28, %33, %0, %38, %46, %51, %59 in 0 : vector<3x512xf32>, vector<3x512xf32>, vector<3x512xf32>, vector<3x512xf32>, vector<3x512xf32>, vector<3x512xf32>, vector<3x512xf32>, vector<3x512xf32>, vector<3x512xf32> -> vector<27x512xf32>
    %61 = arith.truncf %60 : vector<27x512xf32> to vector<27x512xbf16>
    %c0_21 = arith.constant 0 : index
    %c0_22 = arith.constant 0 : index
    %62 = vector.load %arg2[%c0_21, %c0_22] : memref<32x27xbf16, #tpu.memory_space<vmem>>, vector<32x27xbf16>
    %cst_23 = arith.constant dense<0.000000e+00> : vector<32x512xf32>
    %63 = tpu.matmul %62, %61, %cst_23 {dimension_numbers = #tpu.dot_dimension_numbers<[1], [0], [0], [1], [0, 0, 1, 1], [], []>} : vector<32x27xbf16>, vector<27x512xbf16>, vector<32x512xf32> -> vector<32x512xf32>
    %c0_24 = arith.constant 0 : index
    %c0_25 = arith.constant 0 : index
    %64 = vector.load %arg3[%c0_24, %c0_25] : memref<32x1xf32, #tpu.memory_space<vmem>>, vector<32x1xf32>
    %65 = vector.broadcast %64 : vector<32x1xf32> to vector<32x512xf32>
    %66 = arith.addf %63, %65 : vector<32x512xf32>
    %cst_26 = arith.constant 0.000000e+00 : f32
    %67 = vector.broadcast %cst_26 : f32 to vector<32x512xf32>
    %68 = arith.maximumf %66, %67 : vector<32x512xf32>
    %c0_27 = arith.constant 0 : index
    %c0_28 = arith.constant 0 : index
    %69 = vector.load %arg4[%c0_27, %c0_28] : memref<6x32xbf16, #tpu.memory_space<vmem>>, vector<6x32xbf16>
    %70 = arith.truncf %68 : vector<32x512xf32> to vector<32x512xbf16>
    %cst_29 = arith.constant dense<0.000000e+00> : vector<6x512xf32>
    %71 = tpu.matmul %69, %70, %cst_29 {dimension_numbers = #tpu.dot_dimension_numbers<[1], [0], [0], [1], [0, 0, 1, 1], [], []>} : vector<6x32xbf16>, vector<32x512xbf16>, vector<6x512xf32> -> vector<6x512xf32>
    %c0_30 = arith.constant 0 : index
    %c0_31 = arith.constant 0 : index
    %72 = vector.load %arg5[%c0_30, %c0_31] : memref<6x1xf32, #tpu.memory_space<vmem>>, vector<6x1xf32>
    %73 = vector.broadcast %72 : vector<6x1xf32> to vector<6x512xf32>
    %74 = arith.addf %71, %73 : vector<6x512xf32>
    %75 = tpu.iota {dimensions = array<i32: 1>} : vector<1x256xi32>
    %76 = tpu.iota {dimensions = array<i32: 1>} : vector<5x256xi32>
    %77 = tpu.iota {dimensions = array<i32: 0>} : vector<16x1xi32>
    %78 = tpu.iota {dimensions = array<i32: 0>} : vector<2x8xi32>
    %79 = tpu.iota {dimensions = array<i32: 1>} : vector<2x8xi32>
    %cst_32 = arith.constant 0.000000e+00 : f32
    %80 = vector.broadcast %cst_32 : f32 to vector<2x8xf32>
    %cst_33 = arith.constant 0.000000e+00 : f32
    %81 = vector.broadcast %cst_33 : f32 to vector<16x1xf32>
    %cst_34 = arith.constant 0.000000e+00 : f32
    %82 = vector.broadcast %cst_34 : f32 to vector<16x1xf32>
    %cst_35 = arith.constant 0.000000e+00 : f32
    %83 = vector.broadcast %cst_35 : f32 to vector<16x1xf32>
    %cst_36 = arith.constant 0.000000e+00 : f32
    %84 = vector.broadcast %cst_36 : f32 to vector<16x1xf32>
    %cst_37 = arith.constant 0.000000e+00 : f32
    %85 = vector.broadcast %cst_37 : f32 to vector<16x1xf32>
    %cst_38 = arith.constant 0.000000e+00 : f32
    %86 = vector.broadcast %cst_38 : f32 to vector<16x1xf32>
    %cst_39 = arith.constant 0.000000e+00 : f32
    %87 = vector.broadcast %cst_39 : f32 to vector<16x1xf32>
    %88 = vector.extract_strided_slice %74 {offsets = [0, 0], sizes = [1, 256], strides = [1, 1]} : vector<6x512xf32> to vector<1x256xf32>
    %89 = arith.negf %88 : vector<1x256xf32>
    %90 = math.exp %89 : vector<1x256xf32>
    %cst_40 = arith.constant 1.000000e+00 : f32
    %91 = vector.broadcast %cst_40 : f32 to vector<1x256xf32>
    %92 = arith.addf %91, %90 : vector<1x256xf32>
    %93 = arith.divf %91, %92 : vector<1x256xf32>
    %94 = vector.extract_strided_slice %74 {offsets = [1, 0], sizes = [5, 256], strides = [1, 1]} : vector<6x512xf32> to vector<5x256xf32>
    %cst_41 = arith.constant dense<0xFF800000> : vector<1xf32>
    %95 = vector.multi_reduction <maximumf>, %93, %cst_41 [1] : vector<1x256xf32> to vector<1xf32>
    %96 = vector.shape_cast %95 : vector<1xf32> to vector<1x1xf32>
    %97 = vector.broadcast %96 : vector<1x1xf32> to vector<1x256xf32>
    %98 = arith.cmpf oeq, %93, %97 : vector<1x256xf32>
    %c256_i32 = arith.constant 256 : i32
    %99 = vector.broadcast %c256_i32 : i32 to vector<1x256xi32>
    %100 = arith.select %98, %75, %99 : vector<1x256xi1>, vector<1x256xi32>
    %cst_42 = arith.constant dense<2147483647> : vector<1xi32>
    %101 = vector.multi_reduction <minsi>, %100, %cst_42 [1] : vector<1x256xi32> to vector<1xi32>
    %102 = vector.shape_cast %101 : vector<1xi32> to vector<1x1xi32>
    %103 = vector.broadcast %102 : vector<1x1xi32> to vector<5x256xi32>
    %104 = arith.cmpi eq, %76, %103 : vector<5x256xi32>
    %cst_43 = arith.constant 0.000000e+00 : f32
    %105 = vector.broadcast %cst_43 : f32 to vector<5x256xf32>
    %106 = arith.select %104, %94, %105 : vector<5x256xi1>, vector<5x256xf32>
    %cst_44 = arith.constant dense<0.000000e+00> : vector<5xf32>
    %107 = vector.multi_reduction <add>, %106, %cst_44 [1] : vector<5x256xf32> to vector<5xf32>
    %108 = vector.shape_cast %107 : vector<5xf32> to vector<5x1xf32>
    %109 = vector.broadcast %102 : vector<1x1xi32> to vector<1x256xi32>
    %110 = arith.cmpi eq, %75, %109 : vector<1x256xi32>
    %cst_45 = arith.constant -1.000000e+00 : f32
    %111 = vector.broadcast %cst_45 : f32 to vector<1x256xf32>
    %112 = arith.select %110, %111, %93 : vector<1x256xi1>, vector<1x256xf32>
    %c0_i32 = arith.constant 0 : i32
    %113 = vector.broadcast %c0_i32 : i32 to vector<16x1xi32>
    %114 = arith.cmpi eq, %77, %113 : vector<16x1xi32>
    %115 = vector.extract_strided_slice %108 {offsets = [0, 0], sizes = [1, 1], strides = [1, 1]} : vector<5x1xf32> to vector<1x1xf32>
    %116 = vector.shape_cast %115 : vector<1x1xf32> to vector<1x1xf32>
    %117 = vector.broadcast %116 : vector<1x1xf32> to vector<16x1xf32>
    %118 = arith.select %114, %117, %81 : vector<16x1xi1>, vector<16x1xf32>
    %119 = vector.extract_strided_slice %108 {offsets = [1, 0], sizes = [1, 1], strides = [1, 1]} : vector<5x1xf32> to vector<1x1xf32>
    %120 = vector.shape_cast %119 : vector<1x1xf32> to vector<1x1xf32>
    %121 = vector.broadcast %120 : vector<1x1xf32> to vector<16x1xf32>
    %122 = arith.select %114, %121, %82 : vector<16x1xi1>, vector<16x1xf32>
    %123 = vector.extract_strided_slice %108 {offsets = [2, 0], sizes = [1, 1], strides = [1, 1]} : vector<5x1xf32> to vector<1x1xf32>
    %124 = vector.shape_cast %123 : vector<1x1xf32> to vector<1x1xf32>
    %125 = vector.broadcast %124 : vector<1x1xf32> to vector<16x1xf32>
    %126 = arith.select %114, %125, %83 : vector<16x1xi1>, vector<16x1xf32>
    %127 = vector.extract_strided_slice %108 {offsets = [3, 0], sizes = [1, 1], strides = [1, 1]} : vector<5x1xf32> to vector<1x1xf32>
    %128 = vector.shape_cast %127 : vector<1x1xf32> to vector<1x1xf32>
    %129 = vector.broadcast %128 : vector<1x1xf32> to vector<16x1xf32>
    %130 = arith.select %114, %129, %84 : vector<16x1xi1>, vector<16x1xf32>
    %131 = vector.extract_strided_slice %108 {offsets = [4, 0], sizes = [1, 1], strides = [1, 1]} : vector<5x1xf32> to vector<1x1xf32>
    %132 = vector.shape_cast %131 : vector<1x1xf32> to vector<1x1xf32>
    %133 = vector.broadcast %132 : vector<1x1xf32> to vector<16x1xf32>
    %134 = arith.select %114, %133, %85 : vector<16x1xi1>, vector<16x1xf32>
    %c15_i32_46 = arith.constant 15 : i32
    %135 = vector.broadcast %c15_i32_46 : i32 to vector<1x1xi32>
    %136 = arith.andi %102, %135 : vector<1x1xi32>
    %137 = arith.sitofp %136 : vector<1x1xi32> to vector<1x1xf32>
    %cst_47 = arith.constant 5.000000e-01 : f32
    %138 = vector.broadcast %cst_47 : f32 to vector<1x1xf32>
    %139 = arith.addf %137, %138 : vector<1x1xf32>
    %c4_i32_48 = arith.constant 4 : i32
    %140 = vector.broadcast %c4_i32_48 : i32 to vector<1x1xi32>
    %141 = arith.shrsi %102, %140 : vector<1x1xi32>
    %142 = arith.sitofp %141 : vector<1x1xi32> to vector<1x1xf32>
    %cst_49 = arith.constant 5.000000e-01 : f32
    %143 = vector.broadcast %cst_49 : f32 to vector<1x1xf32>
    %144 = arith.addf %142, %143 : vector<1x1xf32>
    %145 = vector.shape_cast %139 : vector<1x1xf32> to vector<1x1xf32>
    %146 = vector.broadcast %145 : vector<1x1xf32> to vector<16x1xf32>
    %147 = arith.select %114, %146, %86 : vector<16x1xi1>, vector<16x1xf32>
    %148 = vector.shape_cast %144 : vector<1x1xf32> to vector<1x1xf32>
    %149 = vector.broadcast %148 : vector<1x1xf32> to vector<16x1xf32>
    %150 = arith.select %114, %149, %87 : vector<16x1xi1>, vector<16x1xf32>
    %c0_i32_50 = arith.constant 0 : i32
    %151 = vector.broadcast %c0_i32_50 : i32 to vector<2x8xi32>
    %152 = arith.cmpi eq, %78, %151 : vector<2x8xi32>
    %c0_i32_51 = arith.constant 0 : i32
    %153 = vector.broadcast %c0_i32_51 : i32 to vector<2x8xi32>
    %154 = arith.cmpi eq, %79, %153 : vector<2x8xi32>
    %155 = arith.andi %152, %154 : vector<2x8xi1>
    %156 = vector.shape_cast %96 : vector<1x1xf32> to vector<1x1xf32>
    %157 = vector.broadcast %156 : vector<1x1xf32> to vector<2x8xf32>
    %158 = arith.select %155, %157, %80 : vector<2x8xi1>, vector<2x8xf32>
    %cst_52 = arith.constant dense<0xFF800000> : vector<1xf32>
    %159 = vector.multi_reduction <maximumf>, %112, %cst_52 [1] : vector<1x256xf32> to vector<1xf32>
    %160 = vector.shape_cast %159 : vector<1xf32> to vector<1x1xf32>
    %161 = vector.broadcast %160 : vector<1x1xf32> to vector<1x256xf32>
    %162 = arith.cmpf oeq, %112, %161 : vector<1x256xf32>
    %c256_i32_53 = arith.constant 256 : i32
    %163 = vector.broadcast %c256_i32_53 : i32 to vector<1x256xi32>
    %164 = arith.select %162, %75, %163 : vector<1x256xi1>, vector<1x256xi32>
    %cst_54 = arith.constant dense<2147483647> : vector<1xi32>
    %165 = vector.multi_reduction <minsi>, %164, %cst_54 [1] : vector<1x256xi32> to vector<1xi32>
    %166 = vector.shape_cast %165 : vector<1xi32> to vector<1x1xi32>
    %167 = vector.broadcast %166 : vector<1x1xi32> to vector<5x256xi32>
    %168 = arith.cmpi eq, %76, %167 : vector<5x256xi32>
    %cst_55 = arith.constant 0.000000e+00 : f32
    %169 = vector.broadcast %cst_55 : f32 to vector<5x256xf32>
    %170 = arith.select %168, %94, %169 : vector<5x256xi1>, vector<5x256xf32>
    %cst_56 = arith.constant dense<0.000000e+00> : vector<5xf32>
    %171 = vector.multi_reduction <add>, %170, %cst_56 [1] : vector<5x256xf32> to vector<5xf32>
    %172 = vector.shape_cast %171 : vector<5xf32> to vector<5x1xf32>
    %173 = vector.broadcast %166 : vector<1x1xi32> to vector<1x256xi32>
    %174 = arith.cmpi eq, %75, %173 : vector<1x256xi32>
    %cst_57 = arith.constant -1.000000e+00 : f32
    %175 = vector.broadcast %cst_57 : f32 to vector<1x256xf32>
    %176 = arith.select %174, %175, %112 : vector<1x256xi1>, vector<1x256xf32>
    %c1_i32_58 = arith.constant 1 : i32
    %177 = vector.broadcast %c1_i32_58 : i32 to vector<16x1xi32>
    %178 = arith.cmpi eq, %77, %177 : vector<16x1xi32>
    %179 = vector.extract_strided_slice %172 {offsets = [0, 0], sizes = [1, 1], strides = [1, 1]} : vector<5x1xf32> to vector<1x1xf32>
    %180 = vector.shape_cast %179 : vector<1x1xf32> to vector<1x1xf32>
    %181 = vector.broadcast %180 : vector<1x1xf32> to vector<16x1xf32>
    %182 = arith.select %178, %181, %118 : vector<16x1xi1>, vector<16x1xf32>
    %183 = vector.extract_strided_slice %172 {offsets = [1, 0], sizes = [1, 1], strides = [1, 1]} : vector<5x1xf32> to vector<1x1xf32>
    %184 = vector.shape_cast %183 : vector<1x1xf32> to vector<1x1xf32>
    %185 = vector.broadcast %184 : vector<1x1xf32> to vector<16x1xf32>
    %186 = arith.select %178, %185, %122 : vector<16x1xi1>, vector<16x1xf32>
    %187 = vector.extract_strided_slice %172 {offsets = [2, 0], sizes = [1, 1], strides = [1, 1]} : vector<5x1xf32> to vector<1x1xf32>
    %188 = vector.shape_cast %187 : vector<1x1xf32> to vector<1x1xf32>
    %189 = vector.broadcast %188 : vector<1x1xf32> to vector<16x1xf32>
    %190 = arith.select %178, %189, %126 : vector<16x1xi1>, vector<16x1xf32>
    %191 = vector.extract_strided_slice %172 {offsets = [3, 0], sizes = [1, 1], strides = [1, 1]} : vector<5x1xf32> to vector<1x1xf32>
    %192 = vector.shape_cast %191 : vector<1x1xf32> to vector<1x1xf32>
    %193 = vector.broadcast %192 : vector<1x1xf32> to vector<16x1xf32>
    %194 = arith.select %178, %193, %130 : vector<16x1xi1>, vector<16x1xf32>
    %195 = vector.extract_strided_slice %172 {offsets = [4, 0], sizes = [1, 1], strides = [1, 1]} : vector<5x1xf32> to vector<1x1xf32>
    %196 = vector.shape_cast %195 : vector<1x1xf32> to vector<1x1xf32>
    %197 = vector.broadcast %196 : vector<1x1xf32> to vector<16x1xf32>
    %198 = arith.select %178, %197, %134 : vector<16x1xi1>, vector<16x1xf32>
    %c15_i32_59 = arith.constant 15 : i32
    %199 = vector.broadcast %c15_i32_59 : i32 to vector<1x1xi32>
    %200 = arith.andi %166, %199 : vector<1x1xi32>
    %201 = arith.sitofp %200 : vector<1x1xi32> to vector<1x1xf32>
    %cst_60 = arith.constant 5.000000e-01 : f32
    %202 = vector.broadcast %cst_60 : f32 to vector<1x1xf32>
    %203 = arith.addf %201, %202 : vector<1x1xf32>
    %c4_i32_61 = arith.constant 4 : i32
    %204 = vector.broadcast %c4_i32_61 : i32 to vector<1x1xi32>
    %205 = arith.shrsi %166, %204 : vector<1x1xi32>
    %206 = arith.sitofp %205 : vector<1x1xi32> to vector<1x1xf32>
    %cst_62 = arith.constant 5.000000e-01 : f32
    %207 = vector.broadcast %cst_62 : f32 to vector<1x1xf32>
    %208 = arith.addf %206, %207 : vector<1x1xf32>
    %209 = vector.shape_cast %203 : vector<1x1xf32> to vector<1x1xf32>
    %210 = vector.broadcast %209 : vector<1x1xf32> to vector<16x1xf32>
    %211 = arith.select %178, %210, %147 : vector<16x1xi1>, vector<16x1xf32>
    %212 = vector.shape_cast %208 : vector<1x1xf32> to vector<1x1xf32>
    %213 = vector.broadcast %212 : vector<1x1xf32> to vector<16x1xf32>
    %214 = arith.select %178, %213, %150 : vector<16x1xi1>, vector<16x1xf32>
    %c0_i32_63 = arith.constant 0 : i32
    %215 = vector.broadcast %c0_i32_63 : i32 to vector<2x8xi32>
    %216 = arith.cmpi eq, %78, %215 : vector<2x8xi32>
    %c1_i32_64 = arith.constant 1 : i32
    %217 = vector.broadcast %c1_i32_64 : i32 to vector<2x8xi32>
    %218 = arith.cmpi eq, %79, %217 : vector<2x8xi32>
    %219 = arith.andi %216, %218 : vector<2x8xi1>
    %220 = vector.shape_cast %160 : vector<1x1xf32> to vector<1x1xf32>
    %221 = vector.broadcast %220 : vector<1x1xf32> to vector<2x8xf32>
    %222 = arith.select %219, %221, %158 : vector<2x8xi1>, vector<2x8xf32>
    %cst_65 = arith.constant dense<0xFF800000> : vector<1xf32>
    %223 = vector.multi_reduction <maximumf>, %176, %cst_65 [1] : vector<1x256xf32> to vector<1xf32>
    %224 = vector.shape_cast %223 : vector<1xf32> to vector<1x1xf32>
    %225 = vector.broadcast %224 : vector<1x1xf32> to vector<1x256xf32>
    %226 = arith.cmpf oeq, %176, %225 : vector<1x256xf32>
    %c256_i32_66 = arith.constant 256 : i32
    %227 = vector.broadcast %c256_i32_66 : i32 to vector<1x256xi32>
    %228 = arith.select %226, %75, %227 : vector<1x256xi1>, vector<1x256xi32>
    %cst_67 = arith.constant dense<2147483647> : vector<1xi32>
    %229 = vector.multi_reduction <minsi>, %228, %cst_67 [1] : vector<1x256xi32> to vector<1xi32>
    %230 = vector.shape_cast %229 : vector<1xi32> to vector<1x1xi32>
    %231 = vector.broadcast %230 : vector<1x1xi32> to vector<5x256xi32>
    %232 = arith.cmpi eq, %76, %231 : vector<5x256xi32>
    %cst_68 = arith.constant 0.000000e+00 : f32
    %233 = vector.broadcast %cst_68 : f32 to vector<5x256xf32>
    %234 = arith.select %232, %94, %233 : vector<5x256xi1>, vector<5x256xf32>
    %cst_69 = arith.constant dense<0.000000e+00> : vector<5xf32>
    %235 = vector.multi_reduction <add>, %234, %cst_69 [1] : vector<5x256xf32> to vector<5xf32>
    %236 = vector.shape_cast %235 : vector<5xf32> to vector<5x1xf32>
    %237 = vector.broadcast %230 : vector<1x1xi32> to vector<1x256xi32>
    %238 = arith.cmpi eq, %75, %237 : vector<1x256xi32>
    %cst_70 = arith.constant -1.000000e+00 : f32
    %239 = vector.broadcast %cst_70 : f32 to vector<1x256xf32>
    %240 = arith.select %238, %239, %176 : vector<1x256xi1>, vector<1x256xf32>
    %c2_i32 = arith.constant 2 : i32
    %241 = vector.broadcast %c2_i32 : i32 to vector<16x1xi32>
    %242 = arith.cmpi eq, %77, %241 : vector<16x1xi32>
    %243 = vector.extract_strided_slice %236 {offsets = [0, 0], sizes = [1, 1], strides = [1, 1]} : vector<5x1xf32> to vector<1x1xf32>
    %244 = vector.shape_cast %243 : vector<1x1xf32> to vector<1x1xf32>
    %245 = vector.broadcast %244 : vector<1x1xf32> to vector<16x1xf32>
    %246 = arith.select %242, %245, %182 : vector<16x1xi1>, vector<16x1xf32>
    %247 = vector.extract_strided_slice %236 {offsets = [1, 0], sizes = [1, 1], strides = [1, 1]} : vector<5x1xf32> to vector<1x1xf32>
    %248 = vector.shape_cast %247 : vector<1x1xf32> to vector<1x1xf32>
    %249 = vector.broadcast %248 : vector<1x1xf32> to vector<16x1xf32>
    %250 = arith.select %242, %249, %186 : vector<16x1xi1>, vector<16x1xf32>
    %251 = vector.extract_strided_slice %236 {offsets = [2, 0], sizes = [1, 1], strides = [1, 1]} : vector<5x1xf32> to vector<1x1xf32>
    %252 = vector.shape_cast %251 : vector<1x1xf32> to vector<1x1xf32>
    %253 = vector.broadcast %252 : vector<1x1xf32> to vector<16x1xf32>
    %254 = arith.select %242, %253, %190 : vector<16x1xi1>, vector<16x1xf32>
    %255 = vector.extract_strided_slice %236 {offsets = [3, 0], sizes = [1, 1], strides = [1, 1]} : vector<5x1xf32> to vector<1x1xf32>
    %256 = vector.shape_cast %255 : vector<1x1xf32> to vector<1x1xf32>
    %257 = vector.broadcast %256 : vector<1x1xf32> to vector<16x1xf32>
    %258 = arith.select %242, %257, %194 : vector<16x1xi1>, vector<16x1xf32>
    %259 = vector.extract_strided_slice %236 {offsets = [4, 0], sizes = [1, 1], strides = [1, 1]} : vector<5x1xf32> to vector<1x1xf32>
    %260 = vector.shape_cast %259 : vector<1x1xf32> to vector<1x1xf32>
    %261 = vector.broadcast %260 : vector<1x1xf32> to vector<16x1xf32>
    %262 = arith.select %242, %261, %198 : vector<16x1xi1>, vector<16x1xf32>
    %c15_i32_71 = arith.constant 15 : i32
    %263 = vector.broadcast %c15_i32_71 : i32 to vector<1x1xi32>
    %264 = arith.andi %230, %263 : vector<1x1xi32>
    %265 = arith.sitofp %264 : vector<1x1xi32> to vector<1x1xf32>
    %cst_72 = arith.constant 5.000000e-01 : f32
    %266 = vector.broadcast %cst_72 : f32 to vector<1x1xf32>
    %267 = arith.addf %265, %266 : vector<1x1xf32>
    %c4_i32_73 = arith.constant 4 : i32
    %268 = vector.broadcast %c4_i32_73 : i32 to vector<1x1xi32>
    %269 = arith.shrsi %230, %268 : vector<1x1xi32>
    %270 = arith.sitofp %269 : vector<1x1xi32> to vector<1x1xf32>
    %cst_74 = arith.constant 5.000000e-01 : f32
    %271 = vector.broadcast %cst_74 : f32 to vector<1x1xf32>
    %272 = arith.addf %270, %271 : vector<1x1xf32>
    %273 = vector.shape_cast %267 : vector<1x1xf32> to vector<1x1xf32>
    %274 = vector.broadcast %273 : vector<1x1xf32> to vector<16x1xf32>
    %275 = arith.select %242, %274, %211 : vector<16x1xi1>, vector<16x1xf32>
    %276 = vector.shape_cast %272 : vector<1x1xf32> to vector<1x1xf32>
    %277 = vector.broadcast %276 : vector<1x1xf32> to vector<16x1xf32>
    %278 = arith.select %242, %277, %214 : vector<16x1xi1>, vector<16x1xf32>
    %c0_i32_75 = arith.constant 0 : i32
    %279 = vector.broadcast %c0_i32_75 : i32 to vector<2x8xi32>
    %280 = arith.cmpi eq, %78, %279 : vector<2x8xi32>
    %c2_i32_76 = arith.constant 2 : i32
    %281 = vector.broadcast %c2_i32_76 : i32 to vector<2x8xi32>
    %282 = arith.cmpi eq, %79, %281 : vector<2x8xi32>
    %283 = arith.andi %280, %282 : vector<2x8xi1>
    %284 = vector.shape_cast %224 : vector<1x1xf32> to vector<1x1xf32>
    %285 = vector.broadcast %284 : vector<1x1xf32> to vector<2x8xf32>
    %286 = arith.select %283, %285, %222 : vector<2x8xi1>, vector<2x8xf32>
    %cst_77 = arith.constant dense<0xFF800000> : vector<1xf32>
    %287 = vector.multi_reduction <maximumf>, %240, %cst_77 [1] : vector<1x256xf32> to vector<1xf32>
    %288 = vector.shape_cast %287 : vector<1xf32> to vector<1x1xf32>
    %289 = vector.broadcast %288 : vector<1x1xf32> to vector<1x256xf32>
    %290 = arith.cmpf oeq, %240, %289 : vector<1x256xf32>
    %c256_i32_78 = arith.constant 256 : i32
    %291 = vector.broadcast %c256_i32_78 : i32 to vector<1x256xi32>
    %292 = arith.select %290, %75, %291 : vector<1x256xi1>, vector<1x256xi32>
    %cst_79 = arith.constant dense<2147483647> : vector<1xi32>
    %293 = vector.multi_reduction <minsi>, %292, %cst_79 [1] : vector<1x256xi32> to vector<1xi32>
    %294 = vector.shape_cast %293 : vector<1xi32> to vector<1x1xi32>
    %295 = vector.broadcast %294 : vector<1x1xi32> to vector<5x256xi32>
    %296 = arith.cmpi eq, %76, %295 : vector<5x256xi32>
    %cst_80 = arith.constant 0.000000e+00 : f32
    %297 = vector.broadcast %cst_80 : f32 to vector<5x256xf32>
    %298 = arith.select %296, %94, %297 : vector<5x256xi1>, vector<5x256xf32>
    %cst_81 = arith.constant dense<0.000000e+00> : vector<5xf32>
    %299 = vector.multi_reduction <add>, %298, %cst_81 [1] : vector<5x256xf32> to vector<5xf32>
    %300 = vector.shape_cast %299 : vector<5xf32> to vector<5x1xf32>
    %301 = vector.broadcast %294 : vector<1x1xi32> to vector<1x256xi32>
    %302 = arith.cmpi eq, %75, %301 : vector<1x256xi32>
    %cst_82 = arith.constant -1.000000e+00 : f32
    %303 = vector.broadcast %cst_82 : f32 to vector<1x256xf32>
    %304 = arith.select %302, %303, %240 : vector<1x256xi1>, vector<1x256xf32>
    %c3_i32 = arith.constant 3 : i32
    %305 = vector.broadcast %c3_i32 : i32 to vector<16x1xi32>
    %306 = arith.cmpi eq, %77, %305 : vector<16x1xi32>
    %307 = vector.extract_strided_slice %300 {offsets = [0, 0], sizes = [1, 1], strides = [1, 1]} : vector<5x1xf32> to vector<1x1xf32>
    %308 = vector.shape_cast %307 : vector<1x1xf32> to vector<1x1xf32>
    %309 = vector.broadcast %308 : vector<1x1xf32> to vector<16x1xf32>
    %310 = arith.select %306, %309, %246 : vector<16x1xi1>, vector<16x1xf32>
    %311 = vector.extract_strided_slice %300 {offsets = [1, 0], sizes = [1, 1], strides = [1, 1]} : vector<5x1xf32> to vector<1x1xf32>
    %312 = vector.shape_cast %311 : vector<1x1xf32> to vector<1x1xf32>
    %313 = vector.broadcast %312 : vector<1x1xf32> to vector<16x1xf32>
    %314 = arith.select %306, %313, %250 : vector<16x1xi1>, vector<16x1xf32>
    %315 = vector.extract_strided_slice %300 {offsets = [2, 0], sizes = [1, 1], strides = [1, 1]} : vector<5x1xf32> to vector<1x1xf32>
    %316 = vector.shape_cast %315 : vector<1x1xf32> to vector<1x1xf32>
    %317 = vector.broadcast %316 : vector<1x1xf32> to vector<16x1xf32>
    %318 = arith.select %306, %317, %254 : vector<16x1xi1>, vector<16x1xf32>
    %319 = vector.extract_strided_slice %300 {offsets = [3, 0], sizes = [1, 1], strides = [1, 1]} : vector<5x1xf32> to vector<1x1xf32>
    %320 = vector.shape_cast %319 : vector<1x1xf32> to vector<1x1xf32>
    %321 = vector.broadcast %320 : vector<1x1xf32> to vector<16x1xf32>
    %322 = arith.select %306, %321, %258 : vector<16x1xi1>, vector<16x1xf32>
    %323 = vector.extract_strided_slice %300 {offsets = [4, 0], sizes = [1, 1], strides = [1, 1]} : vector<5x1xf32> to vector<1x1xf32>
    %324 = vector.shape_cast %323 : vector<1x1xf32> to vector<1x1xf32>
    %325 = vector.broadcast %324 : vector<1x1xf32> to vector<16x1xf32>
    %326 = arith.select %306, %325, %262 : vector<16x1xi1>, vector<16x1xf32>
    %c15_i32_83 = arith.constant 15 : i32
    %327 = vector.broadcast %c15_i32_83 : i32 to vector<1x1xi32>
    %328 = arith.andi %294, %327 : vector<1x1xi32>
    %329 = arith.sitofp %328 : vector<1x1xi32> to vector<1x1xf32>
    %cst_84 = arith.constant 5.000000e-01 : f32
    %330 = vector.broadcast %cst_84 : f32 to vector<1x1xf32>
    %331 = arith.addf %329, %330 : vector<1x1xf32>
    %c4_i32_85 = arith.constant 4 : i32
    %332 = vector.broadcast %c4_i32_85 : i32 to vector<1x1xi32>
    %333 = arith.shrsi %294, %332 : vector<1x1xi32>
    %334 = arith.sitofp %333 : vector<1x1xi32> to vector<1x1xf32>
    %cst_86 = arith.constant 5.000000e-01 : f32
    %335 = vector.broadcast %cst_86 : f32 to vector<1x1xf32>
    %336 = arith.addf %334, %335 : vector<1x1xf32>
    %337 = vector.shape_cast %331 : vector<1x1xf32> to vector<1x1xf32>
    %338 = vector.broadcast %337 : vector<1x1xf32> to vector<16x1xf32>
    %339 = arith.select %306, %338, %275 : vector<16x1xi1>, vector<16x1xf32>
    %340 = vector.shape_cast %336 : vector<1x1xf32> to vector<1x1xf32>
    %341 = vector.broadcast %340 : vector<1x1xf32> to vector<16x1xf32>
    %342 = arith.select %306, %341, %278 : vector<16x1xi1>, vector<16x1xf32>
    %c0_i32_87 = arith.constant 0 : i32
    %343 = vector.broadcast %c0_i32_87 : i32 to vector<2x8xi32>
    %344 = arith.cmpi eq, %78, %343 : vector<2x8xi32>
    %c3_i32_88 = arith.constant 3 : i32
    %345 = vector.broadcast %c3_i32_88 : i32 to vector<2x8xi32>
    %346 = arith.cmpi eq, %79, %345 : vector<2x8xi32>
    %347 = arith.andi %344, %346 : vector<2x8xi1>
    %348 = vector.shape_cast %288 : vector<1x1xf32> to vector<1x1xf32>
    %349 = vector.broadcast %348 : vector<1x1xf32> to vector<2x8xf32>
    %350 = arith.select %347, %349, %286 : vector<2x8xi1>, vector<2x8xf32>
    %cst_89 = arith.constant dense<0xFF800000> : vector<1xf32>
    %351 = vector.multi_reduction <maximumf>, %304, %cst_89 [1] : vector<1x256xf32> to vector<1xf32>
    %352 = vector.shape_cast %351 : vector<1xf32> to vector<1x1xf32>
    %353 = vector.broadcast %352 : vector<1x1xf32> to vector<1x256xf32>
    %354 = arith.cmpf oeq, %304, %353 : vector<1x256xf32>
    %c256_i32_90 = arith.constant 256 : i32
    %355 = vector.broadcast %c256_i32_90 : i32 to vector<1x256xi32>
    %356 = arith.select %354, %75, %355 : vector<1x256xi1>, vector<1x256xi32>
    %cst_91 = arith.constant dense<2147483647> : vector<1xi32>
    %357 = vector.multi_reduction <minsi>, %356, %cst_91 [1] : vector<1x256xi32> to vector<1xi32>
    %358 = vector.shape_cast %357 : vector<1xi32> to vector<1x1xi32>
    %359 = vector.broadcast %358 : vector<1x1xi32> to vector<5x256xi32>
    %360 = arith.cmpi eq, %76, %359 : vector<5x256xi32>
    %cst_92 = arith.constant 0.000000e+00 : f32
    %361 = vector.broadcast %cst_92 : f32 to vector<5x256xf32>
    %362 = arith.select %360, %94, %361 : vector<5x256xi1>, vector<5x256xf32>
    %cst_93 = arith.constant dense<0.000000e+00> : vector<5xf32>
    %363 = vector.multi_reduction <add>, %362, %cst_93 [1] : vector<5x256xf32> to vector<5xf32>
    %364 = vector.shape_cast %363 : vector<5xf32> to vector<5x1xf32>
    %365 = vector.broadcast %358 : vector<1x1xi32> to vector<1x256xi32>
    %366 = arith.cmpi eq, %75, %365 : vector<1x256xi32>
    %cst_94 = arith.constant -1.000000e+00 : f32
    %367 = vector.broadcast %cst_94 : f32 to vector<1x256xf32>
    %368 = arith.select %366, %367, %304 : vector<1x256xi1>, vector<1x256xf32>
    %c4_i32_95 = arith.constant 4 : i32
    %369 = vector.broadcast %c4_i32_95 : i32 to vector<16x1xi32>
    %370 = arith.cmpi eq, %77, %369 : vector<16x1xi32>
    %371 = vector.extract_strided_slice %364 {offsets = [0, 0], sizes = [1, 1], strides = [1, 1]} : vector<5x1xf32> to vector<1x1xf32>
    %372 = vector.shape_cast %371 : vector<1x1xf32> to vector<1x1xf32>
    %373 = vector.broadcast %372 : vector<1x1xf32> to vector<16x1xf32>
    %374 = arith.select %370, %373, %310 : vector<16x1xi1>, vector<16x1xf32>
    %375 = vector.extract_strided_slice %364 {offsets = [1, 0], sizes = [1, 1], strides = [1, 1]} : vector<5x1xf32> to vector<1x1xf32>
    %376 = vector.shape_cast %375 : vector<1x1xf32> to vector<1x1xf32>
    %377 = vector.broadcast %376 : vector<1x1xf32> to vector<16x1xf32>
    %378 = arith.select %370, %377, %314 : vector<16x1xi1>, vector<16x1xf32>
    %379 = vector.extract_strided_slice %364 {offsets = [2, 0], sizes = [1, 1], strides = [1, 1]} : vector<5x1xf32> to vector<1x1xf32>
    %380 = vector.shape_cast %379 : vector<1x1xf32> to vector<1x1xf32>
    %381 = vector.broadcast %380 : vector<1x1xf32> to vector<16x1xf32>
    %382 = arith.select %370, %381, %318 : vector<16x1xi1>, vector<16x1xf32>
    %383 = vector.extract_strided_slice %364 {offsets = [3, 0], sizes = [1, 1], strides = [1, 1]} : vector<5x1xf32> to vector<1x1xf32>
    %384 = vector.shape_cast %383 : vector<1x1xf32> to vector<1x1xf32>
    %385 = vector.broadcast %384 : vector<1x1xf32> to vector<16x1xf32>
    %386 = arith.select %370, %385, %322 : vector<16x1xi1>, vector<16x1xf32>
    %387 = vector.extract_strided_slice %364 {offsets = [4, 0], sizes = [1, 1], strides = [1, 1]} : vector<5x1xf32> to vector<1x1xf32>
    %388 = vector.shape_cast %387 : vector<1x1xf32> to vector<1x1xf32>
    %389 = vector.broadcast %388 : vector<1x1xf32> to vector<16x1xf32>
    %390 = arith.select %370, %389, %326 : vector<16x1xi1>, vector<16x1xf32>
    %c15_i32_96 = arith.constant 15 : i32
    %391 = vector.broadcast %c15_i32_96 : i32 to vector<1x1xi32>
    %392 = arith.andi %358, %391 : vector<1x1xi32>
    %393 = arith.sitofp %392 : vector<1x1xi32> to vector<1x1xf32>
    %cst_97 = arith.constant 5.000000e-01 : f32
    %394 = vector.broadcast %cst_97 : f32 to vector<1x1xf32>
    %395 = arith.addf %393, %394 : vector<1x1xf32>
    %c4_i32_98 = arith.constant 4 : i32
    %396 = vector.broadcast %c4_i32_98 : i32 to vector<1x1xi32>
    %397 = arith.shrsi %358, %396 : vector<1x1xi32>
    %398 = arith.sitofp %397 : vector<1x1xi32> to vector<1x1xf32>
    %cst_99 = arith.constant 5.000000e-01 : f32
    %399 = vector.broadcast %cst_99 : f32 to vector<1x1xf32>
    %400 = arith.addf %398, %399 : vector<1x1xf32>
    %401 = vector.shape_cast %395 : vector<1x1xf32> to vector<1x1xf32>
    %402 = vector.broadcast %401 : vector<1x1xf32> to vector<16x1xf32>
    %403 = arith.select %370, %402, %339 : vector<16x1xi1>, vector<16x1xf32>
    %404 = vector.shape_cast %400 : vector<1x1xf32> to vector<1x1xf32>
    %405 = vector.broadcast %404 : vector<1x1xf32> to vector<16x1xf32>
    %406 = arith.select %370, %405, %342 : vector<16x1xi1>, vector<16x1xf32>
    %c0_i32_100 = arith.constant 0 : i32
    %407 = vector.broadcast %c0_i32_100 : i32 to vector<2x8xi32>
    %408 = arith.cmpi eq, %78, %407 : vector<2x8xi32>
    %c4_i32_101 = arith.constant 4 : i32
    %409 = vector.broadcast %c4_i32_101 : i32 to vector<2x8xi32>
    %410 = arith.cmpi eq, %79, %409 : vector<2x8xi32>
    %411 = arith.andi %408, %410 : vector<2x8xi1>
    %412 = vector.shape_cast %352 : vector<1x1xf32> to vector<1x1xf32>
    %413 = vector.broadcast %412 : vector<1x1xf32> to vector<2x8xf32>
    %414 = arith.select %411, %413, %350 : vector<2x8xi1>, vector<2x8xf32>
    %cst_102 = arith.constant dense<0xFF800000> : vector<1xf32>
    %415 = vector.multi_reduction <maximumf>, %368, %cst_102 [1] : vector<1x256xf32> to vector<1xf32>
    %416 = vector.shape_cast %415 : vector<1xf32> to vector<1x1xf32>
    %417 = vector.broadcast %416 : vector<1x1xf32> to vector<1x256xf32>
    %418 = arith.cmpf oeq, %368, %417 : vector<1x256xf32>
    %c256_i32_103 = arith.constant 256 : i32
    %419 = vector.broadcast %c256_i32_103 : i32 to vector<1x256xi32>
    %420 = arith.select %418, %75, %419 : vector<1x256xi1>, vector<1x256xi32>
    %cst_104 = arith.constant dense<2147483647> : vector<1xi32>
    %421 = vector.multi_reduction <minsi>, %420, %cst_104 [1] : vector<1x256xi32> to vector<1xi32>
    %422 = vector.shape_cast %421 : vector<1xi32> to vector<1x1xi32>
    %423 = vector.broadcast %422 : vector<1x1xi32> to vector<5x256xi32>
    %424 = arith.cmpi eq, %76, %423 : vector<5x256xi32>
    %cst_105 = arith.constant 0.000000e+00 : f32
    %425 = vector.broadcast %cst_105 : f32 to vector<5x256xf32>
    %426 = arith.select %424, %94, %425 : vector<5x256xi1>, vector<5x256xf32>
    %cst_106 = arith.constant dense<0.000000e+00> : vector<5xf32>
    %427 = vector.multi_reduction <add>, %426, %cst_106 [1] : vector<5x256xf32> to vector<5xf32>
    %428 = vector.shape_cast %427 : vector<5xf32> to vector<5x1xf32>
    %429 = vector.broadcast %422 : vector<1x1xi32> to vector<1x256xi32>
    %430 = arith.cmpi eq, %75, %429 : vector<1x256xi32>
    %cst_107 = arith.constant -1.000000e+00 : f32
    %431 = vector.broadcast %cst_107 : f32 to vector<1x256xf32>
    %432 = arith.select %430, %431, %368 : vector<1x256xi1>, vector<1x256xf32>
    %c5_i32 = arith.constant 5 : i32
    %433 = vector.broadcast %c5_i32 : i32 to vector<16x1xi32>
    %434 = arith.cmpi eq, %77, %433 : vector<16x1xi32>
    %435 = vector.extract_strided_slice %428 {offsets = [0, 0], sizes = [1, 1], strides = [1, 1]} : vector<5x1xf32> to vector<1x1xf32>
    %436 = vector.shape_cast %435 : vector<1x1xf32> to vector<1x1xf32>
    %437 = vector.broadcast %436 : vector<1x1xf32> to vector<16x1xf32>
    %438 = arith.select %434, %437, %374 : vector<16x1xi1>, vector<16x1xf32>
    %439 = vector.extract_strided_slice %428 {offsets = [1, 0], sizes = [1, 1], strides = [1, 1]} : vector<5x1xf32> to vector<1x1xf32>
    %440 = vector.shape_cast %439 : vector<1x1xf32> to vector<1x1xf32>
    %441 = vector.broadcast %440 : vector<1x1xf32> to vector<16x1xf32>
    %442 = arith.select %434, %441, %378 : vector<16x1xi1>, vector<16x1xf32>
    %443 = vector.extract_strided_slice %428 {offsets = [2, 0], sizes = [1, 1], strides = [1, 1]} : vector<5x1xf32> to vector<1x1xf32>
    %444 = vector.shape_cast %443 : vector<1x1xf32> to vector<1x1xf32>
    %445 = vector.broadcast %444 : vector<1x1xf32> to vector<16x1xf32>
    %446 = arith.select %434, %445, %382 : vector<16x1xi1>, vector<16x1xf32>
    %447 = vector.extract_strided_slice %428 {offsets = [3, 0], sizes = [1, 1], strides = [1, 1]} : vector<5x1xf32> to vector<1x1xf32>
    %448 = vector.shape_cast %447 : vector<1x1xf32> to vector<1x1xf32>
    %449 = vector.broadcast %448 : vector<1x1xf32> to vector<16x1xf32>
    %450 = arith.select %434, %449, %386 : vector<16x1xi1>, vector<16x1xf32>
    %451 = vector.extract_strided_slice %428 {offsets = [4, 0], sizes = [1, 1], strides = [1, 1]} : vector<5x1xf32> to vector<1x1xf32>
    %452 = vector.shape_cast %451 : vector<1x1xf32> to vector<1x1xf32>
    %453 = vector.broadcast %452 : vector<1x1xf32> to vector<16x1xf32>
    %454 = arith.select %434, %453, %390 : vector<16x1xi1>, vector<16x1xf32>
    %c15_i32_108 = arith.constant 15 : i32
    %455 = vector.broadcast %c15_i32_108 : i32 to vector<1x1xi32>
    %456 = arith.andi %422, %455 : vector<1x1xi32>
    %457 = arith.sitofp %456 : vector<1x1xi32> to vector<1x1xf32>
    %cst_109 = arith.constant 5.000000e-01 : f32
    %458 = vector.broadcast %cst_109 : f32 to vector<1x1xf32>
    %459 = arith.addf %457, %458 : vector<1x1xf32>
    %c4_i32_110 = arith.constant 4 : i32
    %460 = vector.broadcast %c4_i32_110 : i32 to vector<1x1xi32>
    %461 = arith.shrsi %422, %460 : vector<1x1xi32>
    %462 = arith.sitofp %461 : vector<1x1xi32> to vector<1x1xf32>
    %cst_111 = arith.constant 5.000000e-01 : f32
    %463 = vector.broadcast %cst_111 : f32 to vector<1x1xf32>
    %464 = arith.addf %462, %463 : vector<1x1xf32>
    %465 = vector.shape_cast %459 : vector<1x1xf32> to vector<1x1xf32>
    %466 = vector.broadcast %465 : vector<1x1xf32> to vector<16x1xf32>
    %467 = arith.select %434, %466, %403 : vector<16x1xi1>, vector<16x1xf32>
    %468 = vector.shape_cast %464 : vector<1x1xf32> to vector<1x1xf32>
    %469 = vector.broadcast %468 : vector<1x1xf32> to vector<16x1xf32>
    %470 = arith.select %434, %469, %406 : vector<16x1xi1>, vector<16x1xf32>
    %c0_i32_112 = arith.constant 0 : i32
    %471 = vector.broadcast %c0_i32_112 : i32 to vector<2x8xi32>
    %472 = arith.cmpi eq, %78, %471 : vector<2x8xi32>
    %c5_i32_113 = arith.constant 5 : i32
    %473 = vector.broadcast %c5_i32_113 : i32 to vector<2x8xi32>
    %474 = arith.cmpi eq, %79, %473 : vector<2x8xi32>
    %475 = arith.andi %472, %474 : vector<2x8xi1>
    %476 = vector.shape_cast %416 : vector<1x1xf32> to vector<1x1xf32>
    %477 = vector.broadcast %476 : vector<1x1xf32> to vector<2x8xf32>
    %478 = arith.select %475, %477, %414 : vector<2x8xi1>, vector<2x8xf32>
    %cst_114 = arith.constant dense<0xFF800000> : vector<1xf32>
    %479 = vector.multi_reduction <maximumf>, %432, %cst_114 [1] : vector<1x256xf32> to vector<1xf32>
    %480 = vector.shape_cast %479 : vector<1xf32> to vector<1x1xf32>
    %481 = vector.broadcast %480 : vector<1x1xf32> to vector<1x256xf32>
    %482 = arith.cmpf oeq, %432, %481 : vector<1x256xf32>
    %c256_i32_115 = arith.constant 256 : i32
    %483 = vector.broadcast %c256_i32_115 : i32 to vector<1x256xi32>
    %484 = arith.select %482, %75, %483 : vector<1x256xi1>, vector<1x256xi32>
    %cst_116 = arith.constant dense<2147483647> : vector<1xi32>
    %485 = vector.multi_reduction <minsi>, %484, %cst_116 [1] : vector<1x256xi32> to vector<1xi32>
    %486 = vector.shape_cast %485 : vector<1xi32> to vector<1x1xi32>
    %487 = vector.broadcast %486 : vector<1x1xi32> to vector<5x256xi32>
    %488 = arith.cmpi eq, %76, %487 : vector<5x256xi32>
    %cst_117 = arith.constant 0.000000e+00 : f32
    %489 = vector.broadcast %cst_117 : f32 to vector<5x256xf32>
    %490 = arith.select %488, %94, %489 : vector<5x256xi1>, vector<5x256xf32>
    %cst_118 = arith.constant dense<0.000000e+00> : vector<5xf32>
    %491 = vector.multi_reduction <add>, %490, %cst_118 [1] : vector<5x256xf32> to vector<5xf32>
    %492 = vector.shape_cast %491 : vector<5xf32> to vector<5x1xf32>
    %493 = vector.broadcast %486 : vector<1x1xi32> to vector<1x256xi32>
    %494 = arith.cmpi eq, %75, %493 : vector<1x256xi32>
    %cst_119 = arith.constant -1.000000e+00 : f32
    %495 = vector.broadcast %cst_119 : f32 to vector<1x256xf32>
    %496 = arith.select %494, %495, %432 : vector<1x256xi1>, vector<1x256xf32>
    %c6_i32 = arith.constant 6 : i32
    %497 = vector.broadcast %c6_i32 : i32 to vector<16x1xi32>
    %498 = arith.cmpi eq, %77, %497 : vector<16x1xi32>
    %499 = vector.extract_strided_slice %492 {offsets = [0, 0], sizes = [1, 1], strides = [1, 1]} : vector<5x1xf32> to vector<1x1xf32>
    %500 = vector.shape_cast %499 : vector<1x1xf32> to vector<1x1xf32>
    %501 = vector.broadcast %500 : vector<1x1xf32> to vector<16x1xf32>
    %502 = arith.select %498, %501, %438 : vector<16x1xi1>, vector<16x1xf32>
    %503 = vector.extract_strided_slice %492 {offsets = [1, 0], sizes = [1, 1], strides = [1, 1]} : vector<5x1xf32> to vector<1x1xf32>
    %504 = vector.shape_cast %503 : vector<1x1xf32> to vector<1x1xf32>
    %505 = vector.broadcast %504 : vector<1x1xf32> to vector<16x1xf32>
    %506 = arith.select %498, %505, %442 : vector<16x1xi1>, vector<16x1xf32>
    %507 = vector.extract_strided_slice %492 {offsets = [2, 0], sizes = [1, 1], strides = [1, 1]} : vector<5x1xf32> to vector<1x1xf32>
    %508 = vector.shape_cast %507 : vector<1x1xf32> to vector<1x1xf32>
    %509 = vector.broadcast %508 : vector<1x1xf32> to vector<16x1xf32>
    %510 = arith.select %498, %509, %446 : vector<16x1xi1>, vector<16x1xf32>
    %511 = vector.extract_strided_slice %492 {offsets = [3, 0], sizes = [1, 1], strides = [1, 1]} : vector<5x1xf32> to vector<1x1xf32>
    %512 = vector.shape_cast %511 : vector<1x1xf32> to vector<1x1xf32>
    %513 = vector.broadcast %512 : vector<1x1xf32> to vector<16x1xf32>
    %514 = arith.select %498, %513, %450 : vector<16x1xi1>, vector<16x1xf32>
    %515 = vector.extract_strided_slice %492 {offsets = [4, 0], sizes = [1, 1], strides = [1, 1]} : vector<5x1xf32> to vector<1x1xf32>
    %516 = vector.shape_cast %515 : vector<1x1xf32> to vector<1x1xf32>
    %517 = vector.broadcast %516 : vector<1x1xf32> to vector<16x1xf32>
    %518 = arith.select %498, %517, %454 : vector<16x1xi1>, vector<16x1xf32>
    %c15_i32_120 = arith.constant 15 : i32
    %519 = vector.broadcast %c15_i32_120 : i32 to vector<1x1xi32>
    %520 = arith.andi %486, %519 : vector<1x1xi32>
    %521 = arith.sitofp %520 : vector<1x1xi32> to vector<1x1xf32>
    %cst_121 = arith.constant 5.000000e-01 : f32
    %522 = vector.broadcast %cst_121 : f32 to vector<1x1xf32>
    %523 = arith.addf %521, %522 : vector<1x1xf32>
    %c4_i32_122 = arith.constant 4 : i32
    %524 = vector.broadcast %c4_i32_122 : i32 to vector<1x1xi32>
    %525 = arith.shrsi %486, %524 : vector<1x1xi32>
    %526 = arith.sitofp %525 : vector<1x1xi32> to vector<1x1xf32>
    %cst_123 = arith.constant 5.000000e-01 : f32
    %527 = vector.broadcast %cst_123 : f32 to vector<1x1xf32>
    %528 = arith.addf %526, %527 : vector<1x1xf32>
    %529 = vector.shape_cast %523 : vector<1x1xf32> to vector<1x1xf32>
    %530 = vector.broadcast %529 : vector<1x1xf32> to vector<16x1xf32>
    %531 = arith.select %498, %530, %467 : vector<16x1xi1>, vector<16x1xf32>
    %532 = vector.shape_cast %528 : vector<1x1xf32> to vector<1x1xf32>
    %533 = vector.broadcast %532 : vector<1x1xf32> to vector<16x1xf32>
    %534 = arith.select %498, %533, %470 : vector<16x1xi1>, vector<16x1xf32>
    %c0_i32_124 = arith.constant 0 : i32
    %535 = vector.broadcast %c0_i32_124 : i32 to vector<2x8xi32>
    %536 = arith.cmpi eq, %78, %535 : vector<2x8xi32>
    %c6_i32_125 = arith.constant 6 : i32
    %537 = vector.broadcast %c6_i32_125 : i32 to vector<2x8xi32>
    %538 = arith.cmpi eq, %79, %537 : vector<2x8xi32>
    %539 = arith.andi %536, %538 : vector<2x8xi1>
    %540 = vector.shape_cast %480 : vector<1x1xf32> to vector<1x1xf32>
    %541 = vector.broadcast %540 : vector<1x1xf32> to vector<2x8xf32>
    %542 = arith.select %539, %541, %478 : vector<2x8xi1>, vector<2x8xf32>
    %cst_126 = arith.constant dense<0xFF800000> : vector<1xf32>
    %543 = vector.multi_reduction <maximumf>, %496, %cst_126 [1] : vector<1x256xf32> to vector<1xf32>
    %544 = vector.shape_cast %543 : vector<1xf32> to vector<1x1xf32>
    %545 = vector.broadcast %544 : vector<1x1xf32> to vector<1x256xf32>
    %546 = arith.cmpf oeq, %496, %545 : vector<1x256xf32>
    %c256_i32_127 = arith.constant 256 : i32
    %547 = vector.broadcast %c256_i32_127 : i32 to vector<1x256xi32>
    %548 = arith.select %546, %75, %547 : vector<1x256xi1>, vector<1x256xi32>
    %cst_128 = arith.constant dense<2147483647> : vector<1xi32>
    %549 = vector.multi_reduction <minsi>, %548, %cst_128 [1] : vector<1x256xi32> to vector<1xi32>
    %550 = vector.shape_cast %549 : vector<1xi32> to vector<1x1xi32>
    %551 = vector.broadcast %550 : vector<1x1xi32> to vector<5x256xi32>
    %552 = arith.cmpi eq, %76, %551 : vector<5x256xi32>
    %cst_129 = arith.constant 0.000000e+00 : f32
    %553 = vector.broadcast %cst_129 : f32 to vector<5x256xf32>
    %554 = arith.select %552, %94, %553 : vector<5x256xi1>, vector<5x256xf32>
    %cst_130 = arith.constant dense<0.000000e+00> : vector<5xf32>
    %555 = vector.multi_reduction <add>, %554, %cst_130 [1] : vector<5x256xf32> to vector<5xf32>
    %556 = vector.shape_cast %555 : vector<5xf32> to vector<5x1xf32>
    %c7_i32 = arith.constant 7 : i32
    %557 = vector.broadcast %c7_i32 : i32 to vector<16x1xi32>
    %558 = arith.cmpi eq, %77, %557 : vector<16x1xi32>
    %559 = vector.extract_strided_slice %556 {offsets = [0, 0], sizes = [1, 1], strides = [1, 1]} : vector<5x1xf32> to vector<1x1xf32>
    %560 = vector.shape_cast %559 : vector<1x1xf32> to vector<1x1xf32>
    %561 = vector.broadcast %560 : vector<1x1xf32> to vector<16x1xf32>
    %562 = arith.select %558, %561, %502 : vector<16x1xi1>, vector<16x1xf32>
    %563 = vector.extract_strided_slice %556 {offsets = [1, 0], sizes = [1, 1], strides = [1, 1]} : vector<5x1xf32> to vector<1x1xf32>
    %564 = vector.shape_cast %563 : vector<1x1xf32> to vector<1x1xf32>
    %565 = vector.broadcast %564 : vector<1x1xf32> to vector<16x1xf32>
    %566 = arith.select %558, %565, %506 : vector<16x1xi1>, vector<16x1xf32>
    %567 = vector.extract_strided_slice %556 {offsets = [2, 0], sizes = [1, 1], strides = [1, 1]} : vector<5x1xf32> to vector<1x1xf32>
    %568 = vector.shape_cast %567 : vector<1x1xf32> to vector<1x1xf32>
    %569 = vector.broadcast %568 : vector<1x1xf32> to vector<16x1xf32>
    %570 = arith.select %558, %569, %510 : vector<16x1xi1>, vector<16x1xf32>
    %571 = vector.extract_strided_slice %556 {offsets = [3, 0], sizes = [1, 1], strides = [1, 1]} : vector<5x1xf32> to vector<1x1xf32>
    %572 = vector.shape_cast %571 : vector<1x1xf32> to vector<1x1xf32>
    %573 = vector.broadcast %572 : vector<1x1xf32> to vector<16x1xf32>
    %574 = arith.select %558, %573, %514 : vector<16x1xi1>, vector<16x1xf32>
    %575 = vector.extract_strided_slice %556 {offsets = [4, 0], sizes = [1, 1], strides = [1, 1]} : vector<5x1xf32> to vector<1x1xf32>
    %576 = vector.shape_cast %575 : vector<1x1xf32> to vector<1x1xf32>
    %577 = vector.broadcast %576 : vector<1x1xf32> to vector<16x1xf32>
    %578 = arith.select %558, %577, %518 : vector<16x1xi1>, vector<16x1xf32>
    %c15_i32_131 = arith.constant 15 : i32
    %579 = vector.broadcast %c15_i32_131 : i32 to vector<1x1xi32>
    %580 = arith.andi %550, %579 : vector<1x1xi32>
    %581 = arith.sitofp %580 : vector<1x1xi32> to vector<1x1xf32>
    %cst_132 = arith.constant 5.000000e-01 : f32
    %582 = vector.broadcast %cst_132 : f32 to vector<1x1xf32>
    %583 = arith.addf %581, %582 : vector<1x1xf32>
    %c4_i32_133 = arith.constant 4 : i32
    %584 = vector.broadcast %c4_i32_133 : i32 to vector<1x1xi32>
    %585 = arith.shrsi %550, %584 : vector<1x1xi32>
    %586 = arith.sitofp %585 : vector<1x1xi32> to vector<1x1xf32>
    %cst_134 = arith.constant 5.000000e-01 : f32
    %587 = vector.broadcast %cst_134 : f32 to vector<1x1xf32>
    %588 = arith.addf %586, %587 : vector<1x1xf32>
    %589 = vector.shape_cast %583 : vector<1x1xf32> to vector<1x1xf32>
    %590 = vector.broadcast %589 : vector<1x1xf32> to vector<16x1xf32>
    %591 = arith.select %558, %590, %531 : vector<16x1xi1>, vector<16x1xf32>
    %592 = vector.shape_cast %588 : vector<1x1xf32> to vector<1x1xf32>
    %593 = vector.broadcast %592 : vector<1x1xf32> to vector<16x1xf32>
    %594 = arith.select %558, %593, %534 : vector<16x1xi1>, vector<16x1xf32>
    %c0_i32_135 = arith.constant 0 : i32
    %595 = vector.broadcast %c0_i32_135 : i32 to vector<2x8xi32>
    %596 = arith.cmpi eq, %78, %595 : vector<2x8xi32>
    %c7_i32_136 = arith.constant 7 : i32
    %597 = vector.broadcast %c7_i32_136 : i32 to vector<2x8xi32>
    %598 = arith.cmpi eq, %79, %597 : vector<2x8xi32>
    %599 = arith.andi %596, %598 : vector<2x8xi1>
    %600 = vector.shape_cast %544 : vector<1x1xf32> to vector<1x1xf32>
    %601 = vector.broadcast %600 : vector<1x1xf32> to vector<2x8xf32>
    %602 = arith.select %599, %601, %542 : vector<2x8xi1>, vector<2x8xf32>
    %603 = vector.extract_strided_slice %74 {offsets = [0, 256], sizes = [1, 256], strides = [1, 1]} : vector<6x512xf32> to vector<1x256xf32>
    %604 = arith.negf %603 : vector<1x256xf32>
    %605 = math.exp %604 : vector<1x256xf32>
    %cst_137 = arith.constant 1.000000e+00 : f32
    %606 = vector.broadcast %cst_137 : f32 to vector<1x256xf32>
    %607 = arith.addf %606, %605 : vector<1x256xf32>
    %608 = arith.divf %606, %607 : vector<1x256xf32>
    %609 = vector.extract_strided_slice %74 {offsets = [1, 256], sizes = [5, 256], strides = [1, 1]} : vector<6x512xf32> to vector<5x256xf32>
    %cst_138 = arith.constant dense<0xFF800000> : vector<1xf32>
    %610 = vector.multi_reduction <maximumf>, %608, %cst_138 [1] : vector<1x256xf32> to vector<1xf32>
    %611 = vector.shape_cast %610 : vector<1xf32> to vector<1x1xf32>
    %612 = vector.broadcast %611 : vector<1x1xf32> to vector<1x256xf32>
    %613 = arith.cmpf oeq, %608, %612 : vector<1x256xf32>
    %c256_i32_139 = arith.constant 256 : i32
    %614 = vector.broadcast %c256_i32_139 : i32 to vector<1x256xi32>
    %615 = arith.select %613, %75, %614 : vector<1x256xi1>, vector<1x256xi32>
    %cst_140 = arith.constant dense<2147483647> : vector<1xi32>
    %616 = vector.multi_reduction <minsi>, %615, %cst_140 [1] : vector<1x256xi32> to vector<1xi32>
    %617 = vector.shape_cast %616 : vector<1xi32> to vector<1x1xi32>
    %618 = vector.broadcast %617 : vector<1x1xi32> to vector<5x256xi32>
    %619 = arith.cmpi eq, %76, %618 : vector<5x256xi32>
    %cst_141 = arith.constant 0.000000e+00 : f32
    %620 = vector.broadcast %cst_141 : f32 to vector<5x256xf32>
    %621 = arith.select %619, %609, %620 : vector<5x256xi1>, vector<5x256xf32>
    %cst_142 = arith.constant dense<0.000000e+00> : vector<5xf32>
    %622 = vector.multi_reduction <add>, %621, %cst_142 [1] : vector<5x256xf32> to vector<5xf32>
    %623 = vector.shape_cast %622 : vector<5xf32> to vector<5x1xf32>
    %624 = vector.broadcast %617 : vector<1x1xi32> to vector<1x256xi32>
    %625 = arith.cmpi eq, %75, %624 : vector<1x256xi32>
    %cst_143 = arith.constant -1.000000e+00 : f32
    %626 = vector.broadcast %cst_143 : f32 to vector<1x256xf32>
    %627 = arith.select %625, %626, %608 : vector<1x256xi1>, vector<1x256xf32>
    %c8_i32 = arith.constant 8 : i32
    %628 = vector.broadcast %c8_i32 : i32 to vector<16x1xi32>
    %629 = arith.cmpi eq, %77, %628 : vector<16x1xi32>
    %630 = vector.extract_strided_slice %623 {offsets = [0, 0], sizes = [1, 1], strides = [1, 1]} : vector<5x1xf32> to vector<1x1xf32>
    %631 = vector.shape_cast %630 : vector<1x1xf32> to vector<1x1xf32>
    %632 = vector.broadcast %631 : vector<1x1xf32> to vector<16x1xf32>
    %633 = arith.select %629, %632, %562 : vector<16x1xi1>, vector<16x1xf32>
    %634 = vector.extract_strided_slice %623 {offsets = [1, 0], sizes = [1, 1], strides = [1, 1]} : vector<5x1xf32> to vector<1x1xf32>
    %635 = vector.shape_cast %634 : vector<1x1xf32> to vector<1x1xf32>
    %636 = vector.broadcast %635 : vector<1x1xf32> to vector<16x1xf32>
    %637 = arith.select %629, %636, %566 : vector<16x1xi1>, vector<16x1xf32>
    %638 = vector.extract_strided_slice %623 {offsets = [2, 0], sizes = [1, 1], strides = [1, 1]} : vector<5x1xf32> to vector<1x1xf32>
    %639 = vector.shape_cast %638 : vector<1x1xf32> to vector<1x1xf32>
    %640 = vector.broadcast %639 : vector<1x1xf32> to vector<16x1xf32>
    %641 = arith.select %629, %640, %570 : vector<16x1xi1>, vector<16x1xf32>
    %642 = vector.extract_strided_slice %623 {offsets = [3, 0], sizes = [1, 1], strides = [1, 1]} : vector<5x1xf32> to vector<1x1xf32>
    %643 = vector.shape_cast %642 : vector<1x1xf32> to vector<1x1xf32>
    %644 = vector.broadcast %643 : vector<1x1xf32> to vector<16x1xf32>
    %645 = arith.select %629, %644, %574 : vector<16x1xi1>, vector<16x1xf32>
    %646 = vector.extract_strided_slice %623 {offsets = [4, 0], sizes = [1, 1], strides = [1, 1]} : vector<5x1xf32> to vector<1x1xf32>
    %647 = vector.shape_cast %646 : vector<1x1xf32> to vector<1x1xf32>
    %648 = vector.broadcast %647 : vector<1x1xf32> to vector<16x1xf32>
    %649 = arith.select %629, %648, %578 : vector<16x1xi1>, vector<16x1xf32>
    %c15_i32_144 = arith.constant 15 : i32
    %650 = vector.broadcast %c15_i32_144 : i32 to vector<1x1xi32>
    %651 = arith.andi %617, %650 : vector<1x1xi32>
    %652 = arith.sitofp %651 : vector<1x1xi32> to vector<1x1xf32>
    %cst_145 = arith.constant 5.000000e-01 : f32
    %653 = vector.broadcast %cst_145 : f32 to vector<1x1xf32>
    %654 = arith.addf %652, %653 : vector<1x1xf32>
    %c4_i32_146 = arith.constant 4 : i32
    %655 = vector.broadcast %c4_i32_146 : i32 to vector<1x1xi32>
    %656 = arith.shrsi %617, %655 : vector<1x1xi32>
    %657 = arith.sitofp %656 : vector<1x1xi32> to vector<1x1xf32>
    %cst_147 = arith.constant 5.000000e-01 : f32
    %658 = vector.broadcast %cst_147 : f32 to vector<1x1xf32>
    %659 = arith.addf %657, %658 : vector<1x1xf32>
    %660 = vector.shape_cast %654 : vector<1x1xf32> to vector<1x1xf32>
    %661 = vector.broadcast %660 : vector<1x1xf32> to vector<16x1xf32>
    %662 = arith.select %629, %661, %591 : vector<16x1xi1>, vector<16x1xf32>
    %663 = vector.shape_cast %659 : vector<1x1xf32> to vector<1x1xf32>
    %664 = vector.broadcast %663 : vector<1x1xf32> to vector<16x1xf32>
    %665 = arith.select %629, %664, %594 : vector<16x1xi1>, vector<16x1xf32>
    %c1_i32_148 = arith.constant 1 : i32
    %666 = vector.broadcast %c1_i32_148 : i32 to vector<2x8xi32>
    %667 = arith.cmpi eq, %78, %666 : vector<2x8xi32>
    %c0_i32_149 = arith.constant 0 : i32
    %668 = vector.broadcast %c0_i32_149 : i32 to vector<2x8xi32>
    %669 = arith.cmpi eq, %79, %668 : vector<2x8xi32>
    %670 = arith.andi %667, %669 : vector<2x8xi1>
    %671 = vector.shape_cast %611 : vector<1x1xf32> to vector<1x1xf32>
    %672 = vector.broadcast %671 : vector<1x1xf32> to vector<2x8xf32>
    %673 = arith.select %670, %672, %602 : vector<2x8xi1>, vector<2x8xf32>
    %cst_150 = arith.constant dense<0xFF800000> : vector<1xf32>
    %674 = vector.multi_reduction <maximumf>, %627, %cst_150 [1] : vector<1x256xf32> to vector<1xf32>
    %675 = vector.shape_cast %674 : vector<1xf32> to vector<1x1xf32>
    %676 = vector.broadcast %675 : vector<1x1xf32> to vector<1x256xf32>
    %677 = arith.cmpf oeq, %627, %676 : vector<1x256xf32>
    %c256_i32_151 = arith.constant 256 : i32
    %678 = vector.broadcast %c256_i32_151 : i32 to vector<1x256xi32>
    %679 = arith.select %677, %75, %678 : vector<1x256xi1>, vector<1x256xi32>
    %cst_152 = arith.constant dense<2147483647> : vector<1xi32>
    %680 = vector.multi_reduction <minsi>, %679, %cst_152 [1] : vector<1x256xi32> to vector<1xi32>
    %681 = vector.shape_cast %680 : vector<1xi32> to vector<1x1xi32>
    %682 = vector.broadcast %681 : vector<1x1xi32> to vector<5x256xi32>
    %683 = arith.cmpi eq, %76, %682 : vector<5x256xi32>
    %cst_153 = arith.constant 0.000000e+00 : f32
    %684 = vector.broadcast %cst_153 : f32 to vector<5x256xf32>
    %685 = arith.select %683, %609, %684 : vector<5x256xi1>, vector<5x256xf32>
    %cst_154 = arith.constant dense<0.000000e+00> : vector<5xf32>
    %686 = vector.multi_reduction <add>, %685, %cst_154 [1] : vector<5x256xf32> to vector<5xf32>
    %687 = vector.shape_cast %686 : vector<5xf32> to vector<5x1xf32>
    %688 = vector.broadcast %681 : vector<1x1xi32> to vector<1x256xi32>
    %689 = arith.cmpi eq, %75, %688 : vector<1x256xi32>
    %cst_155 = arith.constant -1.000000e+00 : f32
    %690 = vector.broadcast %cst_155 : f32 to vector<1x256xf32>
    %691 = arith.select %689, %690, %627 : vector<1x256xi1>, vector<1x256xf32>
    %c9_i32 = arith.constant 9 : i32
    %692 = vector.broadcast %c9_i32 : i32 to vector<16x1xi32>
    %693 = arith.cmpi eq, %77, %692 : vector<16x1xi32>
    %694 = vector.extract_strided_slice %687 {offsets = [0, 0], sizes = [1, 1], strides = [1, 1]} : vector<5x1xf32> to vector<1x1xf32>
    %695 = vector.shape_cast %694 : vector<1x1xf32> to vector<1x1xf32>
    %696 = vector.broadcast %695 : vector<1x1xf32> to vector<16x1xf32>
    %697 = arith.select %693, %696, %633 : vector<16x1xi1>, vector<16x1xf32>
    %698 = vector.extract_strided_slice %687 {offsets = [1, 0], sizes = [1, 1], strides = [1, 1]} : vector<5x1xf32> to vector<1x1xf32>
    %699 = vector.shape_cast %698 : vector<1x1xf32> to vector<1x1xf32>
    %700 = vector.broadcast %699 : vector<1x1xf32> to vector<16x1xf32>
    %701 = arith.select %693, %700, %637 : vector<16x1xi1>, vector<16x1xf32>
    %702 = vector.extract_strided_slice %687 {offsets = [2, 0], sizes = [1, 1], strides = [1, 1]} : vector<5x1xf32> to vector<1x1xf32>
    %703 = vector.shape_cast %702 : vector<1x1xf32> to vector<1x1xf32>
    %704 = vector.broadcast %703 : vector<1x1xf32> to vector<16x1xf32>
    %705 = arith.select %693, %704, %641 : vector<16x1xi1>, vector<16x1xf32>
    %706 = vector.extract_strided_slice %687 {offsets = [3, 0], sizes = [1, 1], strides = [1, 1]} : vector<5x1xf32> to vector<1x1xf32>
    %707 = vector.shape_cast %706 : vector<1x1xf32> to vector<1x1xf32>
    %708 = vector.broadcast %707 : vector<1x1xf32> to vector<16x1xf32>
    %709 = arith.select %693, %708, %645 : vector<16x1xi1>, vector<16x1xf32>
    %710 = vector.extract_strided_slice %687 {offsets = [4, 0], sizes = [1, 1], strides = [1, 1]} : vector<5x1xf32> to vector<1x1xf32>
    %711 = vector.shape_cast %710 : vector<1x1xf32> to vector<1x1xf32>
    %712 = vector.broadcast %711 : vector<1x1xf32> to vector<16x1xf32>
    %713 = arith.select %693, %712, %649 : vector<16x1xi1>, vector<16x1xf32>
    %c15_i32_156 = arith.constant 15 : i32
    %714 = vector.broadcast %c15_i32_156 : i32 to vector<1x1xi32>
    %715 = arith.andi %681, %714 : vector<1x1xi32>
    %716 = arith.sitofp %715 : vector<1x1xi32> to vector<1x1xf32>
    %cst_157 = arith.constant 5.000000e-01 : f32
    %717 = vector.broadcast %cst_157 : f32 to vector<1x1xf32>
    %718 = arith.addf %716, %717 : vector<1x1xf32>
    %c4_i32_158 = arith.constant 4 : i32
    %719 = vector.broadcast %c4_i32_158 : i32 to vector<1x1xi32>
    %720 = arith.shrsi %681, %719 : vector<1x1xi32>
    %721 = arith.sitofp %720 : vector<1x1xi32> to vector<1x1xf32>
    %cst_159 = arith.constant 5.000000e-01 : f32
    %722 = vector.broadcast %cst_159 : f32 to vector<1x1xf32>
    %723 = arith.addf %721, %722 : vector<1x1xf32>
    %724 = vector.shape_cast %718 : vector<1x1xf32> to vector<1x1xf32>
    %725 = vector.broadcast %724 : vector<1x1xf32> to vector<16x1xf32>
    %726 = arith.select %693, %725, %662 : vector<16x1xi1>, vector<16x1xf32>
    %727 = vector.shape_cast %723 : vector<1x1xf32> to vector<1x1xf32>
    %728 = vector.broadcast %727 : vector<1x1xf32> to vector<16x1xf32>
    %729 = arith.select %693, %728, %665 : vector<16x1xi1>, vector<16x1xf32>
    %c1_i32_160 = arith.constant 1 : i32
    %730 = vector.broadcast %c1_i32_160 : i32 to vector<2x8xi32>
    %731 = arith.cmpi eq, %78, %730 : vector<2x8xi32>
    %c1_i32_161 = arith.constant 1 : i32
    %732 = vector.broadcast %c1_i32_161 : i32 to vector<2x8xi32>
    %733 = arith.cmpi eq, %79, %732 : vector<2x8xi32>
    %734 = arith.andi %731, %733 : vector<2x8xi1>
    %735 = vector.shape_cast %675 : vector<1x1xf32> to vector<1x1xf32>
    %736 = vector.broadcast %735 : vector<1x1xf32> to vector<2x8xf32>
    %737 = arith.select %734, %736, %673 : vector<2x8xi1>, vector<2x8xf32>
    %cst_162 = arith.constant dense<0xFF800000> : vector<1xf32>
    %738 = vector.multi_reduction <maximumf>, %691, %cst_162 [1] : vector<1x256xf32> to vector<1xf32>
    %739 = vector.shape_cast %738 : vector<1xf32> to vector<1x1xf32>
    %740 = vector.broadcast %739 : vector<1x1xf32> to vector<1x256xf32>
    %741 = arith.cmpf oeq, %691, %740 : vector<1x256xf32>
    %c256_i32_163 = arith.constant 256 : i32
    %742 = vector.broadcast %c256_i32_163 : i32 to vector<1x256xi32>
    %743 = arith.select %741, %75, %742 : vector<1x256xi1>, vector<1x256xi32>
    %cst_164 = arith.constant dense<2147483647> : vector<1xi32>
    %744 = vector.multi_reduction <minsi>, %743, %cst_164 [1] : vector<1x256xi32> to vector<1xi32>
    %745 = vector.shape_cast %744 : vector<1xi32> to vector<1x1xi32>
    %746 = vector.broadcast %745 : vector<1x1xi32> to vector<5x256xi32>
    %747 = arith.cmpi eq, %76, %746 : vector<5x256xi32>
    %cst_165 = arith.constant 0.000000e+00 : f32
    %748 = vector.broadcast %cst_165 : f32 to vector<5x256xf32>
    %749 = arith.select %747, %609, %748 : vector<5x256xi1>, vector<5x256xf32>
    %cst_166 = arith.constant dense<0.000000e+00> : vector<5xf32>
    %750 = vector.multi_reduction <add>, %749, %cst_166 [1] : vector<5x256xf32> to vector<5xf32>
    %751 = vector.shape_cast %750 : vector<5xf32> to vector<5x1xf32>
    %752 = vector.broadcast %745 : vector<1x1xi32> to vector<1x256xi32>
    %753 = arith.cmpi eq, %75, %752 : vector<1x256xi32>
    %cst_167 = arith.constant -1.000000e+00 : f32
    %754 = vector.broadcast %cst_167 : f32 to vector<1x256xf32>
    %755 = arith.select %753, %754, %691 : vector<1x256xi1>, vector<1x256xf32>
    %c10_i32 = arith.constant 10 : i32
    %756 = vector.broadcast %c10_i32 : i32 to vector<16x1xi32>
    %757 = arith.cmpi eq, %77, %756 : vector<16x1xi32>
    %758 = vector.extract_strided_slice %751 {offsets = [0, 0], sizes = [1, 1], strides = [1, 1]} : vector<5x1xf32> to vector<1x1xf32>
    %759 = vector.shape_cast %758 : vector<1x1xf32> to vector<1x1xf32>
    %760 = vector.broadcast %759 : vector<1x1xf32> to vector<16x1xf32>
    %761 = arith.select %757, %760, %697 : vector<16x1xi1>, vector<16x1xf32>
    %762 = vector.extract_strided_slice %751 {offsets = [1, 0], sizes = [1, 1], strides = [1, 1]} : vector<5x1xf32> to vector<1x1xf32>
    %763 = vector.shape_cast %762 : vector<1x1xf32> to vector<1x1xf32>
    %764 = vector.broadcast %763 : vector<1x1xf32> to vector<16x1xf32>
    %765 = arith.select %757, %764, %701 : vector<16x1xi1>, vector<16x1xf32>
    %766 = vector.extract_strided_slice %751 {offsets = [2, 0], sizes = [1, 1], strides = [1, 1]} : vector<5x1xf32> to vector<1x1xf32>
    %767 = vector.shape_cast %766 : vector<1x1xf32> to vector<1x1xf32>
    %768 = vector.broadcast %767 : vector<1x1xf32> to vector<16x1xf32>
    %769 = arith.select %757, %768, %705 : vector<16x1xi1>, vector<16x1xf32>
    %770 = vector.extract_strided_slice %751 {offsets = [3, 0], sizes = [1, 1], strides = [1, 1]} : vector<5x1xf32> to vector<1x1xf32>
    %771 = vector.shape_cast %770 : vector<1x1xf32> to vector<1x1xf32>
    %772 = vector.broadcast %771 : vector<1x1xf32> to vector<16x1xf32>
    %773 = arith.select %757, %772, %709 : vector<16x1xi1>, vector<16x1xf32>
    %774 = vector.extract_strided_slice %751 {offsets = [4, 0], sizes = [1, 1], strides = [1, 1]} : vector<5x1xf32> to vector<1x1xf32>
    %775 = vector.shape_cast %774 : vector<1x1xf32> to vector<1x1xf32>
    %776 = vector.broadcast %775 : vector<1x1xf32> to vector<16x1xf32>
    %777 = arith.select %757, %776, %713 : vector<16x1xi1>, vector<16x1xf32>
    %c15_i32_168 = arith.constant 15 : i32
    %778 = vector.broadcast %c15_i32_168 : i32 to vector<1x1xi32>
    %779 = arith.andi %745, %778 : vector<1x1xi32>
    %780 = arith.sitofp %779 : vector<1x1xi32> to vector<1x1xf32>
    %cst_169 = arith.constant 5.000000e-01 : f32
    %781 = vector.broadcast %cst_169 : f32 to vector<1x1xf32>
    %782 = arith.addf %780, %781 : vector<1x1xf32>
    %c4_i32_170 = arith.constant 4 : i32
    %783 = vector.broadcast %c4_i32_170 : i32 to vector<1x1xi32>
    %784 = arith.shrsi %745, %783 : vector<1x1xi32>
    %785 = arith.sitofp %784 : vector<1x1xi32> to vector<1x1xf32>
    %cst_171 = arith.constant 5.000000e-01 : f32
    %786 = vector.broadcast %cst_171 : f32 to vector<1x1xf32>
    %787 = arith.addf %785, %786 : vector<1x1xf32>
    %788 = vector.shape_cast %782 : vector<1x1xf32> to vector<1x1xf32>
    %789 = vector.broadcast %788 : vector<1x1xf32> to vector<16x1xf32>
    %790 = arith.select %757, %789, %726 : vector<16x1xi1>, vector<16x1xf32>
    %791 = vector.shape_cast %787 : vector<1x1xf32> to vector<1x1xf32>
    %792 = vector.broadcast %791 : vector<1x1xf32> to vector<16x1xf32>
    %793 = arith.select %757, %792, %729 : vector<16x1xi1>, vector<16x1xf32>
    %c1_i32_172 = arith.constant 1 : i32
    %794 = vector.broadcast %c1_i32_172 : i32 to vector<2x8xi32>
    %795 = arith.cmpi eq, %78, %794 : vector<2x8xi32>
    %c2_i32_173 = arith.constant 2 : i32
    %796 = vector.broadcast %c2_i32_173 : i32 to vector<2x8xi32>
    %797 = arith.cmpi eq, %79, %796 : vector<2x8xi32>
    %798 = arith.andi %795, %797 : vector<2x8xi1>
    %799 = vector.shape_cast %739 : vector<1x1xf32> to vector<1x1xf32>
    %800 = vector.broadcast %799 : vector<1x1xf32> to vector<2x8xf32>
    %801 = arith.select %798, %800, %737 : vector<2x8xi1>, vector<2x8xf32>
    %cst_174 = arith.constant dense<0xFF800000> : vector<1xf32>
    %802 = vector.multi_reduction <maximumf>, %755, %cst_174 [1] : vector<1x256xf32> to vector<1xf32>
    %803 = vector.shape_cast %802 : vector<1xf32> to vector<1x1xf32>
    %804 = vector.broadcast %803 : vector<1x1xf32> to vector<1x256xf32>
    %805 = arith.cmpf oeq, %755, %804 : vector<1x256xf32>
    %c256_i32_175 = arith.constant 256 : i32
    %806 = vector.broadcast %c256_i32_175 : i32 to vector<1x256xi32>
    %807 = arith.select %805, %75, %806 : vector<1x256xi1>, vector<1x256xi32>
    %cst_176 = arith.constant dense<2147483647> : vector<1xi32>
    %808 = vector.multi_reduction <minsi>, %807, %cst_176 [1] : vector<1x256xi32> to vector<1xi32>
    %809 = vector.shape_cast %808 : vector<1xi32> to vector<1x1xi32>
    %810 = vector.broadcast %809 : vector<1x1xi32> to vector<5x256xi32>
    %811 = arith.cmpi eq, %76, %810 : vector<5x256xi32>
    %cst_177 = arith.constant 0.000000e+00 : f32
    %812 = vector.broadcast %cst_177 : f32 to vector<5x256xf32>
    %813 = arith.select %811, %609, %812 : vector<5x256xi1>, vector<5x256xf32>
    %cst_178 = arith.constant dense<0.000000e+00> : vector<5xf32>
    %814 = vector.multi_reduction <add>, %813, %cst_178 [1] : vector<5x256xf32> to vector<5xf32>
    %815 = vector.shape_cast %814 : vector<5xf32> to vector<5x1xf32>
    %816 = vector.broadcast %809 : vector<1x1xi32> to vector<1x256xi32>
    %817 = arith.cmpi eq, %75, %816 : vector<1x256xi32>
    %cst_179 = arith.constant -1.000000e+00 : f32
    %818 = vector.broadcast %cst_179 : f32 to vector<1x256xf32>
    %819 = arith.select %817, %818, %755 : vector<1x256xi1>, vector<1x256xf32>
    %c11_i32 = arith.constant 11 : i32
    %820 = vector.broadcast %c11_i32 : i32 to vector<16x1xi32>
    %821 = arith.cmpi eq, %77, %820 : vector<16x1xi32>
    %822 = vector.extract_strided_slice %815 {offsets = [0, 0], sizes = [1, 1], strides = [1, 1]} : vector<5x1xf32> to vector<1x1xf32>
    %823 = vector.shape_cast %822 : vector<1x1xf32> to vector<1x1xf32>
    %824 = vector.broadcast %823 : vector<1x1xf32> to vector<16x1xf32>
    %825 = arith.select %821, %824, %761 : vector<16x1xi1>, vector<16x1xf32>
    %826 = vector.extract_strided_slice %815 {offsets = [1, 0], sizes = [1, 1], strides = [1, 1]} : vector<5x1xf32> to vector<1x1xf32>
    %827 = vector.shape_cast %826 : vector<1x1xf32> to vector<1x1xf32>
    %828 = vector.broadcast %827 : vector<1x1xf32> to vector<16x1xf32>
    %829 = arith.select %821, %828, %765 : vector<16x1xi1>, vector<16x1xf32>
    %830 = vector.extract_strided_slice %815 {offsets = [2, 0], sizes = [1, 1], strides = [1, 1]} : vector<5x1xf32> to vector<1x1xf32>
    %831 = vector.shape_cast %830 : vector<1x1xf32> to vector<1x1xf32>
    %832 = vector.broadcast %831 : vector<1x1xf32> to vector<16x1xf32>
    %833 = arith.select %821, %832, %769 : vector<16x1xi1>, vector<16x1xf32>
    %834 = vector.extract_strided_slice %815 {offsets = [3, 0], sizes = [1, 1], strides = [1, 1]} : vector<5x1xf32> to vector<1x1xf32>
    %835 = vector.shape_cast %834 : vector<1x1xf32> to vector<1x1xf32>
    %836 = vector.broadcast %835 : vector<1x1xf32> to vector<16x1xf32>
    %837 = arith.select %821, %836, %773 : vector<16x1xi1>, vector<16x1xf32>
    %838 = vector.extract_strided_slice %815 {offsets = [4, 0], sizes = [1, 1], strides = [1, 1]} : vector<5x1xf32> to vector<1x1xf32>
    %839 = vector.shape_cast %838 : vector<1x1xf32> to vector<1x1xf32>
    %840 = vector.broadcast %839 : vector<1x1xf32> to vector<16x1xf32>
    %841 = arith.select %821, %840, %777 : vector<16x1xi1>, vector<16x1xf32>
    %c15_i32_180 = arith.constant 15 : i32
    %842 = vector.broadcast %c15_i32_180 : i32 to vector<1x1xi32>
    %843 = arith.andi %809, %842 : vector<1x1xi32>
    %844 = arith.sitofp %843 : vector<1x1xi32> to vector<1x1xf32>
    %cst_181 = arith.constant 5.000000e-01 : f32
    %845 = vector.broadcast %cst_181 : f32 to vector<1x1xf32>
    %846 = arith.addf %844, %845 : vector<1x1xf32>
    %c4_i32_182 = arith.constant 4 : i32
    %847 = vector.broadcast %c4_i32_182 : i32 to vector<1x1xi32>
    %848 = arith.shrsi %809, %847 : vector<1x1xi32>
    %849 = arith.sitofp %848 : vector<1x1xi32> to vector<1x1xf32>
    %cst_183 = arith.constant 5.000000e-01 : f32
    %850 = vector.broadcast %cst_183 : f32 to vector<1x1xf32>
    %851 = arith.addf %849, %850 : vector<1x1xf32>
    %852 = vector.shape_cast %846 : vector<1x1xf32> to vector<1x1xf32>
    %853 = vector.broadcast %852 : vector<1x1xf32> to vector<16x1xf32>
    %854 = arith.select %821, %853, %790 : vector<16x1xi1>, vector<16x1xf32>
    %855 = vector.shape_cast %851 : vector<1x1xf32> to vector<1x1xf32>
    %856 = vector.broadcast %855 : vector<1x1xf32> to vector<16x1xf32>
    %857 = arith.select %821, %856, %793 : vector<16x1xi1>, vector<16x1xf32>
    %c1_i32_184 = arith.constant 1 : i32
    %858 = vector.broadcast %c1_i32_184 : i32 to vector<2x8xi32>
    %859 = arith.cmpi eq, %78, %858 : vector<2x8xi32>
    %c3_i32_185 = arith.constant 3 : i32
    %860 = vector.broadcast %c3_i32_185 : i32 to vector<2x8xi32>
    %861 = arith.cmpi eq, %79, %860 : vector<2x8xi32>
    %862 = arith.andi %859, %861 : vector<2x8xi1>
    %863 = vector.shape_cast %803 : vector<1x1xf32> to vector<1x1xf32>
    %864 = vector.broadcast %863 : vector<1x1xf32> to vector<2x8xf32>
    %865 = arith.select %862, %864, %801 : vector<2x8xi1>, vector<2x8xf32>
    %cst_186 = arith.constant dense<0xFF800000> : vector<1xf32>
    %866 = vector.multi_reduction <maximumf>, %819, %cst_186 [1] : vector<1x256xf32> to vector<1xf32>
    %867 = vector.shape_cast %866 : vector<1xf32> to vector<1x1xf32>
    %868 = vector.broadcast %867 : vector<1x1xf32> to vector<1x256xf32>
    %869 = arith.cmpf oeq, %819, %868 : vector<1x256xf32>
    %c256_i32_187 = arith.constant 256 : i32
    %870 = vector.broadcast %c256_i32_187 : i32 to vector<1x256xi32>
    %871 = arith.select %869, %75, %870 : vector<1x256xi1>, vector<1x256xi32>
    %cst_188 = arith.constant dense<2147483647> : vector<1xi32>
    %872 = vector.multi_reduction <minsi>, %871, %cst_188 [1] : vector<1x256xi32> to vector<1xi32>
    %873 = vector.shape_cast %872 : vector<1xi32> to vector<1x1xi32>
    %874 = vector.broadcast %873 : vector<1x1xi32> to vector<5x256xi32>
    %875 = arith.cmpi eq, %76, %874 : vector<5x256xi32>
    %cst_189 = arith.constant 0.000000e+00 : f32
    %876 = vector.broadcast %cst_189 : f32 to vector<5x256xf32>
    %877 = arith.select %875, %609, %876 : vector<5x256xi1>, vector<5x256xf32>
    %cst_190 = arith.constant dense<0.000000e+00> : vector<5xf32>
    %878 = vector.multi_reduction <add>, %877, %cst_190 [1] : vector<5x256xf32> to vector<5xf32>
    %879 = vector.shape_cast %878 : vector<5xf32> to vector<5x1xf32>
    %880 = vector.broadcast %873 : vector<1x1xi32> to vector<1x256xi32>
    %881 = arith.cmpi eq, %75, %880 : vector<1x256xi32>
    %cst_191 = arith.constant -1.000000e+00 : f32
    %882 = vector.broadcast %cst_191 : f32 to vector<1x256xf32>
    %883 = arith.select %881, %882, %819 : vector<1x256xi1>, vector<1x256xf32>
    %c12_i32 = arith.constant 12 : i32
    %884 = vector.broadcast %c12_i32 : i32 to vector<16x1xi32>
    %885 = arith.cmpi eq, %77, %884 : vector<16x1xi32>
    %886 = vector.extract_strided_slice %879 {offsets = [0, 0], sizes = [1, 1], strides = [1, 1]} : vector<5x1xf32> to vector<1x1xf32>
    %887 = vector.shape_cast %886 : vector<1x1xf32> to vector<1x1xf32>
    %888 = vector.broadcast %887 : vector<1x1xf32> to vector<16x1xf32>
    %889 = arith.select %885, %888, %825 : vector<16x1xi1>, vector<16x1xf32>
    %890 = vector.extract_strided_slice %879 {offsets = [1, 0], sizes = [1, 1], strides = [1, 1]} : vector<5x1xf32> to vector<1x1xf32>
    %891 = vector.shape_cast %890 : vector<1x1xf32> to vector<1x1xf32>
    %892 = vector.broadcast %891 : vector<1x1xf32> to vector<16x1xf32>
    %893 = arith.select %885, %892, %829 : vector<16x1xi1>, vector<16x1xf32>
    %894 = vector.extract_strided_slice %879 {offsets = [2, 0], sizes = [1, 1], strides = [1, 1]} : vector<5x1xf32> to vector<1x1xf32>
    %895 = vector.shape_cast %894 : vector<1x1xf32> to vector<1x1xf32>
    %896 = vector.broadcast %895 : vector<1x1xf32> to vector<16x1xf32>
    %897 = arith.select %885, %896, %833 : vector<16x1xi1>, vector<16x1xf32>
    %898 = vector.extract_strided_slice %879 {offsets = [3, 0], sizes = [1, 1], strides = [1, 1]} : vector<5x1xf32> to vector<1x1xf32>
    %899 = vector.shape_cast %898 : vector<1x1xf32> to vector<1x1xf32>
    %900 = vector.broadcast %899 : vector<1x1xf32> to vector<16x1xf32>
    %901 = arith.select %885, %900, %837 : vector<16x1xi1>, vector<16x1xf32>
    %902 = vector.extract_strided_slice %879 {offsets = [4, 0], sizes = [1, 1], strides = [1, 1]} : vector<5x1xf32> to vector<1x1xf32>
    %903 = vector.shape_cast %902 : vector<1x1xf32> to vector<1x1xf32>
    %904 = vector.broadcast %903 : vector<1x1xf32> to vector<16x1xf32>
    %905 = arith.select %885, %904, %841 : vector<16x1xi1>, vector<16x1xf32>
    %c15_i32_192 = arith.constant 15 : i32
    %906 = vector.broadcast %c15_i32_192 : i32 to vector<1x1xi32>
    %907 = arith.andi %873, %906 : vector<1x1xi32>
    %908 = arith.sitofp %907 : vector<1x1xi32> to vector<1x1xf32>
    %cst_193 = arith.constant 5.000000e-01 : f32
    %909 = vector.broadcast %cst_193 : f32 to vector<1x1xf32>
    %910 = arith.addf %908, %909 : vector<1x1xf32>
    %c4_i32_194 = arith.constant 4 : i32
    %911 = vector.broadcast %c4_i32_194 : i32 to vector<1x1xi32>
    %912 = arith.shrsi %873, %911 : vector<1x1xi32>
    %913 = arith.sitofp %912 : vector<1x1xi32> to vector<1x1xf32>
    %cst_195 = arith.constant 5.000000e-01 : f32
    %914 = vector.broadcast %cst_195 : f32 to vector<1x1xf32>
    %915 = arith.addf %913, %914 : vector<1x1xf32>
    %916 = vector.shape_cast %910 : vector<1x1xf32> to vector<1x1xf32>
    %917 = vector.broadcast %916 : vector<1x1xf32> to vector<16x1xf32>
    %918 = arith.select %885, %917, %854 : vector<16x1xi1>, vector<16x1xf32>
    %919 = vector.shape_cast %915 : vector<1x1xf32> to vector<1x1xf32>
    %920 = vector.broadcast %919 : vector<1x1xf32> to vector<16x1xf32>
    %921 = arith.select %885, %920, %857 : vector<16x1xi1>, vector<16x1xf32>
    %c1_i32_196 = arith.constant 1 : i32
    %922 = vector.broadcast %c1_i32_196 : i32 to vector<2x8xi32>
    %923 = arith.cmpi eq, %78, %922 : vector<2x8xi32>
    %c4_i32_197 = arith.constant 4 : i32
    %924 = vector.broadcast %c4_i32_197 : i32 to vector<2x8xi32>
    %925 = arith.cmpi eq, %79, %924 : vector<2x8xi32>
    %926 = arith.andi %923, %925 : vector<2x8xi1>
    %927 = vector.shape_cast %867 : vector<1x1xf32> to vector<1x1xf32>
    %928 = vector.broadcast %927 : vector<1x1xf32> to vector<2x8xf32>
    %929 = arith.select %926, %928, %865 : vector<2x8xi1>, vector<2x8xf32>
    %cst_198 = arith.constant dense<0xFF800000> : vector<1xf32>
    %930 = vector.multi_reduction <maximumf>, %883, %cst_198 [1] : vector<1x256xf32> to vector<1xf32>
    %931 = vector.shape_cast %930 : vector<1xf32> to vector<1x1xf32>
    %932 = vector.broadcast %931 : vector<1x1xf32> to vector<1x256xf32>
    %933 = arith.cmpf oeq, %883, %932 : vector<1x256xf32>
    %c256_i32_199 = arith.constant 256 : i32
    %934 = vector.broadcast %c256_i32_199 : i32 to vector<1x256xi32>
    %935 = arith.select %933, %75, %934 : vector<1x256xi1>, vector<1x256xi32>
    %cst_200 = arith.constant dense<2147483647> : vector<1xi32>
    %936 = vector.multi_reduction <minsi>, %935, %cst_200 [1] : vector<1x256xi32> to vector<1xi32>
    %937 = vector.shape_cast %936 : vector<1xi32> to vector<1x1xi32>
    %938 = vector.broadcast %937 : vector<1x1xi32> to vector<5x256xi32>
    %939 = arith.cmpi eq, %76, %938 : vector<5x256xi32>
    %cst_201 = arith.constant 0.000000e+00 : f32
    %940 = vector.broadcast %cst_201 : f32 to vector<5x256xf32>
    %941 = arith.select %939, %609, %940 : vector<5x256xi1>, vector<5x256xf32>
    %cst_202 = arith.constant dense<0.000000e+00> : vector<5xf32>
    %942 = vector.multi_reduction <add>, %941, %cst_202 [1] : vector<5x256xf32> to vector<5xf32>
    %943 = vector.shape_cast %942 : vector<5xf32> to vector<5x1xf32>
    %944 = vector.broadcast %937 : vector<1x1xi32> to vector<1x256xi32>
    %945 = arith.cmpi eq, %75, %944 : vector<1x256xi32>
    %cst_203 = arith.constant -1.000000e+00 : f32
    %946 = vector.broadcast %cst_203 : f32 to vector<1x256xf32>
    %947 = arith.select %945, %946, %883 : vector<1x256xi1>, vector<1x256xf32>
    %c13_i32 = arith.constant 13 : i32
    %948 = vector.broadcast %c13_i32 : i32 to vector<16x1xi32>
    %949 = arith.cmpi eq, %77, %948 : vector<16x1xi32>
    %950 = vector.extract_strided_slice %943 {offsets = [0, 0], sizes = [1, 1], strides = [1, 1]} : vector<5x1xf32> to vector<1x1xf32>
    %951 = vector.shape_cast %950 : vector<1x1xf32> to vector<1x1xf32>
    %952 = vector.broadcast %951 : vector<1x1xf32> to vector<16x1xf32>
    %953 = arith.select %949, %952, %889 : vector<16x1xi1>, vector<16x1xf32>
    %954 = vector.extract_strided_slice %943 {offsets = [1, 0], sizes = [1, 1], strides = [1, 1]} : vector<5x1xf32> to vector<1x1xf32>
    %955 = vector.shape_cast %954 : vector<1x1xf32> to vector<1x1xf32>
    %956 = vector.broadcast %955 : vector<1x1xf32> to vector<16x1xf32>
    %957 = arith.select %949, %956, %893 : vector<16x1xi1>, vector<16x1xf32>
    %958 = vector.extract_strided_slice %943 {offsets = [2, 0], sizes = [1, 1], strides = [1, 1]} : vector<5x1xf32> to vector<1x1xf32>
    %959 = vector.shape_cast %958 : vector<1x1xf32> to vector<1x1xf32>
    %960 = vector.broadcast %959 : vector<1x1xf32> to vector<16x1xf32>
    %961 = arith.select %949, %960, %897 : vector<16x1xi1>, vector<16x1xf32>
    %962 = vector.extract_strided_slice %943 {offsets = [3, 0], sizes = [1, 1], strides = [1, 1]} : vector<5x1xf32> to vector<1x1xf32>
    %963 = vector.shape_cast %962 : vector<1x1xf32> to vector<1x1xf32>
    %964 = vector.broadcast %963 : vector<1x1xf32> to vector<16x1xf32>
    %965 = arith.select %949, %964, %901 : vector<16x1xi1>, vector<16x1xf32>
    %966 = vector.extract_strided_slice %943 {offsets = [4, 0], sizes = [1, 1], strides = [1, 1]} : vector<5x1xf32> to vector<1x1xf32>
    %967 = vector.shape_cast %966 : vector<1x1xf32> to vector<1x1xf32>
    %968 = vector.broadcast %967 : vector<1x1xf32> to vector<16x1xf32>
    %969 = arith.select %949, %968, %905 : vector<16x1xi1>, vector<16x1xf32>
    %c15_i32_204 = arith.constant 15 : i32
    %970 = vector.broadcast %c15_i32_204 : i32 to vector<1x1xi32>
    %971 = arith.andi %937, %970 : vector<1x1xi32>
    %972 = arith.sitofp %971 : vector<1x1xi32> to vector<1x1xf32>
    %cst_205 = arith.constant 5.000000e-01 : f32
    %973 = vector.broadcast %cst_205 : f32 to vector<1x1xf32>
    %974 = arith.addf %972, %973 : vector<1x1xf32>
    %c4_i32_206 = arith.constant 4 : i32
    %975 = vector.broadcast %c4_i32_206 : i32 to vector<1x1xi32>
    %976 = arith.shrsi %937, %975 : vector<1x1xi32>
    %977 = arith.sitofp %976 : vector<1x1xi32> to vector<1x1xf32>
    %cst_207 = arith.constant 5.000000e-01 : f32
    %978 = vector.broadcast %cst_207 : f32 to vector<1x1xf32>
    %979 = arith.addf %977, %978 : vector<1x1xf32>
    %980 = vector.shape_cast %974 : vector<1x1xf32> to vector<1x1xf32>
    %981 = vector.broadcast %980 : vector<1x1xf32> to vector<16x1xf32>
    %982 = arith.select %949, %981, %918 : vector<16x1xi1>, vector<16x1xf32>
    %983 = vector.shape_cast %979 : vector<1x1xf32> to vector<1x1xf32>
    %984 = vector.broadcast %983 : vector<1x1xf32> to vector<16x1xf32>
    %985 = arith.select %949, %984, %921 : vector<16x1xi1>, vector<16x1xf32>
    %c1_i32_208 = arith.constant 1 : i32
    %986 = vector.broadcast %c1_i32_208 : i32 to vector<2x8xi32>
    %987 = arith.cmpi eq, %78, %986 : vector<2x8xi32>
    %c5_i32_209 = arith.constant 5 : i32
    %988 = vector.broadcast %c5_i32_209 : i32 to vector<2x8xi32>
    %989 = arith.cmpi eq, %79, %988 : vector<2x8xi32>
    %990 = arith.andi %987, %989 : vector<2x8xi1>
    %991 = vector.shape_cast %931 : vector<1x1xf32> to vector<1x1xf32>
    %992 = vector.broadcast %991 : vector<1x1xf32> to vector<2x8xf32>
    %993 = arith.select %990, %992, %929 : vector<2x8xi1>, vector<2x8xf32>
    %cst_210 = arith.constant dense<0xFF800000> : vector<1xf32>
    %994 = vector.multi_reduction <maximumf>, %947, %cst_210 [1] : vector<1x256xf32> to vector<1xf32>
    %995 = vector.shape_cast %994 : vector<1xf32> to vector<1x1xf32>
    %996 = vector.broadcast %995 : vector<1x1xf32> to vector<1x256xf32>
    %997 = arith.cmpf oeq, %947, %996 : vector<1x256xf32>
    %c256_i32_211 = arith.constant 256 : i32
    %998 = vector.broadcast %c256_i32_211 : i32 to vector<1x256xi32>
    %999 = arith.select %997, %75, %998 : vector<1x256xi1>, vector<1x256xi32>
    %cst_212 = arith.constant dense<2147483647> : vector<1xi32>
    %1000 = vector.multi_reduction <minsi>, %999, %cst_212 [1] : vector<1x256xi32> to vector<1xi32>
    %1001 = vector.shape_cast %1000 : vector<1xi32> to vector<1x1xi32>
    %1002 = vector.broadcast %1001 : vector<1x1xi32> to vector<5x256xi32>
    %1003 = arith.cmpi eq, %76, %1002 : vector<5x256xi32>
    %cst_213 = arith.constant 0.000000e+00 : f32
    %1004 = vector.broadcast %cst_213 : f32 to vector<5x256xf32>
    %1005 = arith.select %1003, %609, %1004 : vector<5x256xi1>, vector<5x256xf32>
    %cst_214 = arith.constant dense<0.000000e+00> : vector<5xf32>
    %1006 = vector.multi_reduction <add>, %1005, %cst_214 [1] : vector<5x256xf32> to vector<5xf32>
    %1007 = vector.shape_cast %1006 : vector<5xf32> to vector<5x1xf32>
    %1008 = vector.broadcast %1001 : vector<1x1xi32> to vector<1x256xi32>
    %1009 = arith.cmpi eq, %75, %1008 : vector<1x256xi32>
    %cst_215 = arith.constant -1.000000e+00 : f32
    %1010 = vector.broadcast %cst_215 : f32 to vector<1x256xf32>
    %1011 = arith.select %1009, %1010, %947 : vector<1x256xi1>, vector<1x256xf32>
    %c14_i32_216 = arith.constant 14 : i32
    %1012 = vector.broadcast %c14_i32_216 : i32 to vector<16x1xi32>
    %1013 = arith.cmpi eq, %77, %1012 : vector<16x1xi32>
    %1014 = vector.extract_strided_slice %1007 {offsets = [0, 0], sizes = [1, 1], strides = [1, 1]} : vector<5x1xf32> to vector<1x1xf32>
    %1015 = vector.shape_cast %1014 : vector<1x1xf32> to vector<1x1xf32>
    %1016 = vector.broadcast %1015 : vector<1x1xf32> to vector<16x1xf32>
    %1017 = arith.select %1013, %1016, %953 : vector<16x1xi1>, vector<16x1xf32>
    %1018 = vector.extract_strided_slice %1007 {offsets = [1, 0], sizes = [1, 1], strides = [1, 1]} : vector<5x1xf32> to vector<1x1xf32>
    %1019 = vector.shape_cast %1018 : vector<1x1xf32> to vector<1x1xf32>
    %1020 = vector.broadcast %1019 : vector<1x1xf32> to vector<16x1xf32>
    %1021 = arith.select %1013, %1020, %957 : vector<16x1xi1>, vector<16x1xf32>
    %1022 = vector.extract_strided_slice %1007 {offsets = [2, 0], sizes = [1, 1], strides = [1, 1]} : vector<5x1xf32> to vector<1x1xf32>
    %1023 = vector.shape_cast %1022 : vector<1x1xf32> to vector<1x1xf32>
    %1024 = vector.broadcast %1023 : vector<1x1xf32> to vector<16x1xf32>
    %1025 = arith.select %1013, %1024, %961 : vector<16x1xi1>, vector<16x1xf32>
    %1026 = vector.extract_strided_slice %1007 {offsets = [3, 0], sizes = [1, 1], strides = [1, 1]} : vector<5x1xf32> to vector<1x1xf32>
    %1027 = vector.shape_cast %1026 : vector<1x1xf32> to vector<1x1xf32>
    %1028 = vector.broadcast %1027 : vector<1x1xf32> to vector<16x1xf32>
    %1029 = arith.select %1013, %1028, %965 : vector<16x1xi1>, vector<16x1xf32>
    %1030 = vector.extract_strided_slice %1007 {offsets = [4, 0], sizes = [1, 1], strides = [1, 1]} : vector<5x1xf32> to vector<1x1xf32>
    %1031 = vector.shape_cast %1030 : vector<1x1xf32> to vector<1x1xf32>
    %1032 = vector.broadcast %1031 : vector<1x1xf32> to vector<16x1xf32>
    %1033 = arith.select %1013, %1032, %969 : vector<16x1xi1>, vector<16x1xf32>
    %c15_i32_217 = arith.constant 15 : i32
    %1034 = vector.broadcast %c15_i32_217 : i32 to vector<1x1xi32>
    %1035 = arith.andi %1001, %1034 : vector<1x1xi32>
    %1036 = arith.sitofp %1035 : vector<1x1xi32> to vector<1x1xf32>
    %cst_218 = arith.constant 5.000000e-01 : f32
    %1037 = vector.broadcast %cst_218 : f32 to vector<1x1xf32>
    %1038 = arith.addf %1036, %1037 : vector<1x1xf32>
    %c4_i32_219 = arith.constant 4 : i32
    %1039 = vector.broadcast %c4_i32_219 : i32 to vector<1x1xi32>
    %1040 = arith.shrsi %1001, %1039 : vector<1x1xi32>
    %1041 = arith.sitofp %1040 : vector<1x1xi32> to vector<1x1xf32>
    %cst_220 = arith.constant 5.000000e-01 : f32
    %1042 = vector.broadcast %cst_220 : f32 to vector<1x1xf32>
    %1043 = arith.addf %1041, %1042 : vector<1x1xf32>
    %1044 = vector.shape_cast %1038 : vector<1x1xf32> to vector<1x1xf32>
    %1045 = vector.broadcast %1044 : vector<1x1xf32> to vector<16x1xf32>
    %1046 = arith.select %1013, %1045, %982 : vector<16x1xi1>, vector<16x1xf32>
    %1047 = vector.shape_cast %1043 : vector<1x1xf32> to vector<1x1xf32>
    %1048 = vector.broadcast %1047 : vector<1x1xf32> to vector<16x1xf32>
    %1049 = arith.select %1013, %1048, %985 : vector<16x1xi1>, vector<16x1xf32>
    %c1_i32_221 = arith.constant 1 : i32
    %1050 = vector.broadcast %c1_i32_221 : i32 to vector<2x8xi32>
    %1051 = arith.cmpi eq, %78, %1050 : vector<2x8xi32>
    %c6_i32_222 = arith.constant 6 : i32
    %1052 = vector.broadcast %c6_i32_222 : i32 to vector<2x8xi32>
    %1053 = arith.cmpi eq, %79, %1052 : vector<2x8xi32>
    %1054 = arith.andi %1051, %1053 : vector<2x8xi1>
    %1055 = vector.shape_cast %995 : vector<1x1xf32> to vector<1x1xf32>
    %1056 = vector.broadcast %1055 : vector<1x1xf32> to vector<2x8xf32>
    %1057 = arith.select %1054, %1056, %993 : vector<2x8xi1>, vector<2x8xf32>
    %cst_223 = arith.constant dense<0xFF800000> : vector<1xf32>
    %1058 = vector.multi_reduction <maximumf>, %1011, %cst_223 [1] : vector<1x256xf32> to vector<1xf32>
    %1059 = vector.shape_cast %1058 : vector<1xf32> to vector<1x1xf32>
    %1060 = vector.broadcast %1059 : vector<1x1xf32> to vector<1x256xf32>
    %1061 = arith.cmpf oeq, %1011, %1060 : vector<1x256xf32>
    %c256_i32_224 = arith.constant 256 : i32
    %1062 = vector.broadcast %c256_i32_224 : i32 to vector<1x256xi32>
    %1063 = arith.select %1061, %75, %1062 : vector<1x256xi1>, vector<1x256xi32>
    %cst_225 = arith.constant dense<2147483647> : vector<1xi32>
    %1064 = vector.multi_reduction <minsi>, %1063, %cst_225 [1] : vector<1x256xi32> to vector<1xi32>
    %1065 = vector.shape_cast %1064 : vector<1xi32> to vector<1x1xi32>
    %1066 = vector.broadcast %1065 : vector<1x1xi32> to vector<5x256xi32>
    %1067 = arith.cmpi eq, %76, %1066 : vector<5x256xi32>
    %cst_226 = arith.constant 0.000000e+00 : f32
    %1068 = vector.broadcast %cst_226 : f32 to vector<5x256xf32>
    %1069 = arith.select %1067, %609, %1068 : vector<5x256xi1>, vector<5x256xf32>
    %cst_227 = arith.constant dense<0.000000e+00> : vector<5xf32>
    %1070 = vector.multi_reduction <add>, %1069, %cst_227 [1] : vector<5x256xf32> to vector<5xf32>
    %1071 = vector.shape_cast %1070 : vector<5xf32> to vector<5x1xf32>
    %c15_i32_228 = arith.constant 15 : i32
    %1072 = vector.broadcast %c15_i32_228 : i32 to vector<16x1xi32>
    %1073 = arith.cmpi eq, %77, %1072 : vector<16x1xi32>
    %1074 = vector.extract_strided_slice %1071 {offsets = [0, 0], sizes = [1, 1], strides = [1, 1]} : vector<5x1xf32> to vector<1x1xf32>
    %1075 = vector.shape_cast %1074 : vector<1x1xf32> to vector<1x1xf32>
    %1076 = vector.broadcast %1075 : vector<1x1xf32> to vector<16x1xf32>
    %1077 = arith.select %1073, %1076, %1017 : vector<16x1xi1>, vector<16x1xf32>
    %1078 = vector.extract_strided_slice %1071 {offsets = [1, 0], sizes = [1, 1], strides = [1, 1]} : vector<5x1xf32> to vector<1x1xf32>
    %1079 = vector.shape_cast %1078 : vector<1x1xf32> to vector<1x1xf32>
    %1080 = vector.broadcast %1079 : vector<1x1xf32> to vector<16x1xf32>
    %1081 = arith.select %1073, %1080, %1021 : vector<16x1xi1>, vector<16x1xf32>
    %1082 = vector.extract_strided_slice %1071 {offsets = [2, 0], sizes = [1, 1], strides = [1, 1]} : vector<5x1xf32> to vector<1x1xf32>
    %1083 = vector.shape_cast %1082 : vector<1x1xf32> to vector<1x1xf32>
    %1084 = vector.broadcast %1083 : vector<1x1xf32> to vector<16x1xf32>
    %1085 = arith.select %1073, %1084, %1025 : vector<16x1xi1>, vector<16x1xf32>
    %1086 = vector.extract_strided_slice %1071 {offsets = [3, 0], sizes = [1, 1], strides = [1, 1]} : vector<5x1xf32> to vector<1x1xf32>
    %1087 = vector.shape_cast %1086 : vector<1x1xf32> to vector<1x1xf32>
    %1088 = vector.broadcast %1087 : vector<1x1xf32> to vector<16x1xf32>
    %1089 = arith.select %1073, %1088, %1029 : vector<16x1xi1>, vector<16x1xf32>
    %1090 = vector.extract_strided_slice %1071 {offsets = [4, 0], sizes = [1, 1], strides = [1, 1]} : vector<5x1xf32> to vector<1x1xf32>
    %1091 = vector.shape_cast %1090 : vector<1x1xf32> to vector<1x1xf32>
    %1092 = vector.broadcast %1091 : vector<1x1xf32> to vector<16x1xf32>
    %1093 = arith.select %1073, %1092, %1033 : vector<16x1xi1>, vector<16x1xf32>
    %c15_i32_229 = arith.constant 15 : i32
    %1094 = vector.broadcast %c15_i32_229 : i32 to vector<1x1xi32>
    %1095 = arith.andi %1065, %1094 : vector<1x1xi32>
    %1096 = arith.sitofp %1095 : vector<1x1xi32> to vector<1x1xf32>
    %cst_230 = arith.constant 5.000000e-01 : f32
    %1097 = vector.broadcast %cst_230 : f32 to vector<1x1xf32>
    %1098 = arith.addf %1096, %1097 : vector<1x1xf32>
    %c4_i32_231 = arith.constant 4 : i32
    %1099 = vector.broadcast %c4_i32_231 : i32 to vector<1x1xi32>
    %1100 = arith.shrsi %1065, %1099 : vector<1x1xi32>
    %1101 = arith.sitofp %1100 : vector<1x1xi32> to vector<1x1xf32>
    %cst_232 = arith.constant 5.000000e-01 : f32
    %1102 = vector.broadcast %cst_232 : f32 to vector<1x1xf32>
    %1103 = arith.addf %1101, %1102 : vector<1x1xf32>
    %1104 = vector.shape_cast %1098 : vector<1x1xf32> to vector<1x1xf32>
    %1105 = vector.broadcast %1104 : vector<1x1xf32> to vector<16x1xf32>
    %1106 = arith.select %1073, %1105, %1046 : vector<16x1xi1>, vector<16x1xf32>
    %1107 = vector.shape_cast %1103 : vector<1x1xf32> to vector<1x1xf32>
    %1108 = vector.broadcast %1107 : vector<1x1xf32> to vector<16x1xf32>
    %1109 = arith.select %1073, %1108, %1049 : vector<16x1xi1>, vector<16x1xf32>
    %c1_i32_233 = arith.constant 1 : i32
    %1110 = vector.broadcast %c1_i32_233 : i32 to vector<2x8xi32>
    %1111 = arith.cmpi eq, %78, %1110 : vector<2x8xi32>
    %c7_i32_234 = arith.constant 7 : i32
    %1112 = vector.broadcast %c7_i32_234 : i32 to vector<2x8xi32>
    %1113 = arith.cmpi eq, %79, %1112 : vector<2x8xi32>
    %1114 = arith.andi %1111, %1113 : vector<2x8xi1>
    %1115 = vector.shape_cast %1059 : vector<1x1xf32> to vector<1x1xf32>
    %1116 = vector.broadcast %1115 : vector<1x1xf32> to vector<2x8xf32>
    %1117 = arith.select %1114, %1116, %1057 : vector<2x8xi1>, vector<2x8xf32>
    %c0_235 = arith.constant 0 : index
    %c0_236 = arith.constant 0 : index
    %1118 = vector.load %arg6[%c0_235, %c0_236] : memref<2x8xf32, #tpu.memory_space<vmem>>, vector<2x8xf32>
    tpu.vector_store %arg6[%c0_235, %c0_236], %1117 {strides = array<i32>} : memref<2x8xf32, #tpu.memory_space<vmem>>, vector<2x8xf32>,
    %cst_237 = arith.constant -4.13516665 : f32
    %cst_238 = arith.constant 4.13516665 : f32
    %1119 = vector.broadcast %cst_237 : f32 to vector<16x1xf32>
    %1120 = arith.maximumf %1119, %1085 : vector<16x1xf32>
    %1121 = vector.broadcast %cst_238 : f32 to vector<16x1xf32>
    %1122 = arith.minimumf %1121, %1120 : vector<16x1xf32>
    %cst_239 = arith.constant -4.13516665 : f32
    %cst_240 = arith.constant 4.13516665 : f32
    %1123 = vector.broadcast %cst_239 : f32 to vector<16x1xf32>
    %1124 = arith.maximumf %1123, %1089 : vector<16x1xf32>
    %1125 = vector.broadcast %cst_240 : f32 to vector<16x1xf32>
    %1126 = arith.minimumf %1125, %1124 : vector<16x1xf32>
    %cst_241 = arith.constant 8.000000e+00 : f32
    %1127 = vector.broadcast %cst_241 : f32 to vector<16x1xf32>
    %1128 = arith.mulf %1077, %1127 : vector<16x1xf32>
    %1129 = arith.addf %1106, %1128 : vector<16x1xf32>
    %cst_242 = arith.constant 8.000000e+00 : f32
    %1130 = vector.broadcast %cst_242 : f32 to vector<16x1xf32>
    %1131 = arith.mulf %1081, %1130 : vector<16x1xf32>
    %1132 = arith.addf %1109, %1131 : vector<16x1xf32>
    %1133 = math.exp %1122 : vector<16x1xf32>
    %cst_243 = arith.constant 8.000000e+00 : f32
    %1134 = vector.broadcast %cst_243 : f32 to vector<16x1xf32>
    %1135 = arith.mulf %1134, %1133 : vector<16x1xf32>
    %1136 = math.exp %1126 : vector<16x1xf32>
    %cst_244 = arith.constant 8.000000e+00 : f32
    %1137 = vector.broadcast %cst_244 : f32 to vector<16x1xf32>
    %1138 = arith.mulf %1137, %1136 : vector<16x1xf32>
    %1139 = math.cos %1093 : vector<16x1xf32>
    %1140 = math.sin %1093 : vector<16x1xf32>
    %cst_245 = arith.constant 5.000000e-01 : f32
    %1141 = vector.broadcast %cst_245 : f32 to vector<16x1xf32>
    %1142 = arith.mulf %1141, %1135 : vector<16x1xf32>
    %1143 = arith.mulf %1142, %1139 : vector<16x1xf32>
    %cst_246 = arith.constant 5.000000e-01 : f32
    %1144 = vector.broadcast %cst_246 : f32 to vector<16x1xf32>
    %1145 = arith.mulf %1144, %1135 : vector<16x1xf32>
    %1146 = arith.mulf %1145, %1140 : vector<16x1xf32>
    %cst_247 = arith.constant -5.000000e-01 : f32
    %1147 = vector.broadcast %cst_247 : f32 to vector<16x1xf32>
    %1148 = arith.mulf %1147, %1138 : vector<16x1xf32>
    %1149 = arith.mulf %1148, %1140 : vector<16x1xf32>
    %cst_248 = arith.constant 5.000000e-01 : f32
    %1150 = vector.broadcast %cst_248 : f32 to vector<16x1xf32>
    %1151 = arith.mulf %1150, %1138 : vector<16x1xf32>
    %1152 = arith.mulf %1151, %1139 : vector<16x1xf32>
    %1153 = arith.subf %1129, %1143 : vector<16x1xf32>
    %1154 = arith.subf %1153, %1149 : vector<16x1xf32>
    %1155 = arith.subf %1132, %1146 : vector<16x1xf32>
    %1156 = arith.subf %1155, %1152 : vector<16x1xf32>
    %1157 = arith.addf %1129, %1143 : vector<16x1xf32>
    %1158 = arith.subf %1157, %1149 : vector<16x1xf32>
    %1159 = arith.addf %1132, %1146 : vector<16x1xf32>
    %1160 = arith.subf %1159, %1152 : vector<16x1xf32>
    %1161 = arith.addf %1129, %1143 : vector<16x1xf32>
    %1162 = arith.addf %1161, %1149 : vector<16x1xf32>
    %1163 = arith.addf %1132, %1146 : vector<16x1xf32>
    %1164 = arith.addf %1163, %1152 : vector<16x1xf32>
    %1165 = arith.subf %1129, %1143 : vector<16x1xf32>
    %1166 = arith.addf %1165, %1149 : vector<16x1xf32>
    %1167 = arith.subf %1132, %1146 : vector<16x1xf32>
    %1168 = arith.addf %1167, %1152 : vector<16x1xf32>
    %1169 = arith.minimumf %1154, %1158 : vector<16x1xf32>
    %1170 = arith.minimumf %1162, %1166 : vector<16x1xf32>
    %1171 = arith.minimumf %1169, %1170 : vector<16x1xf32>
    %1172 = arith.minimumf %1156, %1160 : vector<16x1xf32>
    %1173 = arith.minimumf %1164, %1168 : vector<16x1xf32>
    %1174 = arith.minimumf %1172, %1173 : vector<16x1xf32>
    %1175 = arith.maximumf %1154, %1158 : vector<16x1xf32>
    %1176 = arith.maximumf %1162, %1166 : vector<16x1xf32>
    %1177 = arith.maximumf %1175, %1176 : vector<16x1xf32>
    %1178 = arith.maximumf %1156, %1160 : vector<16x1xf32>
    %1179 = arith.maximumf %1164, %1168 : vector<16x1xf32>
    %1180 = arith.maximumf %1178, %1179 : vector<16x1xf32>
    %1181 = tpu.iota {dimensions = array<i32: 1>} : vector<16x4xi32>
    %c0_i32_249 = arith.constant 0 : i32
    %1182 = vector.broadcast %c0_i32_249 : i32 to vector<16x4xi32>
    %1183 = arith.cmpi eq, %1181, %1182 : vector<16x4xi32>
    %c1_i32_250 = arith.constant 1 : i32
    %1184 = vector.broadcast %c1_i32_250 : i32 to vector<16x4xi32>
    %1185 = arith.cmpi eq, %1181, %1184 : vector<16x4xi32>
    %c2_i32_251 = arith.constant 2 : i32
    %1186 = vector.broadcast %c2_i32_251 : i32 to vector<16x4xi32>
    %1187 = arith.cmpi eq, %1181, %1186 : vector<16x4xi32>
    %1188 = vector.shape_cast %1177 : vector<16x1xf32> to vector<16x1xf32>
    %1189 = vector.broadcast %1188 : vector<16x1xf32> to vector<16x4xf32>
    %1190 = vector.shape_cast %1180 : vector<16x1xf32> to vector<16x1xf32>
    %1191 = vector.broadcast %1190 : vector<16x1xf32> to vector<16x4xf32>
    %1192 = arith.select %1187, %1189, %1191 : vector<16x4xi1>, vector<16x4xf32>
    %1193 = vector.shape_cast %1174 : vector<16x1xf32> to vector<16x1xf32>
    %1194 = vector.broadcast %1193 : vector<16x1xf32> to vector<16x4xf32>
    %1195 = arith.select %1185, %1194, %1192 : vector<16x4xi1>, vector<16x4xf32>
    %1196 = vector.shape_cast %1171 : vector<16x1xf32> to vector<16x1xf32>
    %1197 = vector.broadcast %1196 : vector<16x1xf32> to vector<16x4xf32>
    %1198 = arith.select %1183, %1197, %1195 : vector<16x4xi1>, vector<16x4xf32>
    %c0_252 = arith.constant 0 : index
    %c0_253 = arith.constant 0 : index
    %1199 = vector.load %arg7[%c0_252, %c0_253] : memref<16x4xf32, #tpu.memory_space<vmem>>, vector<16x4xf32>
    tpu.vector_store %arg7[%c0_252, %c0_253], %1198 {strides = array<i32>} : memref<16x4xf32, #tpu.memory_space<vmem>>, vector<16x4xf32>,
    %1200 = tpu.iota {dimensions = array<i32: 1>} : vector<16x256xi32>
    %c15_i32_254 = arith.constant 15 : i32
    %1201 = vector.broadcast %c15_i32_254 : i32 to vector<16x256xi32>
    %1202 = arith.andi %1200, %1201 : vector<16x256xi32>
    %1203 = arith.sitofp %1202 : vector<16x256xi32> to vector<16x256xf32>
    %c4_i32_255 = arith.constant 4 : i32
    %1204 = vector.broadcast %c4_i32_255 : i32 to vector<16x256xi32>
    %1205 = arith.shrsi %1200, %1204 : vector<16x256xi32>
    %1206 = arith.sitofp %1205 : vector<16x256xi32> to vector<16x256xf32>
    %1207 = arith.subf %1158, %1154 : vector<16x1xf32>
    %1208 = vector.broadcast %1156 : vector<16x1xf32> to vector<16x256xf32>
    %1209 = arith.subf %1206, %1208 : vector<16x256xf32>
    %1210 = vector.broadcast %1207 : vector<16x1xf32> to vector<16x256xf32>
    %1211 = arith.mulf %1210, %1209 : vector<16x256xf32>
    %1212 = arith.subf %1160, %1156 : vector<16x1xf32>
    %1213 = vector.broadcast %1154 : vector<16x1xf32> to vector<16x256xf32>
    %1214 = arith.subf %1203, %1213 : vector<16x256xf32>
    %1215 = vector.broadcast %1212 : vector<16x1xf32> to vector<16x256xf32>
    %1216 = arith.mulf %1215, %1214 : vector<16x256xf32>
    %1217 = arith.subf %1211, %1216 : vector<16x256xf32>
    %1218 = arith.subf %1162, %1158 : vector<16x1xf32>
    %1219 = vector.broadcast %1160 : vector<16x1xf32> to vector<16x256xf32>
    %1220 = arith.subf %1206, %1219 : vector<16x256xf32>
    %1221 = vector.broadcast %1218 : vector<16x1xf32> to vector<16x256xf32>
    %1222 = arith.mulf %1221, %1220 : vector<16x256xf32>
    %1223 = arith.subf %1164, %1160 : vector<16x1xf32>
    %1224 = vector.broadcast %1158 : vector<16x1xf32> to vector<16x256xf32>
    %1225 = arith.subf %1203, %1224 : vector<16x256xf32>
    %1226 = vector.broadcast %1223 : vector<16x1xf32> to vector<16x256xf32>
    %1227 = arith.mulf %1226, %1225 : vector<16x256xf32>
    %1228 = arith.subf %1222, %1227 : vector<16x256xf32>
    %1229 = arith.subf %1166, %1162 : vector<16x1xf32>
    %1230 = vector.broadcast %1164 : vector<16x1xf32> to vector<16x256xf32>
    %1231 = arith.subf %1206, %1230 : vector<16x256xf32>
    %1232 = vector.broadcast %1229 : vector<16x1xf32> to vector<16x256xf32>
    %1233 = arith.mulf %1232, %1231 : vector<16x256xf32>
    %1234 = arith.subf %1168, %1164 : vector<16x1xf32>
    %1235 = vector.broadcast %1162 : vector<16x1xf32> to vector<16x256xf32>
    %1236 = arith.subf %1203, %1235 : vector<16x256xf32>
    %1237 = vector.broadcast %1234 : vector<16x1xf32> to vector<16x256xf32>
    %1238 = arith.mulf %1237, %1236 : vector<16x256xf32>
    %1239 = arith.subf %1233, %1238 : vector<16x256xf32>
    %1240 = arith.subf %1154, %1166 : vector<16x1xf32>
    %1241 = vector.broadcast %1168 : vector<16x1xf32> to vector<16x256xf32>
    %1242 = arith.subf %1206, %1241 : vector<16x256xf32>
    %1243 = vector.broadcast %1240 : vector<16x1xf32> to vector<16x256xf32>
    %1244 = arith.mulf %1243, %1242 : vector<16x256xf32>
    %1245 = arith.subf %1156, %1168 : vector<16x1xf32>
    %1246 = vector.broadcast %1166 : vector<16x1xf32> to vector<16x256xf32>
    %1247 = arith.subf %1203, %1246 : vector<16x256xf32>
    %1248 = vector.broadcast %1245 : vector<16x1xf32> to vector<16x256xf32>
    %1249 = arith.mulf %1248, %1247 : vector<16x256xf32>
    %1250 = arith.subf %1244, %1249 : vector<16x256xf32>
    %cst_256 = arith.constant 0.000000e+00 : f32
    %1251 = vector.broadcast %cst_256 : f32 to vector<16x256xf32>
    %1252 = arith.cmpf oge, %1217, %1251 : vector<16x256xf32>
    %cst_257 = arith.constant 0.000000e+00 : f32
    %1253 = vector.broadcast %cst_257 : f32 to vector<16x256xf32>
    %1254 = arith.cmpf oge, %1228, %1253 : vector<16x256xf32>
    %1255 = arith.andi %1252, %1254 : vector<16x256xi1>
    %cst_258 = arith.constant 0.000000e+00 : f32
    %1256 = vector.broadcast %cst_258 : f32 to vector<16x256xf32>
    %1257 = arith.cmpf oge, %1239, %1256 : vector<16x256xf32>
    %1258 = arith.andi %1255, %1257 : vector<16x256xi1>
    %cst_259 = arith.constant 0.000000e+00 : f32
    %1259 = vector.broadcast %cst_259 : f32 to vector<16x256xf32>
    %1260 = arith.cmpf oge, %1250, %1259 : vector<16x256xf32>
    %1261 = arith.andi %1258, %1260 : vector<16x256xi1>
    %cst_260 = arith.constant 0.000000e+00 : f32
    %1262 = vector.broadcast %cst_260 : f32 to vector<16x256xf32>
    %1263 = arith.cmpf ole, %1217, %1262 : vector<16x256xf32>
    %cst_261 = arith.constant 0.000000e+00 : f32
    %1264 = vector.broadcast %cst_261 : f32 to vector<16x256xf32>
    %1265 = arith.cmpf ole, %1228, %1264 : vector<16x256xf32>
    %1266 = arith.andi %1263, %1265 : vector<16x256xi1>
    %cst_262 = arith.constant 0.000000e+00 : f32
    %1267 = vector.broadcast %cst_262 : f32 to vector<16x256xf32>
    %1268 = arith.cmpf ole, %1239, %1267 : vector<16x256xf32>
    %1269 = arith.andi %1266, %1268 : vector<16x256xi1>
    %cst_263 = arith.constant 0.000000e+00 : f32
    %1270 = vector.broadcast %cst_263 : f32 to vector<16x256xf32>
    %1271 = arith.cmpf ole, %1250, %1270 : vector<16x256xf32>
    %1272 = arith.andi %1269, %1271 : vector<16x256xi1>
    %1273 = arith.ori %1261, %1272 : vector<16x256xi1>
    %cst_264 = arith.constant 1.000000e+00 : f32
    %cst_265 = arith.constant 0.000000e+00 : f32
    %1274 = vector.broadcast %cst_264 : f32 to vector<16x256xf32>
    %1275 = vector.broadcast %cst_265 : f32 to vector<16x256xf32>
    %1276 = arith.select %1273, %1274, %1275 : vector<16x256xi1>, vector<16x256xf32>
    %c0_266 = arith.constant 0 : index
    %c0_267 = arith.constant 0 : index
    %1277 = vector.load %arg8[%c0_266, %c0_267] : memref<16x256xf32, #tpu.memory_space<vmem>>, vector<16x256xf32>
    tpu.vector_store %arg8[%c0_266, %c0_267], %1276 {strides = array<i32>} : memref<16x256xf32, #tpu.memory_space<vmem>>, vector<16x256xf32>,
    return
  }
  func.func @transform_0(%arg0: i32) -> (i32, i32) {
    %c0_i32 = arith.constant 0 : i32
    %c0_i32_0 = arith.constant 0 : i32
    %c0_i32_1 = arith.constant 0 : i32
    return %c0_i32, %c0_i32_0 : i32, i32
  }
  func.func @transform_1(%arg0: i32) -> (i32, i32) {
    %c0_i32 = arith.constant 0 : i32
    %c0_i32_0 = arith.constant 0 : i32
    %c0_i32_1 = arith.constant 0 : i32
    return %c0_i32, %c0_i32_0 : i32, i32
  }
  func.func @transform_2(%arg0: i32) -> (i32, i32) {
    %c0_i32 = arith.constant 0 : i32
    %c0_i32_0 = arith.constant 0 : i32
    %c0_i32_1 = arith.constant 0 : i32
    return %c0_i32, %c0_i32_0 : i32, i32
  }
  func.func @transform_3(%arg0: i32) -> (i32, i32) {
    %c0_i32 = arith.constant 0 : i32
    %c0_i32_0 = arith.constant 0 : i32
    %c0_i32_1 = arith.constant 0 : i32
    return %c0_i32, %c0_i32_0 : i32, i32
  }
  func.func @transform_4(%arg0: i32) -> (i32, i32) {
    %c0_i32 = arith.constant 0 : i32
    %c0_i32_0 = arith.constant 0 : i32
    %c0_i32_1 = arith.constant 0 : i32
    return %c0_i32, %c0_i32_0 : i32, i32
  }
  func.func @transform_5(%arg0: i32) -> (i32, i32) {
    %c0_i32 = arith.constant 0 : i32
    %c0_i32_0 = arith.constant 0 : i32
    %c0_i32_1 = arith.constant 0 : i32
    return %c0_i32, %c0_i32_0 : i32, i32
  }
  func.func @transform_6(%arg0: i32) -> (i32, i32) {
    %c0_i32 = arith.constant 0 : i32
    %c0_i32_0 = arith.constant 0 : i32
    %c0_i32_1 = arith.constant 0 : i32
    return %c0_i32, %c0_i32_0 : i32, i32
  }
  func.func @transform_7(%arg0: i32) -> (i32, i32) {
    %c0_i32 = arith.constant 0 : i32
    %c0_i32_0 = arith.constant 0 : i32
    %c0_i32_1 = arith.constant 0 : i32
    return %c0_i32, %c0_i32_0 : i32, i32
  }
}

</mosaic_0001>

<llo_original>
// kernel: obb_rpn_forward.1
$region0: #{obb_rpn_forward.1}
  #allocation0 [shape = 'u32[]', space=smem, size = 0x4, offset = 0x4, fixed_abs, tag = 'smem constant byte address 0x4 - core index']
  #allocation1 [shape = 'u32[72,128]{1,0:T(1,128)}', space=vmem, size = 0x9000, scoped, tag = 'internal scratch']
  %s0 = inlined_call_operand.vmem [shape: f32[3,512], index: 0, kind: input, shape index: {}]
  %s1 = inlined_call_operand.vmem [shape: bf16[32,27], index: 1, kind: input, shape index: {}]
  %s2 = inlined_call_operand.vmem [shape: f32[32,1], index: 2, kind: input, shape index: {}]
  %s3 = inlined_call_operand.vmem [shape: bf16[6,32], index: 3, kind: input, shape index: {}]
  %s4 = inlined_call_operand.vmem [shape: f32[6,1], index: 4, kind: input, shape index: {}]
  %s5 = inlined_call_operand.hbm [shape: f32[2,8], index: 5, kind: output, shape index: {0}]
  %s6 = inlined_call_operand.vmem [shape: f32[16,4], index: 6, kind: output, shape index: {1}]
  %s7 = inlined_call_operand.vmem [shape: f32[16,256], index: 7, kind: output, shape index: {2}]
  %8 = xla_tuple %s5, %s6, %s7
  %s9 = sld [smem:[#allocation0]]
  $region46: #{obb_rpn_forward.1} parent=0
    _
  %s11 = ssub.s32 1, %s9
  %s12 = scalar_select 0, %s11, %s9
  $region1: #{obb_rpn_forward.1} parent=0
    #allocation2 [shape = 'u8[1024]{0}', space=vmem, size = 0x400, scoped, tag = 'output window, operand 0, single buffered']
    #allocation3 [shape = 's32[1]{0}', space=sflag, size = 0x4, scoped, tag = 'scoped memory for obb_rpn_forward.1']
    %13 = vsyncpa [#allocation3], 0
    // Predicated region
    $region2: #{obb_rpn_forward.1} parent=1 // pred_check
      _
    $region3: #{obb_rpn_forward.1} parent=1 // pred_check_branch
      %15 = sbr.rel (0) target = $region5
    $region4: #{obb_rpn_forward.1} parent=1 // pred_region
      _
    $region5: #{obb_rpn_forward.1} parent=1 // pred_fallthru
      _
    // Predicated region
    $region6: #{obb_rpn_forward.1} parent=1 // pred_check
      _
    $region7: #{obb_rpn_forward.1} parent=1 // pred_check_branch
      %17 = sbr.rel (0) target = $region9
    $region8: #{obb_rpn_forward.1} parent=1 // pred_region
      _
    $region9: #{obb_rpn_forward.1} parent=1 // pred_fallthru
      _
    // Predicated region
    $region10: #{obb_rpn_forward.1} parent=1 // pred_check
      _
    $region11: #{obb_rpn_forward.1} parent=1 // pred_check_branch
      %19 = sbr.rel (0) target = $region13
    $region12: #{obb_rpn_forward.1} parent=1 // pred_region
      _
    $region13: #{obb_rpn_forward.1} parent=1 // pred_fallthru
      _
    // Predicated region
    $region14: #{obb_rpn_forward.1} parent=1 // pred_check
      _
    $region15: #{obb_rpn_forward.1} parent=1 // pred_check_branch
      %21 = sbr.rel (0) target = $region17
    $region16: #{obb_rpn_forward.1} parent=1 // pred_region
      _
    $region17: #{obb_rpn_forward.1} parent=1 // pred_fallthru
      _
    // Predicated region
    $region18: #{obb_rpn_forward.1} parent=1 // pred_check
      _
    $region19: #{obb_rpn_forward.1} parent=1 // pred_check_branch
      %23 = sbr.rel (0) target = $region21
    $region20: #{obb_rpn_forward.1} parent=1 // pred_region
      _
    $region21: #{obb_rpn_forward.1} parent=1 // pred_fallthru
      _
    %v25 = vld [vmem:[%s0] sm:$0x77]
    %v26 = vld [vmem:[%s0 + $0x8] sm:$0x77]
    %v27 = vlaneseq
    %v28 = vand.u32 %v27, 127
    %v29 = vadd.s32 %v28, 128
    %v30 = vadd.s32 %v28, 256
    %v31 = vadd.s32 %v28, 384
    %v32 = vand.u32 %v28, 15
    %v33 = vand.u32 %v29, 15
    %v34 = vand.u32 %v30, 15
    %v35 = vand.u32 %v31, 15
    %v36 = vshra.s32 %v28, 4
    %v37 = vshra.s32 %v29, 4
    %v38 = vshra.s32 %v30, 4
    %v39 = vshra.s32 %v31, 4
    %v40 = vand.u32 %v36, 15
    %v41 = vand.u32 %v37, 15
    %v42 = vand.u32 %v38, 15
    %v43 = vand.u32 %v39, 15
    %46 = vst [vmem:[#allocation1] ss:$2 sm:$0xff] %v25
    %s47 = scalar_lea.vmem [#allocation1], 16
    %48 = vst [vmem:[%s47] ss:$2 sm:$0xff] %v26
    %v49 = vld.sshfl [vmem:[#allocation1] sm:$0xff pattern:$0x75316420]
    %v50 = vld.sshfl [vmem:[#allocation1 + $0x8] sm:$0xff pattern:$0x75316420]
    %v51 = vld.sshfl [vmem:[#allocation1 + $0x10] sm:$0xff pattern:$0x75316420]
    %v52 = vld.sshfl [vmem:[#allocation1 + $0x18] sm:$0xff pattern:$0x75316420]
    %57 = vrot.lane.b32.xlu0 %v49, 17
    %v58 = vpop.permute.xlu0 %57
    %59 = vrot.lane.b32.xlu0 %v50, 17
    %v60 = vpop.permute.xlu0 %59
    %61 = vrot.lane.b32.xlu0 %v51, 17
    %v62 = vpop.permute.xlu0 %61
    %63 = vrot.lane.b32.xlu0 %v52, 17
    %v64 = vpop.permute.xlu0 %63
    %vm65 = vcmp.lt.s32.totalorder %v28, 17
    %v66 = vsel %vm65, %v62, %v64
    %v67 = vsel %vm65, %v60, %v62
    %v68 = vsel %vm65, %v58, %v60
    %v69 = vsel %vm65, %v64, %v58
    %vm70 = vcmp.ge.s32.totalorder %v40, 1
    %vm71 = vcmp.ge.s32.totalorder %v41, 1
    %vm72 = vcmp.ge.s32.totalorder %v42, 1
    %vm73 = vcmp.ge.s32.totalorder %v43, 1
    %vm74 = vcmp.ge.s32.totalorder %v32, 1
    %vm75 = vcmp.ge.s32.totalorder %v33, 1
    %vm76 = vcmp.ge.s32.totalorder %v34, 1
    %vm77 = vcmp.ge.s32.totalorder %v35, 1
    %vm78 = vmand %vm70, %vm74
    %vm79 = vmand %vm71, %vm75
    %vm80 = vmand %vm72, %vm76
    %vm81 = vmand %vm73, %vm77
    %v82 = vsel %vm78, %v69, 0.0
    %v83 = vsel %vm79, %v68, 0.0
    %v84 = vsel %vm80, %v67, 0.0
    %v85 = vsel %vm81, %v66, 0.0
    %86 = vst [vmem:[#allocation1] ss:$2 sm:$0xff] %v25
    %s87 = scalar_lea.vmem [#allocation1], 16
    %88 = vst [vmem:[%s87] ss:$2 sm:$0xff] %v26
    %v89 = vld.sshfl [vmem:[#allocation1] sm:$0xff pattern:$0x75316420]
    %v90 = vld.sshfl [vmem:[#allocation1 + $0x8] sm:$0xff pattern:$0x75316420]
    %v91 = vld.sshfl [vmem:[#allocation1 + $0x10] sm:$0xff pattern:$0x75316420]
    %v92 = vld.sshfl [vmem:[#allocation1 + $0x18] sm:$0xff pattern:$0x75316420]
    %97 = vrot.lane.b32.xlu0 %v89, 16
    %v98 = vpop.permute.xlu0 %97
    %99 = vrot.lane.b32.xlu0 %v90, 16
    %v100 = vpop.permute.xlu0 %99
    %101 = vrot.lane.b32.xlu0 %v91, 16
    %v102 = vpop.permute.xlu0 %101
    %103 = vrot.lane.b32.xlu0 %v92, 16
    %v104 = vpop.permute.xlu0 %103
    %vm105 = vcmp.lt.s32.totalorder %v28, 16
    %v106 = vsel %vm105, %v102, %v104
    %v107 = vsel %vm105, %v100, %v102
    %v108 = vsel %vm105, %v98, %v100
    %v109 = vsel %vm105, %v104, %v98
    %v110 = vsel %vm70, %v109, 0.0
    %v111 = vsel %vm71, %v108, 0.0
    %v112 = vsel %vm72, %v107, 0.0
    %v113 = vsel %vm73, %v106, 0.0
    %114 = vst [vmem:[#allocation1] ss:$2 sm:$0xff] %v25
    %s115 = scalar_lea.vmem [#allocation1], 16
    %116 = vst [vmem:[%s115] ss:$2 sm:$0xff] %v26
    %v117 = vld.sshfl [vmem:[#allocation1] sm:$0xff pattern:$0x75316420]
    %v118 = vld.sshfl [vmem:[#allocation1 + $0x8] sm:$0xff pattern:$0x75316420]
    %v119 = vld.sshfl [vmem:[#allocation1 + $0x10] sm:$0xff pattern:$0x75316420]
    %v120 = vld.sshfl [vmem:[#allocation1 + $0x18] sm:$0xff pattern:$0x75316420]
    %125 = vrot.lane.b32.xlu0 %v117, 15
    %v126 = vpop.permute.xlu0 %125
    %127 = vrot.lane.b32.xlu0 %v118, 15
    %v128 = vpop.permute.xlu0 %127
    %129 = vrot.lane.b32.xlu0 %v119, 15
    %v130 = vpop.permute.xlu0 %129
    %131 = vrot.lane.b32.xlu0 %v120, 15
    %v132 = vpop.permute.xlu0 %131
    %vm133 = vcmp.lt.s32.totalorder %v28, 15
    %v134 = vsel %vm133, %v130, %v132
    %v135 = vsel %vm133, %v128, %v130
    %v136 = vsel %vm133, %v126, %v128
    %v137 = vsel %vm133, %v132, %v126
    %vm138 = vcmp.le.s32.totalorder %v32, 14
    %vm139 = vcmp.le.s32.totalorder %v33, 14
    %vm140 = vcmp.le.s32.totalorder %v34, 14
    %vm141 = vcmp.le.s32.totalorder %v35, 14
    %vm142 = vmand %vm70, %vm138
    %vm143 = vmand %vm71, %vm139
    %vm144 = vmand %vm72, %vm140
    %vm145 = vmand %vm73, %vm141
    %v146 = vsel %vm142, %v137, 0.0
    %v147 = vsel %vm143, %v136, 0.0
    %v148 = vsel %vm144, %v135, 0.0
    %v149 = vsel %vm145, %v134, 0.0
    %150 = vst [vmem:[#allocation1] ss:$2 sm:$0xff] %v25
    %s151 = scalar_lea.vmem [#allocation1], 16
    %152 = vst [vmem:[%s151] ss:$2 sm:$0xff] %v26
    %v153 = vld.sshfl [vmem:[#allocation1] sm:$0xff pattern:$0x75316420]
    %v154 = vld.sshfl [vmem:[#allocation1 + $0x8] sm:$0xff pattern:$0x75316420]
    %v155 = vld.sshfl [vmem:[#allocation1 + $0x10] sm:$0xff pattern:$0x75316420]
    %v156 = vld.sshfl [vmem:[#allocation1 + $0x18] sm:$0xff pattern:$0x75316420]
    %161 = vrot.lane.b32.xlu0 %v153, 1
    %v162 = vpop.permute.xlu0 %161
    %163 = vrot.lane.b32.xlu0 %v154, 1
    %v164 = vpop.permute.xlu0 %163
    %165 = vrot.lane.b32.xlu0 %v155, 1
    %v166 = vpop.permute.xlu0 %165
    %167 = vrot.lane.b32.xlu0 %v156, 1
    %v168 = vpop.permute.xlu0 %167
    %vm169 = vcmp.lt.s32.totalorder %v28, 1
    %v170 = vsel %vm169, %v166, %v168
    %v171 = vsel %vm169, %v164, %v166
    %v172 = vsel %vm169, %v162, %v164
    %v173 = vsel %vm169, %v168, %v162
    %v174 = vsel %vm74, %v173, 0.0
    %v175 = vsel %vm75, %v172, 0.0
    %v176 = vsel %vm76, %v171, 0.0
    %v177 = vsel %vm77, %v170, 0.0
    %178 = vst [vmem:[#allocation1] ss:$2 sm:$0xff] %v25
    %s179 = scalar_lea.vmem [#allocation1], 16
    %180 = vst [vmem:[%s179] ss:$2 sm:$0xff] %v26
    %v181 = vld.sshfl [vmem:[#allocation1] sm:$0xff pattern:$0x75316420]
    %v182 = vld.sshfl [vmem:[#allocation1 + $0x8] sm:$0xff pattern:$0x75316420]
    %v183 = vld.sshfl [vmem:[#allocation1 + $0x10] sm:$0xff pattern:$0x75316420]
    %v184 = vld.sshfl [vmem:[#allocation1 + $0x18] sm:$0xff pattern:$0x75316420]
    %189 = vrot.lane.b32.xlu0 %v181, 127
    %v190 = vpop.permute.xlu0 %189
    %191 = vrot.lane.b32.xlu0 %v182, 127
    %v192 = vpop.permute.xlu0 %191
    %193 = vrot.lane.b32.xlu0 %v183, 127
    %v194 = vpop.permute.xlu0 %193
    %195 = vrot.lane.b32.xlu0 %v184, 127
    %v196 = vpop.permute.xlu0 %195
    %vm197 = vcmp.lt.s32.totalorder %v28, 127
    %v198 = vsel %vm197, %v194, %v196
    %v199 = vsel %vm197, %v192, %v194
    %v200 = vsel %vm197, %v190, %v192
    %v201 = vsel %vm197, %v196, %v190
    %v202 = vsel %vm138, %v200, 0.0
    %v203 = vsel %vm139, %v199, 0.0
    %v204 = vsel %vm140, %v198, 0.0
    %v205 = vsel %vm141, %v201, 0.0
    %206 = vst [vmem:[#allocation1] ss:$2 sm:$0xff] %v25
    %s207 = scalar_lea.vmem [#allocation1], 16
    %208 = vst [vmem:[%s207] ss:$2 sm:$0xff] %v26
    %v209 = vld.sshfl [vmem:[#allocation1] sm:$0xff pattern:$0x75316420]
    %v210 = vld.sshfl [vmem:[#allocation1 + $0x8] sm:$0xff pattern:$0x75316420]
    %v211 = vld.sshfl [vmem:[#allocation1 + $0x10] sm:$0xff pattern:$0x75316420]
    %v212 = vld.sshfl [vmem:[#allocation1 + $0x18] sm:$0xff pattern:$0x75316420]
    %217 = vrot.lane.b32.xlu0 %v209, 113
    %v218 = vpop.permute.xlu0 %217
    %219 = vrot.lane.b32.xlu0 %v210, 113
    %v220 = vpop.permute.xlu0 %219
    %221 = vrot.lane.b32.xlu0 %v211, 113
    %v222 = vpop.permute.xlu0 %221
    %223 = vrot.lane.b32.xlu0 %v212, 113
    %v224 = vpop.permute.xlu0 %223
    %vm225 = vcmp.lt.s32.totalorder %v28, 113
    %v226 = vsel %vm225, %v222, %v224
    %v227 = vsel %vm225, %v220, %v222
    %v228 = vsel %vm225, %v218, %v220
    %v229 = vsel %vm225, %v224, %v218
    %vm230 = vcmp.le.s32.totalorder %v40, 14
    %vm231 = vcmp.le.s32.totalorder %v41, 14
    %vm232 = vcmp.le.s32.totalorder %v42, 14
    %vm233 = vcmp.le.s32.totalorder %v43, 14
    %vm234 = vmand %vm230, %vm74
    %vm235 = vmand %vm231, %vm75
    %vm236 = vmand %vm232, %vm76
    %vm237 = vmand %vm233, %vm77
    %v238 = vsel %vm234, %v228, 0.0
    %v239 = vsel %vm235, %v227, 0.0
    %v240 = vsel %vm236, %v226, 0.0
    %v241 = vsel %vm237, %v229, 0.0
    %242 = vst [vmem:[#allocation1] ss:$2 sm:$0xff] %v25
    %s243 = scalar_lea.vmem [#allocation1], 16
    %244 = vst [vmem:[%s243] ss:$2 sm:$0xff] %v26
    %v245 = vld.sshfl [vmem:[#allocation1] sm:$0xff pattern:$0x75316420]
    %v246 = vld.sshfl [vmem:[#allocation1 + $0x8] sm:$0xff pattern:$0x75316420]
    %v247 = vld.sshfl [vmem:[#allocation1 + $0x10] sm:$0xff pattern:$0x75316420]
    %v248 = vld.sshfl [vmem:[#allocation1 + $0x18] sm:$0xff pattern:$0x75316420]
    %253 = vrot.lane.b32.xlu0 %v245, 112
    %v254 = vpop.permute.xlu0 %253
    %255 = vrot.lane.b32.xlu0 %v246, 112
    %v256 = vpop.permute.xlu0 %255
    %257 = vrot.lane.b32.xlu0 %v247, 112
    %v258 = vpop.permute.xlu0 %257
    %259 = vrot.lane.b32.xlu0 %v248, 112
    %v260 = vpop.permute.xlu0 %259
    %vm261 = vcmp.lt.s32.totalorder %v28, 112
    %v262 = vsel %vm261, %v258, %v260
    %v263 = vsel %vm261, %v256, %v258
    %v264 = vsel %vm261, %v254, %v256
    %v265 = vsel %vm261, %v260, %v254
    %v266 = vsel %vm230, %v264, 0.0
    %v267 = vsel %vm231, %v263, 0.0
    %v268 = vsel %vm232, %v262, 0.0
    %v269 = vsel %vm233, %v265, 0.0
    %270 = vst [vmem:[#allocation1] ss:$2 sm:$0xff] %v25
    %s271 = scalar_lea.vmem [#allocation1], 16
    %272 = vst [vmem:[%s271] ss:$2 sm:$0xff] %v26
    %v273 = vld.sshfl [vmem:[#allocation1] sm:$0xff pattern:$0x75316420]
    %v274 = vld.sshfl [vmem:[#allocation1 + $0x8] sm:$0xff pattern:$0x75316420]
    %v275 = vld.sshfl [vmem:[#allocation1 + $0x10] sm:$0xff pattern:$0x75316420]
    %v276 = vld.sshfl [vmem:[#allocation1 + $0x18] sm:$0xff pattern:$0x75316420]
    %281 = vrot.lane.b32.xlu0 %v273, 111
    %v282 = vpop.permute.xlu0 %281
    %283 = vrot.lane.b32.xlu0 %v274, 111
    %v284 = vpop.permute.xlu0 %283
    %285 = vrot.lane.b32.xlu0 %v275, 111
    %v286 = vpop.permute.xlu0 %285
    %287 = vrot.lane.b32.xlu0 %v276, 111
    %v288 = vpop.permute.xlu0 %287
    %vm289 = vcmp.lt.s32.totalorder %v28, 111
    %v290 = vsel %vm289, %v286, %v288
    %v291 = vsel %vm289, %v284, %v286
    %v292 = vsel %vm289, %v282, %v284
    %v293 = vsel %vm289, %v288, %v282
    %vm294 = vmand %vm230, %vm138
    %vm295 = vmand %vm231, %vm139
    %vm296 = vmand %vm232, %vm140
    %vm297 = vmand %vm233, %vm141
    %v298 = vsel %vm294, %v292, 0.0
    %v299 = vsel %vm295, %v291, 0.0
    %v300 = vsel %vm296, %v290, 0.0
    %v301 = vsel %vm297, %v293, 0.0
    %v306 = vrot.slane %v110, 5
    %v307 = vrot.slane %v111, 5
    %v308 = vrot.slane %v112, 5
    %v309 = vrot.slane %v113, 5
    %v318 = vrot.slane %v146, 2
    %v319 = vrot.slane %v147, 2
    %v320 = vrot.slane %v148, 2
    %v321 = vrot.slane %v149, 2
    %v330 = vrot.slane %v174, 7
    %v331 = vrot.slane %v175, 7
    %v332 = vrot.slane %v176, 7
    %v333 = vrot.slane %v177, 7
    %s338 = scalar_lea.vmem [#allocation1], 1
    %339 = vst [vmem:[%s338] ss:$2 sm:$0xff] %v25
    %s340 = scalar_lea.vmem [#allocation1], 17
    %341 = vst [vmem:[%s340] ss:$2 sm:$0xff] %v26
    %v342 = vld.sshfl [vmem:[#allocation1] sm:$0xff pattern:$0x75316420]
    %v343 = vld.sshfl [vmem:[#allocation1 + $0x8] sm:$0xff pattern:$0x75316420]
    %v344 = vld.sshfl [vmem:[#allocation1 + $0x10] sm:$0xff pattern:$0x75316420]
    %v345 = vld.sshfl [vmem:[#allocation1 + $0x18] sm:$0xff pattern:$0x75316420]
    %v354 = vrot.slane %v202, 1
    %v355 = vrot.slane %v203, 1
    %v356 = vrot.slane %v204, 1
    %v357 = vrot.slane %v205, 1
    %v366 = vrot.slane %v238, 6
    %v367 = vrot.slane %v239, 6
    %v368 = vrot.slane %v240, 6
    %v369 = vrot.slane %v241, 6
    %v378 = vrot.slane %v266, 3
    %v379 = vrot.slane %v267, 3
    %v380 = vrot.slane %v268, 3
    %v381 = vrot.slane %v269, 3
    %vm386 = vcmask 1042432
    %v387 = vsel %vm386, %v82, %v306
    %v388 = vsel %vm386, %v83, %v307
    %v389 = vsel %vm386, %v84, %v308
    %v390 = vsel %vm386, %v85, %v309
    %vm391 = vcmask 1045504
    %v392 = vsel %vm391, %v387, %v318
    %v393 = vsel %vm391, %v388, %v319
    %v394 = vsel %vm391, %v389, %v320
    %v395 = vsel %vm391, %v390, %v321
    %vm396 = vcmask 1040384
    %v397 = vsel %vm396, %v318, %v330
    %v398 = vsel %vm396, %v319, %v331
    %v399 = vsel %vm396, %v320, %v332
    %v400 = vsel %vm396, %v321, %v333
    %vm401 = vcmask 1043456
    %v402 = vsel %vm401, %v397, %v342
    %v403 = vsel %vm401, %v398, %v343
    %v404 = vsel %vm401, %v399, %v344
    %v405 = vsel %vm401, %v400, %v345
    %vm406 = vcmask 1046528
    %v407 = vsel %vm406, %v402, %v354
    %v408 = vsel %vm406, %v403, %v355
    %v409 = vsel %vm406, %v404, %v356
    %v410 = vsel %vm406, %v405, %v357
    %vm411 = vcmask 1041408
    %v412 = vsel %vm411, %v354, %v366
    %v413 = vsel %vm411, %v355, %v367
    %v414 = vsel %vm411, %v356, %v368
    %v415 = vsel %vm411, %v357, %v369
    %vm416 = vcmask 1044480
    %v417 = vsel %vm416, %v412, %v378
    %v418 = vsel %vm416, %v413, %v379
    %v419 = vsel %vm416, %v414, %v380
    %v420 = vsel %vm416, %v415, %v381
    %v421 = vpack.c.bf16 %v407, %v392
    %v422 = vpack.c.bf16 %v408, %v393
    %v423 = vpack.c.bf16 %v409, %v394
    %v424 = vpack.c.bf16 %v410, %v395
    %v425 = vpack.c.bf16 %v298, %v417
    %v426 = vpack.c.bf16 %v299, %v418
    %v427 = vpack.c.bf16 %v300, %v419
    %v428 = vpack.c.bf16 %v301, %v420
    %v429 = vld [vmem:[%s1] sm:$0xf]
    %v430 = vld [vmem:[%s1 + $0x4] sm:$0xf]
    %v431 = vld [vmem:[%s1 + $0x8] sm:$0xf]
    %v432 = vld [vmem:[%s1 + $0xc] sm:$0xf]
    %v433 = vld [vmem:[%s2] sm:$0xff]
    %v434 = vld [vmem:[%s2 + $0x8] sm:$0xff]
    %v435 = vld [vmem:[%s2 + $0x10] sm:$0xff]
    %v436 = vld [vmem:[%s2 + $0x18] sm:$0xff]
    %438 = vset.pattern.permute.xlu0 0
    %439 = vperm.xlu0 %438, %v433
    %v440 = vpop.permute.xlu0 %439
    %443 = vset.pattern.permute.xlu0 0
    %444 = vperm.xlu0 %443, %v434
    %v445 = vpop.permute.xlu0 %444
    %448 = vset.pattern.permute.xlu0 0
    %449 = vperm.xlu0 %448, %v435
    %v450 = vpop.permute.xlu0 %449
    %453 = vset.pattern.permute.xlu0 0
    %454 = vperm.xlu0 %453, %v436
    %v455 = vpop.permute.xlu0 %454
    %v461 = vunpack.c.l.b16 %v429
    %v462 = vunpack.c.l.b16 %v430
    %v463 = vunpack.c.l.b16 %v431
    %v464 = vunpack.c.l.b16 %v432
    %v465 = vpack.c.b16 %v462, %v461
    %v466 = vpack.c.b16 %v464, %v463
    %vm467 = vcmask 220160
    %v469 = vsel %vm467, %v465, 0
    %v472 = vsel %vm467, %v466, 0
    %v474 = vsel %vm416, 4294967295, 65535
    %v475 = vsel %vm391, %v474, 0
    %v477 = vand.u32 %v425, %v475
    %v480 = vand.u32 %v426, %v475
    %v483 = vand.u32 %v427, %v475
    %v486 = vand.u32 %v428, %v475
    %488 = vmatpush.bf16.msra.mxu0 0
    %489 = vmatpush.bf16.msra.mxu0 0
    %490 = vmatpush.bf16.msra.mxu0 0
    %491 = vmatpush.bf16.msra.mxu0 0
    %492 = vmatpush.bf16.msra.mxu0 0
    %493 = vmatpush.bf16.msra.mxu0 0
    %494 = vmatpush.bf16.msra.mxu0 %v477
    %495 = vmatpush.bf16.msra.mxu0 %v421
    %496 = vmatmul.bf16.gmra.mxu0 %v469
    %v497 = vpop.f32.mrf.mxu0
    %v498 = vadd.f32 %v440, %v497
    %v499 = vpop.f32.mrf.mxu0
    %v500 = vadd.f32 %v445, %v499
    %501 = vmatmul.bf16.gmra.mxu0 %v472
    %v502 = vpop.f32.mrf.mxu0
    %v503 = vadd.f32 %v450, %v502
    %v504 = vpop.f32.mrf.mxu0
    %v505 = vadd.f32 %v455, %v504
    %506 = vdwg.mxu0
    %507 = vmatpush.bf16.msra.mxu0 0
    %508 = vmatpush.bf16.msra.mxu0 0
    %509 = vmatpush.bf16.msra.mxu0 0
    %510 = vmatpush.bf16.msra.mxu0 0
    %511 = vmatpush.bf16.msra.mxu0 0
    %512 = vmatpush.bf16.msra.mxu0 0
    %513 = vmatpush.bf16.msra.mxu0 %v480
    %514 = vmatpush.bf16.msra.mxu0 %v422
    %515 = vmatmul.bf16.gmra.mxu0 %v469
    %v516 = vpop.f32.mrf.mxu0
    %v517 = vadd.f32 %v440, %v516
    %v518 = vpop.f32.mrf.mxu0
    %v519 = vadd.f32 %v445, %v518
    %520 = vmatmul.bf16.gmra.mxu0 %v472
    %v521 = vpop.f32.mrf.mxu0
    %v522 = vadd.f32 %v450, %v521
    %v523 = vpop.f32.mrf.mxu0
    %v524 = vadd.f32 %v455, %v523
    %525 = vdwg.mxu0
    %526 = vmatpush.bf16.msra.mxu0 0
    %527 = vmatpush.bf16.msra.mxu0 0
    %528 = vmatpush.bf16.msra.mxu0 0
    %529 = vmatpush.bf16.msra.mxu0 0
    %530 = vmatpush.bf16.msra.mxu0 0
    %531 = vmatpush.bf16.msra.mxu0 0
    %532 = vmatpush.bf16.msra.mxu0 %v483
    %533 = vmatpush.bf16.msra.mxu0 %v423
    %534 = vmatmul.bf16.gmra.mxu0 %v469
    %v535 = vpop.f32.mrf.mxu0
    %v536 = vadd.f32 %v440, %v535
    %v537 = vpop.f32.mrf.mxu0
    %v538 = vadd.f32 %v445, %v537
    %539 = vmatmul.bf16.gmra.mxu0 %v472
    %v540 = vpop.f32.mrf.mxu0
    %v541 = vadd.f32 %v450, %v540
    %v542 = vpop.f32.mrf.mxu0
    %v543 = vadd.f32 %v455, %v542
    %544 = vdwg.mxu0
    %545 = vmatpush.bf16.msra.mxu0 0
    %546 = vmatpush.bf16.msra.mxu0 0
    %547 = vmatpush.bf16.msra.mxu0 0
    %548 = vmatpush.bf16.msra.mxu0 0
    %549 = vmatpush.bf16.msra.mxu0 0
    %550 = vmatpush.bf16.msra.mxu0 0
    %551 = vmatpush.bf16.msra.mxu0 %v486
    %552 = vmatpush.bf16.msra.mxu0 %v424
    %553 = vmatmul.bf16.gmra.mxu0 %v469
    %v554 = vpop.f32.mrf.mxu0
    %v555 = vadd.f32 %v440, %v554
    %v556 = vpop.f32.mrf.mxu0
    %v557 = vadd.f32 %v445, %v556
    %558 = vmatmul.bf16.gmra.mxu0 %v472
    %v559 = vpop.f32.mrf.mxu0
    %v560 = vadd.f32 %v450, %v559
    %v561 = vpop.f32.mrf.mxu0
    %v562 = vadd.f32 %v455, %v561
    %563 = vdwg.mxu0
    %v564 = vmax.f32 %v498, 0.0
    %v565 = vmax.f32 %v517, 0.0
    %v566 = vmax.f32 %v536, 0.0
    %v567 = vmax.f32 %v555, 0.0
    %v568 = vmax.f32 %v500, 0.0
    %v569 = vmax.f32 %v519, 0.0
    %v570 = vmax.f32 %v538, 0.0
    %v571 = vmax.f32 %v557, 0.0
    %v572 = vmax.f32 %v503, 0.0
    %v573 = vmax.f32 %v522, 0.0
    %v574 = vmax.f32 %v541, 0.0
    %v575 = vmax.f32 %v560, 0.0
    %v576 = vmax.f32 %v505, 0.0
    %v577 = vmax.f32 %v524, 0.0
    %v578 = vmax.f32 %v543, 0.0
    %v579 = vmax.f32 %v562, 0.0
    %v580 = vld [vmem:[%s3] sm:$0x7]
    %v581 = vpack.c.bf16 %v568, %v564
    %v582 = vpack.c.bf16 %v569, %v565
    %v583 = vpack.c.bf16 %v570, %v566
    %v584 = vpack.c.bf16 %v571, %v567
    %v585 = vpack.c.bf16 %v576, %v572
    %v586 = vpack.c.bf16 %v577, %v573
    %v587 = vpack.c.bf16 %v578, %v574
    %v588 = vpack.c.bf16 %v579, %v575
    %v589 = vld [vmem:[%s4] sm:$0x3f]
    %591 = vset.pattern.permute.xlu0 0
    %592 = vperm.xlu0 %591, %v589
    %v593 = vpop.permute.xlu0 %592
    %vm595 = vcmask 261120
    %v597 = vsel %vm595, %v580, 0
    %599 = vmatpush.bf16.msra.mxu0 0
    %600 = vmatpush.bf16.msra.mxu0 0
    %601 = vmatpush.bf16.msra.mxu0 0
    %602 = vmatpush.bf16.msra.mxu0 0
    %603 = vmatpush.bf16.msra.mxu0 0
    %604 = vmatpush.bf16.msra.mxu0 0
    %605 = vmatpush.bf16.msra.mxu0 %v585
    %606 = vmatpush.bf16.msra.mxu0 %v581
    %607 = vmatmul.bf16.gmra.mxu0 %v597
    %v608 = vpop.f32.mrf.mxu0
    %v609 = vadd.f32 %v593, %v608
    %v610 = vpop.f32.mrf.mxu0
    %611 = vdwg.mxu0
    %612 = vmatpush.bf16.msra.mxu0 0
    %613 = vmatpush.bf16.msra.mxu0 0
    %614 = vmatpush.bf16.msra.mxu0 0
    %615 = vmatpush.bf16.msra.mxu0 0
    %616 = vmatpush.bf16.msra.mxu0 0
    %617 = vmatpush.bf16.msra.mxu0 0
    %618 = vmatpush.bf16.msra.mxu0 %v586
    %619 = vmatpush.bf16.msra.mxu0 %v582
    %620 = vmatmul.bf16.gmra.mxu0 %v597
    %v621 = vpop.f32.mrf.mxu0
    %v622 = vadd.f32 %v593, %v621
    %v623 = vpop.f32.mrf.mxu0
    %624 = vdwg.mxu0
    %625 = vmatpush.bf16.msra.mxu0 0
    %626 = vmatpush.bf16.msra.mxu0 0
    %627 = vmatpush.bf16.msra.mxu0 0
    %628 = vmatpush.bf16.msra.mxu0 0
    %629 = vmatpush.bf16.msra.mxu0 0
    %630 = vmatpush.bf16.msra.mxu0 0
    %631 = vmatpush.bf16.msra.mxu0 %v587
    %632 = vmatpush.bf16.msra.mxu0 %v583
    %633 = vmatmul.bf16.gmra.mxu0 %v597
    %v634 = vpop.f32.mrf.mxu0
    %v635 = vadd.f32 %v593, %v634
    %v636 = vpop.f32.mrf.mxu0
    %637 = vdwg.mxu0
    %638 = vmatpush.bf16.msra.mxu0 0
    %639 = vmatpush.bf16.msra.mxu0 0
    %640 = vmatpush.bf16.msra.mxu0 0
    %641 = vmatpush.bf16.msra.mxu0 0
    %642 = vmatpush.bf16.msra.mxu0 0
    %643 = vmatpush.bf16.msra.mxu0 0
    %644 = vmatpush.bf16.msra.mxu0 %v588
    %645 = vmatpush.bf16.msra.mxu0 %v584
    %646 = vmatmul.bf16.gmra.mxu0 %v597
    %v647 = vpop.f32.mrf.mxu0
    %v648 = vadd.f32 %v593, %v647
    %v649 = vpop.f32.mrf.mxu0
    %650 = vdwg.mxu0
    %v651 = vlaneseq
    %v652 = vshrl.u32 %v651, 7
    %v653 = vadd.s32 %v652, 8
    %v654 = vxor.u32 %v609, 2147483648
    %v655 = vxor.u32 %v622, 2147483648
    %v656 = vmul.f32 %v654, 1.442695
    %v657 = vpow.pop %v656
    %v658 = vmul.f32 %v655, 1.442695
    %v659 = vpow.pop %v658
    %v660 = vadd.f32 %v657, 1.0
    %v661 = vadd.f32 %v659, 1.0
    %v662 = vrcp.pop %v660
    %v663 = vmul.f32 %v660, %v662
    %v664 = vsub.f32 1.0, %v663
    %v665 = vmul.f32 %v662, %v664
    %v666 = vadd.f32 %v662, %v665
    %vm667 = vweird.f32 %v660
    %vm668 = vweird.f32 %v662
    %vm669 = vmor %vm667, %vm668
    %v670 = vsel %vm669, %v662, %v666
    %v671 = vand.u32 2147483647, %v660
    %vm672 = vcmp.eq.f32.partialorder %v671, 8.507059e+37
    %v673 = vand.u32 %v660, 2147483648
    %v674 = vor.u32 1.1754944e-38, %v673
    %v675 = vsel %vm672, %v674, %v670
    %v676 = vmul.f32 1.0, %v675
    %v677 = vrcp.pop %v661
    %v678 = vmul.f32 %v661, %v677
    %v679 = vsub.f32 1.0, %v678
    %v680 = vmul.f32 %v677, %v679
    %v681 = vadd.f32 %v677, %v680
    %vm682 = vweird.f32 %v661
    %vm683 = vweird.f32 %v677
    %vm684 = vmor %vm682, %vm683
    %v685 = vsel %vm684, %v677, %v681
    %v686 = vand.u32 2147483647, %v661
    %vm687 = vcmp.eq.f32.partialorder %v686, 8.507059e+37
    %v688 = vand.u32 %v661, 2147483648
    %v689 = vor.u32 1.1754944e-38, %v688
    %v690 = vsel %vm687, %v689, %v685
    %v691 = vmul.f32 1.0, %v690
    %v692 = vsel %vm396, %v676, -inf
    %v693 = vsel %vm396, %v691, -inf
    %v694 = vmax.f32 %v692, %v693
    %695 = vmax.xlane.f32.xlu0 %v694
    %v696 = vpop.xlane.xlu0 %695
    %vm697 = vcmp.eq.f32.partialorder %v676, %v696
    %vm698 = vcmp.eq.f32.partialorder %v691, %v696
    %v699 = vsel %vm697, %v28, 256
    %v700 = vsel %vm698, %v29, 256
    %v701 = vsel %vm396, %v699, 2147483647
    %v702 = vsel %vm396, %v700, 2147483647
    %vm703 = vcmp.lt.s32.totalorder %v701, %v702
    %v704 = vsel %vm703, %v701, %v702
    %v705 = vand.u32 %v704, 65535
    %v706 = vshra.s32 %v704, 16
    %v707 = vcvt.s32.f32 %v705
    %v708 = vcvt.s32.f32 %v706
    %709 = vmin.xlane.f32.xlu0 %v708
    %v710 = vpop.xlane.xlu0 %709
    %vm711 = vcmp.eq.f32.partialorder %v708, %v710
    %v712 = vsel %vm711, %v707, inf
    %713 = vmin.xlane.f32.xlu0 %v712
    %v714 = vpop.xlane.xlu0 %713
    %v715 = vcvt.f32.s32 %v714
    %v716 = vcvt.f32.s32 %v710
    %v717 = vshll.u32 %v716, 16
    %v718 = vadd.s32 %v717, %v715
    %v719 = vperm.slane %v718, 0
    %vm720 = vcmp.eq.s32.totalorder %v28, %v719
    %vm721 = vcmp.eq.s32.totalorder %v29, %v719
    %v722 = vsel %vm720, %v609, 0.0
    %v723 = vsel %vm721, %v622, 0.0
    %vm724 = vcmask 1045505
    %v725 = vsel %vm724, %v722, 0.0
    %v726 = vsel %vm724, %v723, 0.0
    %v727 = vadd.f32 %v725, %v726
    %728 = vadd.xlane.f32.xlu0 %v727
    %v729 = vpop.xlane.xlu0 %728
    %vm730 = vcmp.eq.s32.totalorder %v28, %v718
    %vm731 = vcmp.eq.s32.totalorder %v29, %v718
    %v732 = vsel %vm730, -1.0, %v676
    %v733 = vsel %vm731, -1.0, %v691
    %vm734 = vcmp.eq.s32.totalorder %v652, 0
    %vm735 = vcmp.eq.s32.totalorder %v653, 0
    %v736 = vperm.slane %v729, 1
    %v737 = vsel %vm734, %v736, 0.0
    %v738 = vsel %vm735, %v736, 0.0
    %v739 = vperm.slane %v729, 2
    %v740 = vsel %vm734, %v739, 0.0
    %v741 = vsel %vm735, %v739, 0.0
    %v742 = vperm.slane %v729, 3
    %v743 = vsel %vm734, %v742, 0.0
    %v744 = vsel %vm735, %v742, 0.0
    %v745 = vperm.slane %v729, 4
    %v746 = vsel %vm734, %v745, 0.0
    %v747 = vsel %vm735, %v745, 0.0
    %v748 = vperm.slane %v729, 5
    %v749 = vsel %vm734, %v748, 0.0
    %v750 = vsel %vm735, %v748, 0.0
    %v751 = vand.u32 %v718, 15
    %v752 = vcvt.s32.f32 %v751
    %v753 = vadd.f32 %v752, 0.5
    %v754 = vshra.s32 %v718, 4
    %v755 = vcvt.s32.f32 %v754
    %v756 = vadd.f32 %v755, 0.5
    %v757 = vperm.slane %v753, 0
    %v758 = vsel %vm734, %v757, 0.0
    %v759 = vsel %vm735, %v757, 0.0
    %v760 = vperm.slane %v756, 0
    %v761 = vsel %vm734, %v760, 0.0
    %v762 = vsel %vm735, %v760, 0.0
    %vm763 = vcmp.eq.s32.totalorder %v28, 0
    %vm764 = vmand %vm734, %vm763
    %v765 = vperm.slane %v696, 0
    %v766 = vsel %vm764, %v765, 0.0
    %v767 = vsel %vm396, %v732, -inf
    %v768 = vsel %vm396, %v733, -inf
    %v769 = vmax.f32 %v767, %v768
    %770 = vmax.xlane.f32.xlu0 %v769
    %v771 = vpop.xlane.xlu0 %770
    %vm772 = vcmp.eq.f32.partialorder %v732, %v771
    %vm773 = vcmp.eq.f32.partialorder %v733, %v771
    %v774 = vsel %vm772, %v28, 256
    %v775 = vsel %vm773, %v29, 256
    %v776 = vsel %vm396, %v774, 2147483647
    %v777 = vsel %vm396, %v775, 2147483647
    %vm778 = vcmp.lt.s32.totalorder %v776, %v777
    %v779 = vsel %vm778, %v776, %v777
    %v780 = vand.u32 %v779, 65535
    %v781 = vshra.s32 %v779, 16
    %v782 = vcvt.s32.f32 %v780
    %v783 = vcvt.s32.f32 %v781
    %784 = vmin.xlane.f32.xlu0 %v783
    %v785 = vpop.xlane.xlu0 %784
    %vm786 = vcmp.eq.f32.partialorder %v783, %v785
    %v787 = vsel %vm786, %v782, inf
    %788 = vmin.xlane.f32.xlu0 %v787
    %v789 = vpop.xlane.xlu0 %788
    %v790 = vcvt.f32.s32 %v789
    %v791 = vcvt.f32.s32 %v785
    %v792 = vshll.u32 %v791, 16
    %v793 = vadd.s32 %v792, %v790
    %v794 = vperm.slane %v793, 0
    %vm795 = vcmp.eq.s32.totalorder %v28, %v794
    %vm796 = vcmp.eq.s32.totalorder %v29, %v794
    %v797 = vsel %vm795, %v609, 0.0
    %v798 = vsel %vm796, %v622, 0.0
    %v799 = vsel %vm724, %v797, 0.0
    %v800 = vsel %vm724, %v798, 0.0
    %v801 = vadd.f32 %v799, %v800
    %802 = vadd.xlane.f32.xlu0 %v801
    %v803 = vpop.xlane.xlu0 %802
    %vm804 = vcmp.eq.s32.totalorder %v28, %v793
    %vm805 = vcmp.eq.s32.totalorder %v29, %v793
    %v806 = vsel %vm804, -1.0, %v732
    %v807 = vsel %vm805, -1.0, %v733
    %vm808 = vcmp.eq.s32.totalorder %v652, 1
    %vm809 = vcmp.eq.s32.totalorder %v653, 1
    %v810 = vperm.slane %v803, 1
    %v811 = vsel %vm808, %v810, %v737
    %v812 = vsel %vm809, %v810, %v738
    %v813 = vperm.slane %v803, 2
    %v814 = vsel %vm808, %v813, %v740
    %v815 = vsel %vm809, %v813, %v741
    %v816 = vperm.slane %v803, 3
    %v817 = vsel %vm808, %v816, %v743
    %v818 = vsel %vm809, %v816, %v744
    %v819 = vperm.slane %v803, 4
    %v820 = vsel %vm808, %v819, %v746
    %v821 = vsel %vm809, %v819, %v747
    %v822 = vperm.slane %v803, 5
    %v823 = vsel %vm808, %v822, %v749
    %v824 = vsel %vm809, %v822, %v750
    %v825 = vand.u32 %v793, 15
    %v826 = vcvt.s32.f32 %v825
    %v827 = vadd.f32 %v826, 0.5
    %v828 = vshra.s32 %v793, 4
    %v829 = vcvt.s32.f32 %v828
    %v830 = vadd.f32 %v829, 0.5
    %v831 = vperm.slane %v827, 0
    %v832 = vsel %vm808, %v831, %v758
    %v833 = vsel %vm809, %v831, %v759
    %v834 = vperm.slane %v830, 0
    %v835 = vsel %vm808, %v834, %v761
    %v836 = vsel %vm809, %v834, %v762
    %vm837 = vcmp.eq.s32.totalorder %v28, 1
    %vm838 = vmand %vm734, %vm837
    %v839 = vperm.slane %v771, 0
    %v840 = vsel %vm838, %v839, %v766
    %v841 = vsel %vm396, %v806, -inf
    %v842 = vsel %vm396, %v807, -inf
    %v843 = vmax.f32 %v841, %v842
    %844 = vmax.xlane.f32.xlu0 %v843
    %v845 = vpop.xlane.xlu0 %844
    %vm846 = vcmp.eq.f32.partialorder %v806, %v845
    %vm847 = vcmp.eq.f32.partialorder %v807, %v845
    %v848 = vsel %vm846, %v28, 256
    %v849 = vsel %vm847, %v29, 256
    %v850 = vsel %vm396, %v848, 2147483647
    %v851 = vsel %vm396, %v849, 2147483647
    %vm852 = vcmp.lt.s32.totalorder %v850, %v851
    %v853 = vsel %vm852, %v850, %v851
    %v854 = vand.u32 %v853, 65535
    %v855 = vshra.s32 %v853, 16
    %v856 = vcvt.s32.f32 %v854
    %v857 = vcvt.s32.f32 %v855
    %858 = vmin.xlane.f32.xlu0 %v857
    %v859 = vpop.xlane.xlu0 %858
    %vm860 = vcmp.eq.f32.partialorder %v857, %v859
    %v861 = vsel %vm860, %v856, inf
    %862 = vmin.xlane.f32.xlu0 %v861
    %v863 = vpop.xlane.xlu0 %862
    %v864 = vcvt.f32.s32 %v863
    %v865 = vcvt.f32.s32 %v859
    %v866 = vshll.u32 %v865, 16
    %v867 = vadd.s32 %v866, %v864
    %v868 = vperm.slane %v867, 0
    %vm869 = vcmp.eq.s32.totalorder %v28, %v868
    %vm870 = vcmp.eq.s32.totalorder %v29, %v868
    %v871 = vsel %vm869, %v609, 0.0
    %v872 = vsel %vm870, %v622, 0.0
    %v873 = vsel %vm724, %v871, 0.0
    %v874 = vsel %vm724, %v872, 0.0
    %v875 = vadd.f32 %v873, %v874
    %876 = vadd.xlane.f32.xlu0 %v875
    %v877 = vpop.xlane.xlu0 %876
    %vm878 = vcmp.eq.s32.totalorder %v28, %v867
    %vm879 = vcmp.eq.s32.totalorder %v29, %v867
    %v880 = vsel %vm878, -1.0, %v806
    %v881 = vsel %vm879, -1.0, %v807
    %vm882 = vcmp.eq.s32.totalorder %v652, 2
    %vm883 = vcmp.eq.s32.totalorder %v653, 2
    %v884 = vperm.slane %v877, 1
    %v885 = vsel %vm882, %v884, %v811
    %v886 = vsel %vm883, %v884, %v812
    %v887 = vperm.slane %v877, 2
    %v888 = vsel %vm882, %v887, %v814
    %v889 = vsel %vm883, %v887, %v815
    %v890 = vperm.slane %v877, 3
    %v891 = vsel %vm882, %v890, %v817
    %v892 = vsel %vm883, %v890, %v818
    %v893 = vperm.slane %v877, 4
    %v894 = vsel %vm882, %v893, %v820
    %v895 = vsel %vm883, %v893, %v821
    %v896 = vperm.slane %v877, 5
    %v897 = vsel %vm882, %v896, %v823
    %v898 = vsel %vm883, %v896, %v824
    %v899 = vand.u32 %v867, 15
    %v900 = vcvt.s32.f32 %v899
    %v901 = vadd.f32 %v900, 0.5
    %v902 = vshra.s32 %v867, 4
    %v903 = vcvt.s32.f32 %v902
    %v904 = vadd.f32 %v903, 0.5
    %v905 = vperm.slane %v901, 0
    %v906 = vsel %vm882, %v905, %v832
    %v907 = vsel %vm883, %v905, %v833
    %v908 = vperm.slane %v904, 0
    %v909 = vsel %vm882, %v908, %v835
    %v910 = vsel %vm883, %v908, %v836
    %vm911 = vcmp.eq.s32.totalorder %v28, 2
    %vm912 = vmand %vm734, %vm911
    %v913 = vperm.slane %v845, 0
    %v914 = vsel %vm912, %v913, %v840
    %v915 = vsel %vm396, %v880, -inf
    %v916 = vsel %vm396, %v881, -inf
    %v917 = vmax.f32 %v915, %v916
    %918 = vmax.xlane.f32.xlu0 %v917
    %v919 = vpop.xlane.xlu0 %918
    %vm920 = vcmp.eq.f32.partialorder %v880, %v919
    %vm921 = vcmp.eq.f32.partialorder %v881, %v919
    %v922 = vsel %vm920, %v28, 256
    %v923 = vsel %vm921, %v29, 256
    %v924 = vsel %vm396, %v922, 2147483647
    %v925 = vsel %vm396, %v923, 2147483647
    %vm926 = vcmp.lt.s32.totalorder %v924, %v925
    %v927 = vsel %vm926, %v924, %v925
    %v928 = vand.u32 %v927, 65535
    %v929 = vshra.s32 %v927, 16
    %v930 = vcvt.s32.f32 %v928
    %v931 = vcvt.s32.f32 %v929
    %932 = vmin.xlane.f32.xlu0 %v931
    %v933 = vpop.xlane.xlu0 %932
    %vm934 = vcmp.eq.f32.partialorder %v931, %v933
    %v935 = vsel %vm934, %v930, inf
    %936 = vmin.xlane.f32.xlu0 %v935
    %v937 = vpop.xlane.xlu0 %936
    %v938 = vcvt.f32.s32 %v937
    %v939 = vcvt.f32.s32 %v933
    %v940 = vshll.u32 %v939, 16
    %v941 = vadd.s32 %v940, %v938
    %v942 = vperm.slane %v941, 0
    %vm943 = vcmp.eq.s32.totalorder %v28, %v942
    %vm944 = vcmp.eq.s32.totalorder %v29, %v942
    %v945 = vsel %vm943, %v609, 0.0
    %v946 = vsel %vm944, %v622, 0.0
    %v947 = vsel %vm724, %v945, 0.0
    %v948 = vsel %vm724, %v946, 0.0
    %v949 = vadd.f32 %v947, %v948
    %950 = vadd.xlane.f32.xlu0 %v949
    %v951 = vpop.xlane.xlu0 %950
    %vm952 = vcmp.eq.s32.totalorder %v28, %v941
    %vm953 = vcmp.eq.s32.totalorder %v29, %v941
    %v954 = vsel %vm952, -1.0, %v880
    %v955 = vsel %vm953, -1.0, %v881
    %vm956 = vcmp.eq.s32.totalorder %v652, 3
    %vm957 = vcmp.eq.s32.totalorder %v653, 3
    %v958 = vperm.slane %v951, 1
    %v959 = vsel %vm956, %v958, %v885
    %v960 = vsel %vm957, %v958, %v886
    %v961 = vperm.slane %v951, 2
    %v962 = vsel %vm956, %v961, %v888
    %v963 = vsel %vm957, %v961, %v889
    %v964 = vperm.slane %v951, 3
    %v965 = vsel %vm956, %v964, %v891
    %v966 = vsel %vm957, %v964, %v892
    %v967 = vperm.slane %v951, 4
    %v968 = vsel %vm956, %v967, %v894
    %v969 = vsel %vm957, %v967, %v895
    %v970 = vperm.slane %v951, 5
    %v971 = vsel %vm956, %v970, %v897
    %v972 = vsel %vm957, %v970, %v898
    %v973 = vand.u32 %v941, 15
    %v974 = vcvt.s32.f32 %v973
    %v975 = vadd.f32 %v974, 0.5
    %v976 = vshra.s32 %v941, 4
    %v977 = vcvt.s32.f32 %v976
    %v978 = vadd.f32 %v977, 0.5
    %v979 = vperm.slane %v975, 0
    %v980 = vsel %vm956, %v979, %v906
    %v981 = vsel %vm957, %v979, %v907
    %v982 = vperm.slane %v978, 0
    %v983 = vsel %vm956, %v982, %v909
    %v984 = vsel %vm957, %v982, %v910
    %vm985 = vcmp.eq.s32.totalorder %v28, 3
    %vm986 = vmand %vm734, %vm985
    %v987 = vperm.slane %v919, 0
    %v988 = vsel %vm986, %v987, %v914
    %v989 = vsel %vm396, %v954, -inf
    %v990 = vsel %vm396, %v955, -inf
    %v991 = vmax.f32 %v989, %v990
    %992 = vmax.xlane.f32.xlu0 %v991
    %v993 = vpop.xlane.xlu0 %992
    %vm994 = vcmp.eq.f32.partialorder %v954, %v993
    %vm995 = vcmp.eq.f32.partialorder %v955, %v993
    %v996 = vsel %vm994, %v28, 256
    %v997 = vsel %vm995, %v29, 256
    %v998 = vsel %vm396, %v996, 2147483647
    %v999 = vsel %vm396, %v997, 2147483647
    %vm1000 = vcmp.lt.s32.totalorder %v998, %v999
    %v1001 = vsel %vm1000, %v998, %v999
    %v1002 = vand.u32 %v1001, 65535
    %v1003 = vshra.s32 %v1001, 16
    %v1004 = vcvt.s32.f32 %v1002
    %v1005 = vcvt.s32.f32 %v1003
    %1006 = vmin.xlane.f32.xlu0 %v1005
    %v1007 = vpop.xlane.xlu0 %1006
    %vm1008 = vcmp.eq.f32.partialorder %v1005, %v1007
    %v1009 = vsel %vm1008, %v1004, inf
    %1010 = vmin.xlane.f32.xlu0 %v1009
    %v1011 = vpop.xlane.xlu0 %1010
    %v1012 = vcvt.f32.s32 %v1011
    %v1013 = vcvt.f32.s32 %v1007
    %v1014 = vshll.u32 %v1013, 16
    %v1015 = vadd.s32 %v1014, %v1012
    %v1016 = vperm.slane %v1015, 0
    %vm1017 = vcmp.eq.s32.totalorder %v28, %v1016
    %vm1018 = vcmp.eq.s32.totalorder %v29, %v1016
    %v1019 = vsel %vm1017, %v609, 0.0
    %v1020 = vsel %vm1018, %v622, 0.0
    %v1021 = vsel %vm724, %v1019, 0.0
    %v1022 = vsel %vm724, %v1020, 0.0
    %v1023 = vadd.f32 %v1021, %v1022
    %1024 = vadd.xlane.f32.xlu0 %v1023
    %v1025 = vpop.xlane.xlu0 %1024
    %vm1026 = vcmp.eq.s32.totalorder %v28, %v1015
    %vm1027 = vcmp.eq.s32.totalorder %v29, %v1015
    %v1028 = vsel %vm1026, -1.0, %v954
    %v1029 = vsel %vm1027, -1.0, %v955
    %vm1030 = vcmp.eq.s32.totalorder %v652, 4
    %vm1031 = vcmp.eq.s32.totalorder %v653, 4
    %v1032 = vperm.slane %v1025, 1
    %v1033 = vsel %vm1030, %v1032, %v959
    %v1034 = vsel %vm1031, %v1032, %v960
    %v1035 = vperm.slane %v1025, 2
    %v1036 = vsel %vm1030, %v1035, %v962
    %v1037 = vsel %vm1031, %v1035, %v963
    %v1038 = vperm.slane %v1025, 3
    %v1039 = vsel %vm1030, %v1038, %v965
    %v1040 = vsel %vm1031, %v1038, %v966
    %v1041 = vperm.slane %v1025, 4
    %v1042 = vsel %vm1030, %v1041, %v968
    %v1043 = vsel %vm1031, %v1041, %v969
    %v1044 = vperm.slane %v1025, 5
    %v1045 = vsel %vm1030, %v1044, %v971
    %v1046 = vsel %vm1031, %v1044, %v972
    %v1047 = vand.u32 %v1015, 15
    %v1048 = vcvt.s32.f32 %v1047
    %v1049 = vadd.f32 %v1048, 0.5
    %v1050 = vshra.s32 %v1015, 4
    %v1051 = vcvt.s32.f32 %v1050
    %v1052 = vadd.f32 %v1051, 0.5
    %v1053 = vperm.slane %v1049, 0
    %v1054 = vsel %vm1030, %v1053, %v980
    %v1055 = vsel %vm1031, %v1053, %v981
    %v1056 = vperm.slane %v1052, 0
    %v1057 = vsel %vm1030, %v1056, %v983
    %v1058 = vsel %vm1031, %v1056, %v984
    %vm1059 = vcmp.eq.s32.totalorder %v28, 4
    %vm1060 = vmand %vm734, %vm1059
    %v1061 = vperm.slane %v993, 0
    %v1062 = vsel %vm1060, %v1061, %v988
    %v1063 = vsel %vm396, %v1028, -inf
    %v1064 = vsel %vm396, %v1029, -inf
    %v1065 = vmax.f32 %v1063, %v1064
    %1066 = vmax.xlane.f32.xlu0 %v1065
    %v1067 = vpop.xlane.xlu0 %1066
    %vm1068 = vcmp.eq.f32.partialorder %v1028, %v1067
    %vm1069 = vcmp.eq.f32.partialorder %v1029, %v1067
    %v1070 = vsel %vm1068, %v28, 256
    %v1071 = vsel %vm1069, %v29, 256
    %v1072 = vsel %vm396, %v1070, 2147483647
    %v1073 = vsel %vm396, %v1071, 2147483647
    %vm1074 = vcmp.lt.s32.totalorder %v1072, %v1073
    %v1075 = vsel %vm1074, %v1072, %v1073
    %v1076 = vand.u32 %v1075, 65535
    %v1077 = vshra.s32 %v1075, 16
    %v1078 = vcvt.s32.f32 %v1076
    %v1079 = vcvt.s32.f32 %v1077
    %1080 = vmin.xlane.f32.xlu0 %v1079
    %v1081 = vpop.xlane.xlu0 %1080
    %vm1082 = vcmp.eq.f32.partialorder %v1079, %v1081
    %v1083 = vsel %vm1082, %v1078, inf
    %1084 = vmin.xlane.f32.xlu0 %v1083
    %v1085 = vpop.xlane.xlu0 %1084
    %v1086 = vcvt.f32.s32 %v1085
    %v1087 = vcvt.f32.s32 %v1081
    %v1088 = vshll.u32 %v1087, 16
    %v1089 = vadd.s32 %v1088, %v1086
    %v1090 = vperm.slane %v1089, 0
    %vm1091 = vcmp.eq.s32.totalorder %v28, %v1090
    %vm1092 = vcmp.eq.s32.totalorder %v29, %v1090
    %v1093 = vsel %vm1091, %v609, 0.0
    %v1094 = vsel %vm1092, %v622, 0.0
    %v1095 = vsel %vm724, %v1093, 0.0
    %v1096 = vsel %vm724, %v1094, 0.0
    %v1097 = vadd.f32 %v1095, %v1096
    %1098 = vadd.xlane.f32.xlu0 %v1097
    %v1099 = vpop.xlane.xlu0 %1098
    %vm1100 = vcmp.eq.s32.totalorder %v28, %v1089
    %vm1101 = vcmp.eq.s32.totalorder %v29, %v1089
    %v1102 = vsel %vm1100, -1.0, %v1028
    %v1103 = vsel %vm1101, -1.0, %v1029
    %vm1104 = vcmp.eq.s32.totalorder %v652, 5
    %vm1105 = vcmp.eq.s32.totalorder %v653, 5
    %v1106 = vperm.slane %v1099, 1
    %v1107 = vsel %vm1104, %v1106, %v1033
    %v1108 = vsel %vm1105, %v1106, %v1034
    %v1109 = vperm.slane %v1099, 2
    %v1110 = vsel %vm1104, %v1109, %v1036
    %v1111 = vsel %vm1105, %v1109, %v1037
    %v1112 = vperm.slane %v1099, 3
    %v1113 = vsel %vm1104, %v1112, %v1039
    %v1114 = vsel %vm1105, %v1112, %v1040
    %v1115 = vperm.slane %v1099, 4
    %v1116 = vsel %vm1104, %v1115, %v1042
    %v1117 = vsel %vm1105, %v1115, %v1043
    %v1118 = vperm.slane %v1099, 5
    %v1119 = vsel %vm1104, %v1118, %v1045
    %v1120 = vsel %vm1105, %v1118, %v1046
    %v1121 = vand.u32 %v1089, 15
    %v1122 = vcvt.s32.f32 %v1121
    %v1123 = vadd.f32 %v1122, 0.5
    %v1124 = vshra.s32 %v1089, 4
    %v1125 = vcvt.s32.f32 %v1124
    %v1126 = vadd.f32 %v1125, 0.5
    %v1127 = vperm.slane %v1123, 0
    %v1128 = vsel %vm1104, %v1127, %v1054
    %v1129 = vsel %vm1105, %v1127, %v1055
    %v1130 = vperm.slane %v1126, 0
    %v1131 = vsel %vm1104, %v1130, %v1057
    %v1132 = vsel %vm1105, %v1130, %v1058
    %vm1133 = vcmp.eq.s32.totalorder %v28, 5
    %vm1134 = vmand %vm734, %vm1133
    %v1135 = vperm.slane %v1067, 0
    %v1136 = vsel %vm1134, %v1135, %v1062
    %v1137 = vsel %vm396, %v1102, -inf
    %v1138 = vsel %vm396, %v1103, -inf
    %v1139 = vmax.f32 %v1137, %v1138
    %1140 = vmax.xlane.f32.xlu0 %v1139
    %v1141 = vpop.xlane.xlu0 %1140
    %vm1142 = vcmp.eq.f32.partialorder %v1102, %v1141
    %vm1143 = vcmp.eq.f32.partialorder %v1103, %v1141
    %v1144 = vsel %vm1142, %v28, 256
    %v1145 = vsel %vm1143, %v29, 256
    %v1146 = vsel %vm396, %v1144, 2147483647
    %v1147 = vsel %vm396, %v1145, 2147483647
    %vm1148 = vcmp.lt.s32.totalorder %v1146, %v1147
    %v1149 = vsel %vm1148, %v1146, %v1147
    %v1150 = vand.u32 %v1149, 65535
    %v1151 = vshra.s32 %v1149, 16
    %v1152 = vcvt.s32.f32 %v1150
    %v1153 = vcvt.s32.f32 %v1151
    %1154 = vmin.xlane.f32.xlu0 %v1153
    %v1155 = vpop.xlane.xlu0 %1154
    %vm1156 = vcmp.eq.f32.partialorder %v1153, %v1155
    %v1157 = vsel %vm1156, %v1152, inf
    %1158 = vmin.xlane.f32.xlu0 %v1157
    %v1159 = vpop.xlane.xlu0 %1158
    %v1160 = vcvt.f32.s32 %v1159
    %v1161 = vcvt.f32.s32 %v1155
    %v1162 = vshll.u32 %v1161, 16
    %v1163 = vadd.s32 %v1162, %v1160
    %v1164 = vperm.slane %v1163, 0
    %vm1165 = vcmp.eq.s32.totalorder %v28, %v1164
    %vm1166 = vcmp.eq.s32.totalorder %v29, %v1164
    %v1167 = vsel %vm1165, %v609, 0.0
    %v1168 = vsel %vm1166, %v622, 0.0
    %v1169 = vsel %vm724, %v1167, 0.0
    %v1170 = vsel %vm724, %v1168, 0.0
    %v1171 = vadd.f32 %v1169, %v1170
    %1172 = vadd.xlane.f32.xlu0 %v1171
    %v1173 = vpop.xlane.xlu0 %1172
    %vm1174 = vcmp.eq.s32.totalorder %v28, %v1163
    %vm1175 = vcmp.eq.s32.totalorder %v29, %v1163
    %v1176 = vsel %vm1174, -1.0, %v1102
    %v1177 = vsel %vm1175, -1.0, %v1103
    %vm1178 = vcmp.eq.s32.totalorder %v652, 6
    %vm1179 = vcmp.eq.s32.totalorder %v653, 6
    %v1180 = vperm.slane %v1173, 1
    %v1181 = vsel %vm1178, %v1180, %v1107
    %v1182 = vsel %vm1179, %v1180, %v1108
    %v1183 = vperm.slane %v1173, 2
    %v1184 = vsel %vm1178, %v1183, %v1110
    %v1185 = vsel %vm1179, %v1183, %v1111
    %v1186 = vperm.slane %v1173, 3
    %v1187 = vsel %vm1178, %v1186, %v1113
    %v1188 = vsel %vm1179, %v1186, %v1114
    %v1189 = vperm.slane %v1173, 4
    %v1190 = vsel %vm1178, %v1189, %v1116
    %v1191 = vsel %vm1179, %v1189, %v1117
    %v1192 = vperm.slane %v1173, 5
    %v1193 = vsel %vm1178, %v1192, %v1119
    %v1194 = vsel %vm1179, %v1192, %v1120
    %v1195 = vand.u32 %v1163, 15
    %v1196 = vcvt.s32.f32 %v1195
    %v1197 = vadd.f32 %v1196, 0.5
    %v1198 = vshra.s32 %v1163, 4
    %v1199 = vcvt.s32.f32 %v1198
    %v1200 = vadd.f32 %v1199, 0.5
    %v1201 = vperm.slane %v1197, 0
    %v1202 = vsel %vm1178, %v1201, %v1128
    %v1203 = vsel %vm1179, %v1201, %v1129
    %v1204 = vperm.slane %v1200, 0
    %v1205 = vsel %vm1178, %v1204, %v1131
    %v1206 = vsel %vm1179, %v1204, %v1132
    %vm1207 = vcmp.eq.s32.totalorder %v28, 6
    %vm1208 = vmand %vm734, %vm1207
    %v1209 = vperm.slane %v1141, 0
    %v1210 = vsel %vm1208, %v1209, %v1136
    %v1211 = vsel %vm396, %v1176, -inf
    %v1212 = vsel %vm396, %v1177, -inf
    %v1213 = vmax.f32 %v1211, %v1212
    %1214 = vmax.xlane.f32.xlu0 %v1213
    %v1215 = vpop.xlane.xlu0 %1214
    %vm1216 = vcmp.eq.f32.partialorder %v1176, %v1215
    %vm1217 = vcmp.eq.f32.partialorder %v1177, %v1215
    %v1218 = vsel %vm1216, %v28, 256
    %v1219 = vsel %vm1217, %v29, 256
    %v1220 = vsel %vm396, %v1218, 2147483647
    %v1221 = vsel %vm396, %v1219, 2147483647
    %vm1222 = vcmp.lt.s32.totalorder %v1220, %v1221
    %v1223 = vsel %vm1222, %v1220, %v1221
    %v1224 = vand.u32 %v1223, 65535
    %v1225 = vshra.s32 %v1223, 16
    %v1226 = vcvt.s32.f32 %v1224
    %v1227 = vcvt.s32.f32 %v1225
    %1228 = vmin.xlane.f32.xlu0 %v1227
    %v1229 = vpop.xlane.xlu0 %1228
    %vm1230 = vcmp.eq.f32.partialorder %v1227, %v1229
    %v1231 = vsel %vm1230, %v1226, inf
    %1232 = vmin.xlane.f32.xlu0 %v1231
    %v1233 = vpop.xlane.xlu0 %1232
    %v1234 = vcvt.f32.s32 %v1233
    %v1235 = vcvt.f32.s32 %v1229
    %v1236 = vshll.u32 %v1235, 16
    %v1237 = vadd.s32 %v1236, %v1234
    %v1238 = vperm.slane %v1237, 0
    %vm1239 = vcmp.eq.s32.totalorder %v28, %v1238
    %vm1240 = vcmp.eq.s32.totalorder %v29, %v1238
    %v1241 = vsel %vm1239, %v609, 0.0
    %v1242 = vsel %vm1240, %v622, 0.0
    %v1243 = vsel %vm724, %v1241, 0.0
    %v1244 = vsel %vm724, %v1242, 0.0
    %v1245 = vadd.f32 %v1243, %v1244
    %1246 = vadd.xlane.f32.xlu0 %v1245
    %v1247 = vpop.xlane.xlu0 %1246
    %vm1248 = vcmp.eq.s32.totalorder %v652, 7
    %vm1249 = vcmp.eq.s32.totalorder %v653, 7
    %v1250 = vperm.slane %v1247, 1
    %v1251 = vsel %vm1248, %v1250, %v1181
    %v1252 = vsel %vm1249, %v1250, %v1182
    %v1253 = vperm.slane %v1247, 2
    %v1254 = vsel %vm1248, %v1253, %v1184
    %v1255 = vsel %vm1249, %v1253, %v1185
    %v1256 = vperm.slane %v1247, 3
    %v1257 = vsel %vm1248, %v1256, %v1187
    %v1258 = vsel %vm1249, %v1256, %v1188
    %v1259 = vperm.slane %v1247, 4
    %v1260 = vsel %vm1248, %v1259, %v1190
    %v1261 = vsel %vm1249, %v1259, %v1191
    %v1262 = vperm.slane %v1247, 5
    %v1263 = vsel %vm1248, %v1262, %v1193
    %v1264 = vsel %vm1249, %v1262, %v1194
    %v1265 = vand.u32 %v1237, 15
    %v1266 = vcvt.s32.f32 %v1265
    %v1267 = vadd.f32 %v1266, 0.5
    %v1268 = vshra.s32 %v1237, 4
    %v1269 = vcvt.s32.f32 %v1268
    %v1270 = vadd.f32 %v1269, 0.5
    %v1271 = vperm.slane %v1267, 0
    %v1272 = vsel %vm1248, %v1271, %v1202
    %v1273 = vsel %vm1249, %v1271, %v1203
    %v1274 = vperm.slane %v1270, 0
    %v1275 = vsel %vm1248, %v1274, %v1205
    %v1276 = vsel %vm1249, %v1274, %v1206
    %vm1277 = vcmp.eq.s32.totalorder %v28, 7
    %vm1278 = vmand %vm734, %vm1277
    %v1279 = vperm.slane %v1215, 0
    %v1280 = vsel %vm1278, %v1279, %v1210
    %v1281 = vxor.u32 %v635, 2147483648
    %v1282 = vxor.u32 %v648, 2147483648
    %v1283 = vmul.f32 %v1281, 1.442695
    %v1284 = vpow.pop %v1283
    %v1285 = vmul.f32 %v1282, 1.442695
    %v1286 = vpow.pop %v1285
    %v1287 = vadd.f32 %v1284, 1.0
    %v1288 = vadd.f32 %v1286, 1.0
    %v1289 = vrcp.pop %v1287
    %v1290 = vmul.f32 %v1287, %v1289
    %v1291 = vsub.f32 1.0, %v1290
    %v1292 = vmul.f32 %v1289, %v1291
    %v1293 = vadd.f32 %v1289, %v1292
    %vm1294 = vweird.f32 %v1287
    %vm1295 = vweird.f32 %v1289
    %vm1296 = vmor %vm1294, %vm1295
    %v1297 = vsel %vm1296, %v1289, %v1293
    %v1298 = vand.u32 2147483647, %v1287
    %vm1299 = vcmp.eq.f32.partialorder %v1298, 8.507059e+37
    %v1300 = vand.u32 %v1287, 2147483648
    %v1301 = vor.u32 1.1754944e-38, %v1300
    %v1302 = vsel %vm1299, %v1301, %v1297
    %v1303 = vmul.f32 1.0, %v1302
    %v1304 = vrcp.pop %v1288
    %v1305 = vmul.f32 %v1288, %v1304
    %v1306 = vsub.f32 1.0, %v1305
    %v1307 = vmul.f32 %v1304, %v1306
    %v1308 = vadd.f32 %v1304, %v1307
    %vm1309 = vweird.f32 %v1288
    %vm1310 = vweird.f32 %v1304
    %vm1311 = vmor %vm1309, %vm1310
    %v1312 = vsel %vm1311, %v1304, %v1308
    %v1313 = vand.u32 2147483647, %v1288
    %vm1314 = vcmp.eq.f32.partialorder %v1313, 8.507059e+37
    %v1315 = vand.u32 %v1288, 2147483648
    %v1316 = vor.u32 1.1754944e-38, %v1315
    %v1317 = vsel %vm1314, %v1316, %v1312
    %v1318 = vmul.f32 1.0, %v1317
    %v1319 = vsel %vm396, %v1303, -inf
    %v1320 = vsel %vm396, %v1318, -inf
    %v1321 = vmax.f32 %v1319, %v1320
    %1322 = vmax.xlane.f32.xlu0 %v1321
    %v1323 = vpop.xlane.xlu0 %1322
    %vm1324 = vcmp.eq.f32.partialorder %v1303, %v1323
    %vm1325 = vcmp.eq.f32.partialorder %v1318, %v1323
    %v1326 = vsel %vm1324, %v28, 256
    %v1327 = vsel %vm1325, %v29, 256
    %v1328 = vsel %vm396, %v1326, 2147483647
    %v1329 = vsel %vm396, %v1327, 2147483647
    %vm1330 = vcmp.lt.s32.totalorder %v1328, %v1329
    %v1331 = vsel %vm1330, %v1328, %v1329
    %v1332 = vand.u32 %v1331, 65535
    %v1333 = vshra.s32 %v1331, 16
    %v1334 = vcvt.s32.f32 %v1332
    %v1335 = vcvt.s32.f32 %v1333
    %1336 = vmin.xlane.f32.xlu0 %v1335
    %v1337 = vpop.xlane.xlu0 %1336
    %vm1338 = vcmp.eq.f32.partialorder %v1335, %v1337
    %v1339 = vsel %vm1338, %v1334, inf
    %1340 = vmin.xlane.f32.xlu0 %v1339
    %v1341 = vpop.xlane.xlu0 %1340
    %v1342 = vcvt.f32.s32 %v1341
    %v1343 = vcvt.f32.s32 %v1337
    %v1344 = vshll.u32 %v1343, 16
    %v1345 = vadd.s32 %v1344, %v1342
    %v1346 = vperm.slane %v1345, 0
    %vm1347 = vcmp.eq.s32.totalorder %v28, %v1346
    %vm1348 = vcmp.eq.s32.totalorder %v29, %v1346
    %v1349 = vsel %vm1347, %v635, 0.0
    %v1350 = vsel %vm1348, %v648, 0.0
    %v1351 = vsel %vm724, %v1349, 0.0
    %v1352 = vsel %vm724, %v1350, 0.0
    %v1353 = vadd.f32 %v1351, %v1352
    %1354 = vadd.xlane.f32.xlu0 %v1353
    %v1355 = vpop.xlane.xlu0 %1354
    %vm1356 = vcmp.eq.s32.totalorder %v28, %v1345
    %vm1357 = vcmp.eq.s32.totalorder %v29, %v1345
    %v1358 = vsel %vm1356, -1.0, %v1303
    %v1359 = vsel %vm1357, -1.0, %v1318
    %vm1360 = vcmp.eq.s32.totalorder %v652, 8
    %vm1361 = vcmp.eq.s32.totalorder %v653, 8
    %v1362 = vperm.slane %v1355, 1
    %v1363 = vsel %vm1360, %v1362, %v1251
    %v1364 = vsel %vm1361, %v1362, %v1252
    %v1365 = vperm.slane %v1355, 2
    %v1366 = vsel %vm1360, %v1365, %v1254
    %v1367 = vsel %vm1361, %v1365, %v1255
    %v1368 = vperm.slane %v1355, 3
    %v1369 = vsel %vm1360, %v1368, %v1257
    %v1370 = vsel %vm1361, %v1368, %v1258
    %v1371 = vperm.slane %v1355, 4
    %v1372 = vsel %vm1360, %v1371, %v1260
    %v1373 = vsel %vm1361, %v1371, %v1261
    %v1374 = vperm.slane %v1355, 5
    %v1375 = vsel %vm1360, %v1374, %v1263
    %v1376 = vsel %vm1361, %v1374, %v1264
    %v1377 = vand.u32 %v1345, 15
    %v1378 = vcvt.s32.f32 %v1377
    %v1379 = vadd.f32 %v1378, 0.5
    %v1380 = vshra.s32 %v1345, 4
    %v1381 = vcvt.s32.f32 %v1380
    %v1382 = vadd.f32 %v1381, 0.5
    %v1383 = vperm.slane %v1379, 0
    %v1384 = vsel %vm1360, %v1383, %v1272
    %v1385 = vsel %vm1361, %v1383, %v1273
    %v1386 = vperm.slane %v1382, 0
    %v1387 = vsel %vm1360, %v1386, %v1275
    %v1388 = vsel %vm1361, %v1386, %v1276
    %vm1389 = vmand %vm808, %vm763
    %v1390 = vperm.slane %v1323, 0
    %v1391 = vsel %vm1389, %v1390, %v1280
    %v1392 = vsel %vm396, %v1358, -inf
    %v1393 = vsel %vm396, %v1359, -inf
    %v1394 = vmax.f32 %v1392, %v1393
    %1395 = vmax.xlane.f32.xlu0 %v1394
    %v1396 = vpop.xlane.xlu0 %1395
    %vm1397 = vcmp.eq.f32.partialorder %v1358, %v1396
    %vm1398 = vcmp.eq.f32.partialorder %v1359, %v1396
    %v1399 = vsel %vm1397, %v28, 256
    %v1400 = vsel %vm1398, %v29, 256
    %v1401 = vsel %vm396, %v1399, 2147483647
    %v1402 = vsel %vm396, %v1400, 2147483647
    %vm1403 = vcmp.lt.s32.totalorder %v1401, %v1402
    %v1404 = vsel %vm1403, %v1401, %v1402
    %v1405 = vand.u32 %v1404, 65535
    %v1406 = vshra.s32 %v1404, 16
    %v1407 = vcvt.s32.f32 %v1405
    %v1408 = vcvt.s32.f32 %v1406
    %1409 = vmin.xlane.f32.xlu0 %v1408
    %v1410 = vpop.xlane.xlu0 %1409
    %vm1411 = vcmp.eq.f32.partialorder %v1408, %v1410
    %v1412 = vsel %vm1411, %v1407, inf
    %1413 = vmin.xlane.f32.xlu0 %v1412
    %v1414 = vpop.xlane.xlu0 %1413
    %v1415 = vcvt.f32.s32 %v1414
    %v1416 = vcvt.f32.s32 %v1410
    %v1417 = vshll.u32 %v1416, 16
    %v1418 = vadd.s32 %v1417, %v1415
    %v1419 = vperm.slane %v1418, 0
    %vm1420 = vcmp.eq.s32.totalorder %v28, %v1419
    %vm1421 = vcmp.eq.s32.totalorder %v29, %v1419
    %v1422 = vsel %vm1420, %v635, 0.0
    %v1423 = vsel %vm1421, %v648, 0.0
    %v1424 = vsel %vm724, %v1422, 0.0
    %v1425 = vsel %vm724, %v1423, 0.0
    %v1426 = vadd.f32 %v1424, %v1425
    %1427 = vadd.xlane.f32.xlu0 %v1426
    %v1428 = vpop.xlane.xlu0 %1427
    %vm1429 = vcmp.eq.s32.totalorder %v28, %v1418
    %vm1430 = vcmp.eq.s32.totalorder %v29, %v1418
    %v1431 = vsel %vm1429, -1.0, %v1358
    %v1432 = vsel %vm1430, -1.0, %v1359
    %vm1433 = vcmp.eq.s32.totalorder %v652, 9
    %vm1434 = vcmp.eq.s32.totalorder %v653, 9
    %v1435 = vperm.slane %v1428, 1
    %v1436 = vsel %vm1433, %v1435, %v1363
    %v1437 = vsel %vm1434, %v1435, %v1364
    %v1438 = vperm.slane %v1428, 2
    %v1439 = vsel %vm1433, %v1438, %v1366
    %v1440 = vsel %vm1434, %v1438, %v1367
    %v1441 = vperm.slane %v1428, 3
    %v1442 = vsel %vm1433, %v1441, %v1369
    %v1443 = vsel %vm1434, %v1441, %v1370
    %v1444 = vperm.slane %v1428, 4
    %v1445 = vsel %vm1433, %v1444, %v1372
    %v1446 = vsel %vm1434, %v1444, %v1373
    %v1447 = vperm.slane %v1428, 5
    %v1448 = vsel %vm1433, %v1447, %v1375
    %v1449 = vsel %vm1434, %v1447, %v1376
    %v1450 = vand.u32 %v1418, 15
    %v1451 = vcvt.s32.f32 %v1450
    %v1452 = vadd.f32 %v1451, 0.5
    %v1453 = vshra.s32 %v1418, 4
    %v1454 = vcvt.s32.f32 %v1453
    %v1455 = vadd.f32 %v1454, 0.5
    %v1456 = vperm.slane %v1452, 0
    %v1457 = vsel %vm1433, %v1456, %v1384
    %v1458 = vsel %vm1434, %v1456, %v1385
    %v1459 = vperm.slane %v1455, 0
    %v1460 = vsel %vm1433, %v1459, %v1387
    %v1461 = vsel %vm1434, %v1459, %v1388
    %vm1462 = vmand %vm808, %vm837
    %v1463 = vperm.slane %v1396, 0
    %v1464 = vsel %vm1462, %v1463, %v1391
    %v1465 = vsel %vm396, %v1431, -inf
    %v1466 = vsel %vm396, %v1432, -inf
    %v1467 = vmax.f32 %v1465, %v1466
    %1468 = vmax.xlane.f32.xlu0 %v1467
    %v1469 = vpop.xlane.xlu0 %1468
    %vm1470 = vcmp.eq.f32.partialorder %v1431, %v1469
    %vm1471 = vcmp.eq.f32.partialorder %v1432, %v1469
    %v1472 = vsel %vm1470, %v28, 256
    %v1473 = vsel %vm1471, %v29, 256
    %v1474 = vsel %vm396, %v1472, 2147483647
    %v1475 = vsel %vm396, %v1473, 2147483647
    %vm1476 = vcmp.lt.s32.totalorder %v1474, %v1475
    %v1477 = vsel %vm1476, %v1474, %v1475
    %v1478 = vand.u32 %v1477, 65535
    %v1479 = vshra.s32 %v1477, 16
    %v1480 = vcvt.s32.f32 %v1478
    %v1481 = vcvt.s32.f32 %v1479
    %1482 = vmin.xlane.f32.xlu0 %v1481
    %v1483 = vpop.xlane.xlu0 %1482
    %vm1484 = vcmp.eq.f32.partialorder %v1481, %v1483
    %v1485 = vsel %vm1484, %v1480, inf
    %1486 = vmin.xlane.f32.xlu0 %v1485
    %v1487 = vpop.xlane.xlu0 %1486
    %v1488 = vcvt.f32.s32 %v1487
    %v1489 = vcvt.f32.s32 %v1483
    %v1490 = vshll.u32 %v1489, 16
    %v1491 = vadd.s32 %v1490, %v1488
    %v1492 = vperm.slane %v1491, 0
    %vm1493 = vcmp.eq.s32.totalorder %v28, %v1492
    %vm1494 = vcmp.eq.s32.totalorder %v29, %v1492
    %v1495 = vsel %vm1493, %v635, 0.0
    %v1496 = vsel %vm1494, %v648, 0.0
    %v1497 = vsel %vm724, %v1495, 0.0
    %v1498 = vsel %vm724, %v1496, 0.0
    %v1499 = vadd.f32 %v1497, %v1498
    %1500 = vadd.xlane.f32.xlu0 %v1499
    %v1501 = vpop.xlane.xlu0 %1500
    %vm1502 = vcmp.eq.s32.totalorder %v28, %v1491
    %vm1503 = vcmp.eq.s32.totalorder %v29, %v1491
    %v1504 = vsel %vm1502, -1.0, %v1431
    %v1505 = vsel %vm1503, -1.0, %v1432
    %vm1506 = vcmp.eq.s32.totalorder %v652, 10
    %vm1507 = vcmp.eq.s32.totalorder %v653, 10
    %v1508 = vperm.slane %v1501, 1
    %v1509 = vsel %vm1506, %v1508, %v1436
    %v1510 = vsel %vm1507, %v1508, %v1437
    %v1511 = vperm.slane %v1501, 2
    %v1512 = vsel %vm1506, %v1511, %v1439
    %v1513 = vsel %vm1507, %v1511, %v1440
    %v1514 = vperm.slane %v1501, 3
    %v1515 = vsel %vm1506, %v1514, %v1442
    %v1516 = vsel %vm1507, %v1514, %v1443
    %v1517 = vperm.slane %v1501, 4
    %v1518 = vsel %vm1506, %v1517, %v1445
    %v1519 = vsel %vm1507, %v1517, %v1446
    %v1520 = vperm.slane %v1501, 5
    %v1521 = vsel %vm1506, %v1520, %v1448
    %v1522 = vsel %vm1507, %v1520, %v1449
    %v1523 = vand.u32 %v1491, 15
    %v1524 = vcvt.s32.f32 %v1523
    %v1525 = vadd.f32 %v1524, 0.5
    %v1526 = vshra.s32 %v1491, 4
    %v1527 = vcvt.s32.f32 %v1526
    %v1528 = vadd.f32 %v1527, 0.5
    %v1529 = vperm.slane %v1525, 0
    %v1530 = vsel %vm1506, %v1529, %v1457
    %v1531 = vsel %vm1507, %v1529, %v1458
    %v1532 = vperm.slane %v1528, 0
    %v1533 = vsel %vm1506, %v1532, %v1460
    %v1534 = vsel %vm1507, %v1532, %v1461
    %vm1535 = vmand %vm808, %vm911
    %v1536 = vperm.slane %v1469, 0
    %v1537 = vsel %vm1535, %v1536, %v1464
    %v1538 = vsel %vm396, %v1504, -inf
    %v1539 = vsel %vm396, %v1505, -inf
    %v1540 = vmax.f32 %v1538, %v1539
    %1541 = vmax.xlane.f32.xlu0 %v1540
    %v1542 = vpop.xlane.xlu0 %1541
    %vm1543 = vcmp.eq.f32.partialorder %v1504, %v1542
    %vm1544 = vcmp.eq.f32.partialorder %v1505, %v1542
    %v1545 = vsel %vm1543, %v28, 256
    %v1546 = vsel %vm1544, %v29, 256
    %v1547 = vsel %vm396, %v1545, 2147483647
    %v1548 = vsel %vm396, %v1546, 2147483647
    %vm1549 = vcmp.lt.s32.totalorder %v1547, %v1548
    %v1550 = vsel %vm1549, %v1547, %v1548
    %v1551 = vand.u32 %v1550, 65535
    %v1552 = vshra.s32 %v1550, 16
    %v1553 = vcvt.s32.f32 %v1551
    %v1554 = vcvt.s32.f32 %v1552
    %1555 = vmin.xlane.f32.xlu0 %v1554
    %v1556 = vpop.xlane.xlu0 %1555
    %vm1557 = vcmp.eq.f32.partialorder %v1554, %v1556
    %v1558 = vsel %vm1557, %v1553, inf
    %1559 = vmin.xlane.f32.xlu0 %v1558
    %v1560 = vpop.xlane.xlu0 %1559
    %v1561 = vcvt.f32.s32 %v1560
    %v1562 = vcvt.f32.s32 %v1556
    %v1563 = vshll.u32 %v1562, 16
    %v1564 = vadd.s32 %v1563, %v1561
    %v1565 = vperm.slane %v1564, 0
    %vm1566 = vcmp.eq.s32.totalorder %v28, %v1565
    %vm1567 = vcmp.eq.s32.totalorder %v29, %v1565
    %v1568 = vsel %vm1566, %v635, 0.0
    %v1569 = vsel %vm1567, %v648, 0.0
    %v1570 = vsel %vm724, %v1568, 0.0
    %v1571 = vsel %vm724, %v1569, 0.0
    %v1572 = vadd.f32 %v1570, %v1571
    %1573 = vadd.xlane.f32.xlu0 %v1572
    %v1574 = vpop.xlane.xlu0 %1573
    %vm1575 = vcmp.eq.s32.totalorder %v28, %v1564
    %vm1576 = vcmp.eq.s32.totalorder %v29, %v1564
    %v1577 = vsel %vm1575, -1.0, %v1504
    %v1578 = vsel %vm1576, -1.0, %v1505
    %vm1579 = vcmp.eq.s32.totalorder %v652, 11
    %vm1580 = vcmp.eq.s32.totalorder %v653, 11
    %v1581 = vperm.slane %v1574, 1
    %v1582 = vsel %vm1579, %v1581, %v1509
    %v1583 = vsel %vm1580, %v1581, %v1510
    %v1584 = vperm.slane %v1574, 2
    %v1585 = vsel %vm1579, %v1584, %v1512
    %v1586 = vsel %vm1580, %v1584, %v1513
    %v1587 = vperm.slane %v1574, 3
    %v1588 = vsel %vm1579, %v1587, %v1515
    %v1589 = vsel %vm1580, %v1587, %v1516
    %v1590 = vperm.slane %v1574, 4
    %v1591 = vsel %vm1579, %v1590, %v1518
    %v1592 = vsel %vm1580, %v1590, %v1519
    %v1593 = vperm.slane %v1574, 5
    %v1594 = vsel %vm1579, %v1593, %v1521
    %v1595 = vsel %vm1580, %v1593, %v1522
    %v1596 = vand.u32 %v1564, 15
    %v1597 = vcvt.s32.f32 %v1596
    %v1598 = vadd.f32 %v1597, 0.5
    %v1599 = vshra.s32 %v1564, 4
    %v1600 = vcvt.s32.f32 %v1599
    %v1601 = vadd.f32 %v1600, 0.5
    %v1602 = vperm.slane %v1598, 0
    %v1603 = vsel %vm1579, %v1602, %v1530
    %v1604 = vsel %vm1580, %v1602, %v1531
    %v1605 = vperm.slane %v1601, 0
    %v1606 = vsel %vm1579, %v1605, %v1533
    %v1607 = vsel %vm1580, %v1605, %v1534
    %vm1608 = vmand %vm808, %vm985
    %v1609 = vperm.slane %v1542, 0
    %v1610 = vsel %vm1608, %v1609, %v1537
    %v1611 = vsel %vm396, %v1577, -inf
    %v1612 = vsel %vm396, %v1578, -inf
    %v1613 = vmax.f32 %v1611, %v1612
    %1614 = vmax.xlane.f32.xlu0 %v1613
    %v1615 = vpop.xlane.xlu0 %1614
    %vm1616 = vcmp.eq.f32.partialorder %v1577, %v1615
    %vm1617 = vcmp.eq.f32.partialorder %v1578, %v1615
    %v1618 = vsel %vm1616, %v28, 256
    %v1619 = vsel %vm1617, %v29, 256
    %v1620 = vsel %vm396, %v1618, 2147483647
    %v1621 = vsel %vm396, %v1619, 2147483647
    %vm1622 = vcmp.lt.s32.totalorder %v1620, %v1621
    %v1623 = vsel %vm1622, %v1620, %v1621
    %v1624 = vand.u32 %v1623, 65535
    %v1625 = vshra.s32 %v1623, 16
    %v1626 = vcvt.s32.f32 %v1624
    %v1627 = vcvt.s32.f32 %v1625
    %1628 = vmin.xlane.f32.xlu0 %v1627
    %v1629 = vpop.xlane.xlu0 %1628
    %vm1630 = vcmp.eq.f32.partialorder %v1627, %v1629
    %v1631 = vsel %vm1630, %v1626, inf
    %1632 = vmin.xlane.f32.xlu0 %v1631
    %v1633 = vpop.xlane.xlu0 %1632
    %v1634 = vcvt.f32.s32 %v1633
    %v1635 = vcvt.f32.s32 %v1629
    %v1636 = vshll.u32 %v1635, 16
    %v1637 = vadd.s32 %v1636, %v1634
    %v1638 = vperm.slane %v1637, 0
    %vm1639 = vcmp.eq.s32.totalorder %v28, %v1638
    %vm1640 = vcmp.eq.s32.totalorder %v29, %v1638
    %v1641 = vsel %vm1639, %v635, 0.0
    %v1642 = vsel %vm1640, %v648, 0.0
    %v1643 = vsel %vm724, %v1641, 0.0
    %v1644 = vsel %vm724, %v1642, 0.0
    %v1645 = vadd.f32 %v1643, %v1644
    %1646 = vadd.xlane.f32.xlu0 %v1645
    %v1647 = vpop.xlane.xlu0 %1646
    %vm1648 = vcmp.eq.s32.totalorder %v28, %v1637
    %vm1649 = vcmp.eq.s32.totalorder %v29, %v1637
    %v1650 = vsel %vm1648, -1.0, %v1577
    %v1651 = vsel %vm1649, -1.0, %v1578
    %vm1652 = vcmp.eq.s32.totalorder %v652, 12
    %vm1653 = vcmp.eq.s32.totalorder %v653, 12
    %v1654 = vperm.slane %v1647, 1
    %v1655 = vsel %vm1652, %v1654, %v1582
    %v1656 = vsel %vm1653, %v1654, %v1583
    %v1657 = vperm.slane %v1647, 2
    %v1658 = vsel %vm1652, %v1657, %v1585
    %v1659 = vsel %vm1653, %v1657, %v1586
    %v1660 = vperm.slane %v1647, 3
    %v1661 = vsel %vm1652, %v1660, %v1588
    %v1662 = vsel %vm1653, %v1660, %v1589
    %v1663 = vperm.slane %v1647, 4
    %v1664 = vsel %vm1652, %v1663, %v1591
    %v1665 = vsel %vm1653, %v1663, %v1592
    %v1666 = vperm.slane %v1647, 5
    %v1667 = vsel %vm1652, %v1666, %v1594
    %v1668 = vsel %vm1653, %v1666, %v1595
    %v1669 = vand.u32 %v1637, 15
    %v1670 = vcvt.s32.f32 %v1669
    %v1671 = vadd.f32 %v1670, 0.5
    %v1672 = vshra.s32 %v1637, 4
    %v1673 = vcvt.s32.f32 %v1672
    %v1674 = vadd.f32 %v1673, 0.5
    %v1675 = vperm.slane %v1671, 0
    %v1676 = vsel %vm1652, %v1675, %v1603
    %v1677 = vsel %vm1653, %v1675, %v1604
    %v1678 = vperm.slane %v1674, 0
    %v1679 = vsel %vm1652, %v1678, %v1606
    %v1680 = vsel %vm1653, %v1678, %v1607
    %vm1681 = vmand %vm808, %vm1059
    %v1682 = vperm.slane %v1615, 0
    %v1683 = vsel %vm1681, %v1682, %v1610
    %v1684 = vsel %vm396, %v1650, -inf
    %v1685 = vsel %vm396, %v1651, -inf
    %v1686 = vmax.f32 %v1684, %v1685
    %1687 = vmax.xlane.f32.xlu0 %v1686
    %v1688 = vpop.xlane.xlu0 %1687
    %vm1689 = vcmp.eq.f32.partialorder %v1650, %v1688
    %vm1690 = vcmp.eq.f32.partialorder %v1651, %v1688
    %v1691 = vsel %vm1689, %v28, 256
    %v1692 = vsel %vm1690, %v29, 256
    %v1693 = vsel %vm396, %v1691, 2147483647
    %v1694 = vsel %vm396, %v1692, 2147483647
    %vm1695 = vcmp.lt.s32.totalorder %v1693, %v1694
    %v1696 = vsel %vm1695, %v1693, %v1694
    %v1697 = vand.u32 %v1696, 65535
    %v1698 = vshra.s32 %v1696, 16
    %v1699 = vcvt.s32.f32 %v1697
    %v1700 = vcvt.s32.f32 %v1698
    %1701 = vmin.xlane.f32.xlu0 %v1700
    %v1702 = vpop.xlane.xlu0 %1701
    %vm1703 = vcmp.eq.f32.partialorder %v1700, %v1702
    %v1704 = vsel %vm1703, %v1699, inf
    %1705 = vmin.xlane.f32.xlu0 %v1704
    %v1706 = vpop.xlane.xlu0 %1705
    %v1707 = vcvt.f32.s32 %v1706
    %v1708 = vcvt.f32.s32 %v1702
    %v1709 = vshll.u32 %v1708, 16
    %v1710 = vadd.s32 %v1709, %v1707
    %v1711 = vperm.slane %v1710, 0
    %vm1712 = vcmp.eq.s32.totalorder %v28, %v1711
    %vm1713 = vcmp.eq.s32.totalorder %v29, %v1711
    %v1714 = vsel %vm1712, %v635, 0.0
    %v1715 = vsel %vm1713, %v648, 0.0
    %v1716 = vsel %vm724, %v1714, 0.0
    %v1717 = vsel %vm724, %v1715, 0.0
    %v1718 = vadd.f32 %v1716, %v1717
    %1719 = vadd.xlane.f32.xlu0 %v1718
    %v1720 = vpop.xlane.xlu0 %1719
    %vm1721 = vcmp.eq.s32.totalorder %v28, %v1710
    %vm1722 = vcmp.eq.s32.totalorder %v29, %v1710
    %v1723 = vsel %vm1721, -1.0, %v1650
    %v1724 = vsel %vm1722, -1.0, %v1651
    %vm1725 = vcmp.eq.s32.totalorder %v652, 13
    %vm1726 = vcmp.eq.s32.totalorder %v653, 13
    %v1727 = vperm.slane %v1720, 1
    %v1728 = vsel %vm1725, %v1727, %v1655
    %v1729 = vsel %vm1726, %v1727, %v1656
    %v1730 = vperm.slane %v1720, 2
    %v1731 = vsel %vm1725, %v1730, %v1658
    %v1732 = vsel %vm1726, %v1730, %v1659
    %v1733 = vperm.slane %v1720, 3
    %v1734 = vsel %vm1725, %v1733, %v1661
    %v1735 = vsel %vm1726, %v1733, %v1662
    %v1736 = vperm.slane %v1720, 4
    %v1737 = vsel %vm1725, %v1736, %v1664
    %v1738 = vsel %vm1726, %v1736, %v1665
    %v1739 = vperm.slane %v1720, 5
    %v1740 = vsel %vm1725, %v1739, %v1667
    %v1741 = vsel %vm1726, %v1739, %v1668
    %v1742 = vand.u32 %v1710, 15
    %v1743 = vcvt.s32.f32 %v1742
    %v1744 = vadd.f32 %v1743, 0.5
    %v1745 = vshra.s32 %v1710, 4
    %v1746 = vcvt.s32.f32 %v1745
    %v1747 = vadd.f32 %v1746, 0.5
    %v1748 = vperm.slane %v1744, 0
    %v1749 = vsel %vm1725, %v1748, %v1676
    %v1750 = vsel %vm1726, %v1748, %v1677
    %v1751 = vperm.slane %v1747, 0
    %v1752 = vsel %vm1725, %v1751, %v1679
    %v1753 = vsel %vm1726, %v1751, %v1680
    %vm1754 = vmand %vm808, %vm1133
    %v1755 = vperm.slane %v1688, 0
    %v1756 = vsel %vm1754, %v1755, %v1683
    %v1757 = vsel %vm396, %v1723, -inf
    %v1758 = vsel %vm396, %v1724, -inf
    %v1759 = vmax.f32 %v1757, %v1758
    %1760 = vmax.xlane.f32.xlu0 %v1759
    %v1761 = vpop.xlane.xlu0 %1760
    %vm1762 = vcmp.eq.f32.partialorder %v1723, %v1761
    %vm1763 = vcmp.eq.f32.partialorder %v1724, %v1761
    %v1764 = vsel %vm1762, %v28, 256
    %v1765 = vsel %vm1763, %v29, 256
    %v1766 = vsel %vm396, %v1764, 2147483647
    %v1767 = vsel %vm396, %v1765, 2147483647
    %vm1768 = vcmp.lt.s32.totalorder %v1766, %v1767
    %v1769 = vsel %vm1768, %v1766, %v1767
    %v1770 = vand.u32 %v1769, 65535
    %v1771 = vshra.s32 %v1769, 16
    %v1772 = vcvt.s32.f32 %v1770
    %v1773 = vcvt.s32.f32 %v1771
    %1774 = vmin.xlane.f32.xlu0 %v1773
    %v1775 = vpop.xlane.xlu0 %1774
    %vm1776 = vcmp.eq.f32.partialorder %v1773, %v1775
    %v1777 = vsel %vm1776, %v1772, inf
    %1778 = vmin.xlane.f32.xlu0 %v1777
    %v1779 = vpop.xlane.xlu0 %1778
    %v1780 = vcvt.f32.s32 %v1779
    %v1781 = vcvt.f32.s32 %v1775
    %v1782 = vshll.u32 %v1781, 16
    %v1783 = vadd.s32 %v1782, %v1780
    %v1784 = vperm.slane %v1783, 0
    %vm1785 = vcmp.eq.s32.totalorder %v28, %v1784
    %vm1786 = vcmp.eq.s32.totalorder %v29, %v1784
    %v1787 = vsel %vm1785, %v635, 0.0
    %v1788 = vsel %vm1786, %v648, 0.0
    %v1789 = vsel %vm724, %v1787, 0.0
    %v1790 = vsel %vm724, %v1788, 0.0
    %v1791 = vadd.f32 %v1789, %v1790
    %1792 = vadd.xlane.f32.xlu0 %v1791
    %v1793 = vpop.xlane.xlu0 %1792
    %vm1794 = vcmp.eq.s32.totalorder %v28, %v1783
    %vm1795 = vcmp.eq.s32.totalorder %v29, %v1783
    %v1796 = vsel %vm1794, -1.0, %v1723
    %v1797 = vsel %vm1795, -1.0, %v1724
    %vm1798 = vcmp.eq.s32.totalorder %v652, 14
    %vm1799 = vcmp.eq.s32.totalorder %v653, 14
    %v1800 = vperm.slane %v1793, 1
    %v1801 = vsel %vm1798, %v1800, %v1728
    %v1802 = vsel %vm1799, %v1800, %v1729
    %v1803 = vperm.slane %v1793, 2
    %v1804 = vsel %vm1798, %v1803, %v1731
    %v1805 = vsel %vm1799, %v1803, %v1732
    %v1806 = vperm.slane %v1793, 3
    %v1807 = vsel %vm1798, %v1806, %v1734
    %v1808 = vsel %vm1799, %v1806, %v1735
    %v1809 = vperm.slane %v1793, 4
    %v1810 = vsel %vm1798, %v1809, %v1737
    %v1811 = vsel %vm1799, %v1809, %v1738
    %v1812 = vperm.slane %v1793, 5
    %v1813 = vsel %vm1798, %v1812, %v1740
    %v1814 = vsel %vm1799, %v1812, %v1741
    %v1815 = vand.u32 %v1783, 15
    %v1816 = vcvt.s32.f32 %v1815
    %v1817 = vadd.f32 %v1816, 0.5
    %v1818 = vshra.s32 %v1783, 4
    %v1819 = vcvt.s32.f32 %v1818
    %v1820 = vadd.f32 %v1819, 0.5
    %v1821 = vperm.slane %v1817, 0
    %v1822 = vsel %vm1798, %v1821, %v1749
    %v1823 = vsel %vm1799, %v1821, %v1750
    %v1824 = vperm.slane %v1820, 0
    %v1825 = vsel %vm1798, %v1824, %v1752
    %v1826 = vsel %vm1799, %v1824, %v1753
    %vm1827 = vmand %vm808, %vm1207
    %v1828 = vperm.slane %v1761, 0
    %v1829 = vsel %vm1827, %v1828, %v1756
    %v1830 = vsel %vm396, %v1796, -inf
    %v1831 = vsel %vm396, %v1797, -inf
    %v1832 = vmax.f32 %v1830, %v1831
    %1833 = vmax.xlane.f32.xlu0 %v1832
    %v1834 = vpop.xlane.xlu0 %1833
    %vm1835 = vcmp.eq.f32.partialorder %v1796, %v1834
    %vm1836 = vcmp.eq.f32.partialorder %v1797, %v1834
    %v1837 = vsel %vm1835, %v28, 256
    %v1838 = vsel %vm1836, %v29, 256
    %v1839 = vsel %vm396, %v1837, 2147483647
    %v1840 = vsel %vm396, %v1838, 2147483647
    %vm1841 = vcmp.lt.s32.totalorder %v1839, %v1840
    %v1842 = vsel %vm1841, %v1839, %v1840
    %v1843 = vand.u32 %v1842, 65535
    %v1844 = vshra.s32 %v1842, 16
    %v1845 = vcvt.s32.f32 %v1843
    %v1846 = vcvt.s32.f32 %v1844
    %1847 = vmin.xlane.f32.xlu0 %v1846
    %v1848 = vpop.xlane.xlu0 %1847
    %vm1849 = vcmp.eq.f32.partialorder %v1846, %v1848
    %v1850 = vsel %vm1849, %v1845, inf
    %1851 = vmin.xlane.f32.xlu0 %v1850
    %v1852 = vpop.xlane.xlu0 %1851
    %v1853 = vcvt.f32.s32 %v1852
    %v1854 = vcvt.f32.s32 %v1848
    %v1855 = vshll.u32 %v1854, 16
    %v1856 = vadd.s32 %v1855, %v1853
    %v1857 = vperm.slane %v1856, 0
    %vm1858 = vcmp.eq.s32.totalorder %v28, %v1857
    %vm1859 = vcmp.eq.s32.totalorder %v29, %v1857
    %v1860 = vsel %vm1858, %v635, 0.0
    %v1861 = vsel %vm1859, %v648, 0.0
    %v1862 = vsel %vm724, %v1860, 0.0
    %v1863 = vsel %vm724, %v1861, 0.0
    %v1864 = vadd.f32 %v1862, %v1863
    %1865 = vadd.xlane.f32.xlu0 %v1864
    %v1866 = vpop.xlane.xlu0 %1865
    %vm1867 = vcmp.eq.s32.totalorder %v652, 15
    %vm1868 = vcmp.eq.s32.totalorder %v653, 15
    %v1869 = vperm.slane %v1866, 1
    %v1870 = vsel %vm1867, %v1869, %v1801
    %v1871 = vsel %vm1868, %v1869, %v1802
    %v1872 = vperm.slane %v1866, 2
    %v1873 = vsel %vm1867, %v1872, %v1804
    %v1874 = vsel %vm1868, %v1872, %v1805
    %v1875 = vperm.slane %v1866, 3
    %v1876 = vsel %vm1867, %v1875, %v1807
    %v1877 = vsel %vm1868, %v1875, %v1808
    %v1878 = vperm.slane %v1866, 4
    %v1879 = vsel %vm1867, %v1878, %v1810
    %v1880 = vsel %vm1868, %v1878, %v1811
    %v1881 = vperm.slane %v1866, 5
    %v1882 = vsel %vm1867, %v1881, %v1813
    %v1883 = vsel %vm1868, %v1881, %v1814
    %v1884 = vand.u32 %v1856, 15
    %v1885 = vcvt.s32.f32 %v1884
    %v1886 = vadd.f32 %v1885, 0.5
    %v1887 = vshra.s32 %v1856, 4
    %v1888 = vcvt.s32.f32 %v1887
    %v1889 = vadd.f32 %v1888, 0.5
    %v1890 = vperm.slane %v1886, 0
    %v1891 = vsel %vm1867, %v1890, %v1822
    %v1892 = vsel %vm1868, %v1890, %v1823
    %v1893 = vperm.slane %v1889, 0
    %v1894 = vsel %vm1867, %v1893, %v1825
    %v1895 = vsel %vm1868, %v1893, %v1826
    %vm1896 = vmand %vm808, %vm1277
    %v1897 = vperm.slane %v1834, 0
    %v1898 = vsel %vm1896, %v1897, %v1829
    %vm1899 = vcmask 58368
    %1900 = vst.msk [vmem:[#allocation2] sm:$0x3] %vm1899, %v1898
    %v1901 = vmax.f32 %v1876, -4.1351666
    %v1902 = vmax.f32 %v1877, -4.1351666
    %v1903 = vmin.f32 %v1901, 4.1351666
    %v1904 = vmin.f32 %v1902, 4.1351666
    %v1905 = vmax.f32 %v1879, -4.1351666
    %v1906 = vmax.f32 %v1880, -4.1351666
    %v1907 = vmin.f32 %v1905, 4.1351666
    %v1908 = vmin.f32 %v1906, 4.1351666
    %v1909 = vmul.f32 %v1870, 8.0
    %v1910 = vmul.f32 %v1871, 8.0
    %v1911 = vadd.f32 %v1891, %v1909
    %v1912 = vadd.f32 %v1892, %v1910
    %v1913 = vmul.f32 %v1873, 8.0
    %v1914 = vmul.f32 %v1874, 8.0
    %v1915 = vadd.f32 %v1894, %v1913
    %v1916 = vadd.f32 %v1895, %v1914
    %v1917 = vmul.f32 %v1903, 1.442695
    %v1918 = vpow.pop %v1917
    %v1919 = vmul.f32 %v1904, 1.442695
    %v1920 = vpow.pop %v1919
    %v1921 = vmul.f32 %v1918, 8.0
    %v1922 = vmul.f32 %v1920, 8.0
    %v1923 = vmul.f32 %v1907, 1.442695
    %v1924 = vpow.pop %v1923
    %v1925 = vmul.f32 %v1908, 1.442695
    %v1926 = vpow.pop %v1925
    %v1927 = vmul.f32 %v1924, 8.0
    %v1928 = vmul.f32 %v1926, 8.0
    %v1929 = vand.u32 2147483647, %v1882
    %vm1930 = vcmp.le.f32.partialorder %v1929, 0.7853982
    %vm1931 = vcmp.lt.s32.totalorder %v1882, 0
    %v1932 = vand.u32 %v1882, 2139095040
    %v1933 = vshrl.u32 %v1932, 23
    %v1934 = vsub.s32 %v1933, 127
    %v1935 = vand.u32 2147483647, %v1882
    %v1936 = vand.u32 %v1935, 8388607
    %v1937 = vor.u32 %v1936, 8388608
    %v1938 = vsub.s32 0, %v1937
    %v1939 = vadd.s32 %v1934, 1
    %vm1940 = vcmp.gt.s32.totalorder %v1939, 0
    %v1941 = vsel %vm1940, %v1939, 0
    %v1942 = vshrl.u32 %v1941, 5
    %v1943 = vand.u32 %v1941, 31
    %v1944 = vsub.s32 32, %v1943
    %v1945 = vshrl.u32 683565275, %v1944
    %v1946 = vshll.u32 683565275, %v1943
    %v1947 = vshrl.u32 2475754826, %v1944
    %v1948 = vor.u32 %v1946, %v1947
    %v1949 = vshll.u32 2475754826, %v1943
    %v1950 = vshrl.u32 2131351028, %v1944
    %v1951 = vor.u32 %v1949, %v1950
    %v1952 = vshll.u32 2131351028, %v1943
    %v1953 = vshrl.u32 2102212464, %v1944
    %v1954 = vor.u32 %v1952, %v1953
    %v1955 = vshll.u32 2102212464, %v1943
    %v1956 = vshrl.u32 920167782, %v1944
    %v1957 = vor.u32 %v1955, %v1956
    %v1958 = vshll.u32 920167782, %v1943
    %v1959 = vshrl.u32 1326507024, %v1944
    %v1960 = vor.u32 %v1958, %v1959
    %vm1961 = vcmp.lt.s32.totalorder %v1942, 1
    %vm1962 = vcmp.lt.s32.totalorder %v1942, 2
    %vm1963 = vcmp.lt.s32.totalorder %v1942, 3
    %vm1964 = vcmp.lt.s32.totalorder %v1942, 4
    %v1965 = vsel %vm1961, %v1945, %v1948
    %v1966 = vsel %vm1964, %v1954, 2102212464
    %v1967 = vsel %vm1963, %v1951, %v1966
    %v1968 = vsel %vm1962, %v1965, %v1967
    %v1969 = vsel %vm1961, %v1948, %v1951
    %v1970 = vsel %vm1964, %v1957, 920167782
    %v1971 = vsel %vm1963, %v1954, %v1970
    %v1972 = vsel %vm1962, %v1969, %v1971
    %v1973 = vsel %vm1961, %v1951, %v1954
    %v1974 = vsel %vm1964, %v1960, 1326507024
    %v1975 = vsel %vm1963, %v1957, %v1974
    %v1976 = vsel %vm1962, %v1973, %v1975
    %v1977 = vshll.u32 %v1937, 8
    %v1978 = vand.u32 %v1977, 65535
    %v1979 = vshrl.u32 %v1977, 16
    %v1980 = vand.u32 %v1976, 65535
    %v1981 = vshrl.u32 %v1976, 16
    %v1982 = vmul.u32 %v1978, %v1980
    %v1983 = vmul.u32 %v1978, %v1981
    %v1984 = vmul.u32 %v1979, %v1980
    %v1985 = vmul.u32 %v1979, %v1981
    %v1986 = vshll.u32 %v1983, 16
    %v1987 = vshrl.u32 %v1983, 16
    %v1988 = vshll.u32 %v1984, 16
    %v1989 = vshrl.u32 %v1984, 16
    %vm1990 = vc.u32 %v1982, %v1986
    %v1991 = vsel %vm1990, 1, 0
    %v1992 = vadd.s32 %v1982, %v1986
    %v1993 = vadd.s32 %v1985, %v1991
    %vm1994 = vc.u32 %v1992, %v1988
    %v1995 = vsel %vm1994, 1, 0
    %v1996 = vadd.s32 %v1992, %v1988
    %v1997 = vadd.s32 %v1993, %v1995
    %v1998 = vadd.s32 %v1997, %v1987
    %v1999 = vadd.s32 %v1998, %v1989
    %v2000 = vand.u32 %v1977, 65535
    %v2001 = vshrl.u32 %v1977, 16
    %v2002 = vand.u32 %v1972, 65535
    %v2003 = vshrl.u32 %v1972, 16
    %v2004 = vmul.u32 %v2000, %v2002
    %v2005 = vmul.u32 %v2000, %v2003
    %v2006 = vmul.u32 %v2001, %v2002
    %v2007 = vmul.u32 %v2001, %v2003
    %v2008 = vshll.u32 %v2005, 16
    %v2009 = vshrl.u32 %v2005, 16
    %v2010 = vshll.u32 %v2006, 16
    %v2011 = vshrl.u32 %v2006, 16
    %vm2012 = vc.u32 %v2004, %v2008
    %v2013 = vsel %vm2012, 1, 0
    %v2014 = vadd.s32 %v2004, %v2008
    %v2015 = vadd.s32 %v2007, %v2013
    %vm2016 = vc.u32 %v2014, %v2010
    %v2017 = vsel %vm2016, 1, 0
    %v2018 = vadd.s32 %v2014, %v2010
    %v2019 = vadd.s32 %v2015, %v2017
    %v2020 = vadd.s32 %v2019, %v2009
    %v2021 = vadd.s32 %v2020, %v2011
    %v2022 = vmul.u32 %v1977, %v1968
    %v2023 = vadd.s32 %v1999, %v2018
    %vm2024 = vc.u32 %v1999, %v2018
    %v2025 = vadd.s32 %v2021, 1
    %v2026 = vsel %vm2024, %v2025, %v2021
    %v2027 = vadd.s32 %v2022, %v2026
    %v2028 = vadd.s32 %v2027, 536870912
    %v2029 = vshrl.u32 %v2028, 30
    %v2030 = vshll.u32 %v2029, 30
    %v2031 = vsub.s32 %v2027, %v2030
    %vm2032 = vcmp.lt.s32.totalorder %v2031, 0
    %v2033 = vsub.s32 0, %v2031
    %v2034 = vsel %vm2032, %v2033, %v2031
    %v2035 = vclz %v2034
    %v2036 = vsub.s32 %v2035, 2
    %vm2037 = vcmp.gt.s32.totalorder 0, %v2036
    %v2038 = vsel %vm2037, 0, %v2036
    %v2039 = vsub.s32 32, %v2038
    %v2040 = vshll.u32 %v2031, %v2038
    %v2041 = vshrl.u32 %v2023, %v2039
    %v2042 = vor.u32 %v2040, %v2041
    %v2043 = vsub.s32 4294967266, %v2038
    %v2044 = vadd.s32 %v2043, 127
    %v2045 = vshll.u32 %v2044, 23
    %v2046 = vor.u32 4788187, %v2045
    %v2047 = vand.u32 2147483647, %v2046
    %v2049 = vcvt.s32.f32 %v2042
    %v2050 = vmul.f32 %v2049, %v2047
    %v2051 = vxor.u32 %v2050, 2147483648
    %v2052 = vsel %vm1931, %v2051, %v2050
    %v2053 = vsub.s32 4, %v2029
    %v2054 = vsel %vm1931, %v2053, %v2029
    %v2055 = vsel %vm1930, %v1882, %v2052
    %v2056 = vsel %vm1930, 0, %v2054
    %v2057 = vmul.f32 %v2055, %v2055
    %v2058 = vmul.f32 %v2057, -0.001358992
    %v2059 = vadd.f32 %v2058, 0.041655596
    %v2060 = vmul.f32 %v2057, %v2059
    %v2061 = vadd.f32 %v2060, -0.4999988
    %v2062 = vmul.f32 %v2057, %v2061
    %v2063 = vadd.f32 1.0, %v2062
    %v2064 = vmul.f32 %v2055, %v2055
    %v2065 = vmul.f32 %v2064, -0.00019511016
    %v2066 = vadd.f32 %v2065, 0.008332121
    %v2067 = vmul.f32 %v2064, %v2066
    %v2068 = vadd.f32 %v2067, -0.16666654
    %v2069 = vmul.f32 %v2064, %v2068
    %v2070 = vadd.f32 %v2069, 1.0
    %v2071 = vmul.f32 %v2070, %v2055
    %vm2072 = vweird.f32 %v1882
    %v2073 = vand.u32 %v2056, 3
    %vm2074 = vcmp.lt.s32.totalorder %v2073, 2
    %vm2075 = vcmp.eq.s32.totalorder %v2073, 0
    %v2076 = vxor.u32 %v2071, 2147483648
    %v2077 = vsel %vm2075, %v2063, %v2076
    %vm2078 = vcmp.eq.s32.totalorder %v2073, 2
    %v2079 = vxor.u32 %v2063, 2147483648
    %v2080 = vsel %vm2078, %v2079, %v2071
    %v2081 = vsel %vm2074, %v2077, %v2080
    %v2082 = vsel %vm2072, nan, %v2081
    %v2083 = vand.u32 2147483647, %v1883
    %vm2084 = vcmp.le.f32.partialorder %v2083, 0.7853982
    %vm2085 = vcmp.lt.s32.totalorder %v1883, 0
    %v2086 = vand.u32 %v1883, 2139095040
    %v2087 = vshrl.u32 %v2086, 23
    %v2088 = vsub.s32 %v2087, 127
    %v2089 = vand.u32 2147483647, %v1883
    %v2090 = vand.u32 %v2089, 8388607
    %v2091 = vor.u32 %v2090, 8388608
    %v2092 = vsub.s32 0, %v2091
    %v2093 = vadd.s32 %v2088, 1
    %vm2094 = vcmp.gt.s32.totalorder %v2093, 0
    %v2095 = vsel %vm2094, %v2093, 0
    %v2096 = vshrl.u32 %v2095, 5
    %v2097 = vand.u32 %v2095, 31
    %v2098 = vsub.s32 32, %v2097
    %v2099 = vshrl.u32 683565275, %v2098
    %v2100 = vshll.u32 683565275, %v2097
    %v2101 = vshrl.u32 2475754826, %v2098
    %v2102 = vor.u32 %v2100, %v2101
    %v2103 = vshll.u32 2475754826, %v2097
    %v2104 = vshrl.u32 2131351028, %v2098
    %v2105 = vor.u32 %v2103, %v2104
    %v2106 = vshll.u32 2131351028, %v2097
    %v2107 = vshrl.u32 2102212464, %v2098
    %v2108 = vor.u32 %v2106, %v2107
    %v2109 = vshll.u32 2102212464, %v2097
    %v2110 = vshrl.u32 920167782, %v2098
    %v2111 = vor.u32 %v2109, %v2110
    %v2112 = vshll.u32 920167782, %v2097
    %v2113 = vshrl.u32 1326507024, %v2098
    %v2114 = vor.u32 %v2112, %v2113
    %vm2115 = vcmp.lt.s32.totalorder %v2096, 1
    %vm2116 = vcmp.lt.s32.totalorder %v2096, 2
    %vm2117 = vcmp.lt.s32.totalorder %v2096, 3
    %vm2118 = vcmp.lt.s32.totalorder %v2096, 4
    %v2119 = vsel %vm2115, %v2099, %v2102
    %v2120 = vsel %vm2118, %v2108, 2102212464
    %v2121 = vsel %vm2117, %v2105, %v2120
    %v2122 = vsel %vm2116, %v2119, %v2121
    %v2123 = vsel %vm2115, %v2102, %v2105
    %v2124 = vsel %vm2118, %v2111, 920167782
    %v2125 = vsel %vm2117, %v2108, %v2124
    %v2126 = vsel %vm2116, %v2123, %v2125
    %v2127 = vsel %vm2115, %v2105, %v2108
    %v2128 = vsel %vm2118, %v2114, 1326507024
    %v2129 = vsel %vm2117, %v2111, %v2128
    %v2130 = vsel %vm2116, %v2127, %v2129
    %v2131 = vshll.u32 %v2091, 8
    %v2132 = vand.u32 %v2131, 65535
    %v2133 = vshrl.u32 %v2131, 16
    %v2134 = vand.u32 %v2130, 65535
    %v2135 = vshrl.u32 %v2130, 16
    %v2136 = vmul.u32 %v2132, %v2134
    %v2137 = vmul.u32 %v2132, %v2135
    %v2138 = vmul.u32 %v2133, %v2134
    %v2139 = vmul.u32 %v2133, %v2135
    %v2140 = vshll.u32 %v2137, 16
    %v2141 = vshrl.u32 %v2137, 16
    %v2142 = vshll.u32 %v2138, 16
    %v2143 = vshrl.u32 %v2138, 16
    %vm2144 = vc.u32 %v2136, %v2140
    %v2145 = vsel %vm2144, 1, 0
    %v2146 = vadd.s32 %v2136, %v2140
    %v2147 = vadd.s32 %v2139, %v2145
    %vm2148 = vc.u32 %v2146, %v2142
    %v2149 = vsel %vm2148, 1, 0
    %v2150 = vadd.s32 %v2146, %v2142
    %v2151 = vadd.s32 %v2147, %v2149
    %v2152 = vadd.s32 %v2151, %v2141
    %v2153 = vadd.s32 %v2152, %v2143
    %v2154 = vand.u32 %v2131, 65535
    %v2155 = vshrl.u32 %v2131, 16
    %v2156 = vand.u32 %v2126, 65535
    %v2157 = vshrl.u32 %v2126, 16
    %v2158 = vmul.u32 %v2154, %v2156
    %v2159 = vmul.u32 %v2154, %v2157
    %v2160 = vmul.u32 %v2155, %v2156
    %v2161 = vmul.u32 %v2155, %v2157
    %v2162 = vshll.u32 %v2159, 16
    %v2163 = vshrl.u32 %v2159, 16
    %v2164 = vshll.u32 %v2160, 16
    %v2165 = vshrl.u32 %v2160, 16
    %vm2166 = vc.u32 %v2158, %v2162
    %v2167 = vsel %vm2166, 1, 0
    %v2168 = vadd.s32 %v2158, %v2162
    %v2169 = vadd.s32 %v2161, %v2167
    %vm2170 = vc.u32 %v2168, %v2164
    %v2171 = vsel %vm2170, 1, 0
    %v2172 = vadd.s32 %v2168, %v2164
    %v2173 = vadd.s32 %v2169, %v2171
    %v2174 = vadd.s32 %v2173, %v2163
    %v2175 = vadd.s32 %v2174, %v2165
    %v2176 = vmul.u32 %v2131, %v2122
    %v2177 = vadd.s32 %v2153, %v2172
    %vm2178 = vc.u32 %v2153, %v2172
    %v2179 = vadd.s32 %v2175, 1
    %v2180 = vsel %vm2178, %v2179, %v2175
    %v2181 = vadd.s32 %v2176, %v2180
    %v2182 = vadd.s32 %v2181, 536870912
    %v2183 = vshrl.u32 %v2182, 30
    %v2184 = vshll.u32 %v2183, 30
    %v2185 = vsub.s32 %v2181, %v2184
    %vm2186 = vcmp.lt.s32.totalorder %v2185, 0
    %v2187 = vsub.s32 0, %v2185
    %v2188 = vsel %vm2186, %v2187, %v2185
    %v2189 = vclz %v2188
    %v2190 = vsub.s32 %v2189, 2
    %vm2191 = vcmp.gt.s32.totalorder 0, %v2190
    %v2192 = vsel %vm2191, 0, %v2190
    %v2193 = vsub.s32 32, %v2192
    %v2194 = vshll.u32 %v2185, %v2192
    %v2195 = vshrl.u32 %v2177, %v2193
    %v2196 = vor.u32 %v2194, %v2195
    %v2197 = vsub.s32 4294967266, %v2192
    %v2198 = vadd.s32 %v2197, 127
    %v2199 = vshll.u32 %v2198, 23
    %v2200 = vor.u32 4788187, %v2199
    %v2201 = vand.u32 2147483647, %v2200
    %v2203 = vcvt.s32.f32 %v2196
    %v2204 = vmul.f32 %v2203, %v2201
    %v2205 = vxor.u32 %v2204, 2147483648
    %v2206 = vsel %vm2085, %v2205, %v2204
    %v2207 = vsub.s32 4, %v2183
    %v2208 = vsel %vm2085, %v2207, %v2183
    %v2209 = vsel %vm2084, %v1883, %v2206
    %v2210 = vsel %vm2084, 0, %v2208
    %v2211 = vmul.f32 %v2209, %v2209
    %v2212 = vmul.f32 %v2211, -0.001358992
    %v2213 = vadd.f32 %v2212, 0.041655596
    %v2214 = vmul.f32 %v2211, %v2213
    %v2215 = vadd.f32 %v2214, -0.4999988
    %v2216 = vmul.f32 %v2211, %v2215
    %v2217 = vadd.f32 1.0, %v2216
    %v2218 = vmul.f32 %v2209, %v2209
    %v2219 = vmul.f32 %v2218, -0.00019511016
    %v2220 = vadd.f32 %v2219, 0.008332121
    %v2221 = vmul.f32 %v2218, %v2220
    %v2222 = vadd.f32 %v2221, -0.16666654
    %v2223 = vmul.f32 %v2218, %v2222
    %v2224 = vadd.f32 %v2223, 1.0
    %v2225 = vmul.f32 %v2224, %v2209
    %vm2226 = vweird.f32 %v1883
    %v2227 = vand.u32 %v2210, 3
    %vm2228 = vcmp.lt.s32.totalorder %v2227, 2
    %vm2229 = vcmp.eq.s32.totalorder %v2227, 0
    %v2230 = vxor.u32 %v2225, 2147483648
    %v2231 = vsel %vm2229, %v2217, %v2230
    %vm2232 = vcmp.eq.s32.totalorder %v2227, 2
    %v2233 = vxor.u32 %v2217, 2147483648
    %v2234 = vsel %vm2232, %v2233, %v2225
    %v2235 = vsel %vm2228, %v2231, %v2234
    %v2236 = vsel %vm2226, nan, %v2235
    %v2237 = vand.u32 2147483647, %v1882
    %vm2238 = vcmp.le.f32.partialorder %v2237, 0.7853982
    %vm2239 = vcmp.lt.s32.totalorder %v1882, 0
    %v2240 = vand.u32 %v1882, 2139095040
    %v2241 = vshrl.u32 %v2240, 23
    %v2242 = vsub.s32 %v2241, 127
    %v2243 = vand.u32 2147483647, %v1882
    %v2244 = vand.u32 %v2243, 8388607
    %v2245 = vor.u32 %v2244, 8388608
    %v2246 = vsub.s32 0, %v2245
    %v2247 = vadd.s32 %v2242, 1
    %vm2248 = vcmp.gt.s32.totalorder %v2247, 0
    %v2249 = vsel %vm2248, %v2247, 0
    %v2250 = vshrl.u32 %v2249, 5
    %v2251 = vand.u32 %v2249, 31
    %v2252 = vsub.s32 32, %v2251
    %v2253 = vshrl.u32 683565275, %v2252
    %v2254 = vshll.u32 683565275, %v2251
    %v2255 = vshrl.u32 2475754826, %v2252
    %v2256 = vor.u32 %v2254, %v2255
    %v2257 = vshll.u32 2475754826, %v2251
    %v2258 = vshrl.u32 2131351028, %v2252
    %v2259 = vor.u32 %v2257, %v2258
    %v2260 = vshll.u32 2131351028, %v2251
    %v2261 = vshrl.u32 2102212464, %v2252
    %v2262 = vor.u32 %v2260, %v2261
    %v2263 = vshll.u32 2102212464, %v2251
    %v2264 = vshrl.u32 920167782, %v2252
    %v2265 = vor.u32 %v2263, %v2264
    %v2266 = vshll.u32 920167782, %v2251
    %v2267 = vshrl.u32 1326507024, %v2252
    %v2268 = vor.u32 %v2266, %v2267
    %vm2269 = vcmp.lt.s32.totalorder %v2250, 1
    %vm2270 = vcmp.lt.s32.totalorder %v2250, 2
    %vm2271 = vcmp.lt.s32.totalorder %v2250, 3
    %vm2272 = vcmp.lt.s32.totalorder %v2250, 4
    %v2273 = vsel %vm2269, %v2253, %v2256
    %v2274 = vsel %vm2272, %v2262, 2102212464
    %v2275 = vsel %vm2271, %v2259, %v2274
    %v2276 = vsel %vm2270, %v2273, %v2275
    %v2277 = vsel %vm2269, %v2256, %v2259
    %v2278 = vsel %vm2272, %v2265, 920167782
    %v2279 = vsel %vm2271, %v2262, %v2278
    %v2280 = vsel %vm2270, %v2277, %v2279
    %v2281 = vsel %vm2269, %v2259, %v2262
    %v2282 = vsel %vm2272, %v2268, 1326507024
    %v2283 = vsel %vm2271, %v2265, %v2282
    %v2284 = vsel %vm2270, %v2281, %v2283
    %v2285 = vshll.u32 %v2245, 8
    %v2286 = vand.u32 %v2285, 65535
    %v2287 = vshrl.u32 %v2285, 16
    %v2288 = vand.u32 %v2284, 65535
    %v2289 = vshrl.u32 %v2284, 16
    %v2290 = vmul.u32 %v2286, %v2288
    %v2291 = vmul.u32 %v2286, %v2289
    %v2292 = vmul.u32 %v2287, %v2288
    %v2293 = vmul.u32 %v2287, %v2289
    %v2294 = vshll.u32 %v2291, 16
    %v2295 = vshrl.u32 %v2291, 16
    %v2296 = vshll.u32 %v2292, 16
    %v2297 = vshrl.u32 %v2292, 16
    %vm2298 = vc.u32 %v2290, %v2294
    %v2299 = vsel %vm2298, 1, 0
    %v2300 = vadd.s32 %v2290, %v2294
    %v2301 = vadd.s32 %v2293, %v2299
    %vm2302 = vc.u32 %v2300, %v2296
    %v2303 = vsel %vm2302, 1, 0
    %v2304 = vadd.s32 %v2300, %v2296
    %v2305 = vadd.s32 %v2301, %v2303
    %v2306 = vadd.s32 %v2305, %v2295
    %v2307 = vadd.s32 %v2306, %v2297
    %v2308 = vand.u32 %v2285, 65535
    %v2309 = vshrl.u32 %v2285, 16
    %v2310 = vand.u32 %v2280, 65535
    %v2311 = vshrl.u32 %v2280, 16
    %v2312 = vmul.u32 %v2308, %v2310
    %v2313 = vmul.u32 %v2308, %v2311
    %v2314 = vmul.u32 %v2309, %v2310
    %v2315 = vmul.u32 %v2309, %v2311
    %v2316 = vshll.u32 %v2313, 16
    %v2317 = vshrl.u32 %v2313, 16
    %v2318 = vshll.u32 %v2314, 16
    %v2319 = vshrl.u32 %v2314, 16
    %vm2320 = vc.u32 %v2312, %v2316
    %v2321 = vsel %vm2320, 1, 0
    %v2322 = vadd.s32 %v2312, %v2316
    %v2323 = vadd.s32 %v2315, %v2321
    %vm2324 = vc.u32 %v2322, %v2318
    %v2325 = vsel %vm2324, 1, 0
    %v2326 = vadd.s32 %v2322, %v2318
    %v2327 = vadd.s32 %v2323, %v2325
    %v2328 = vadd.s32 %v2327, %v2317
    %v2329 = vadd.s32 %v2328, %v2319
    %v2330 = vmul.u32 %v2285, %v2276
    %v2331 = vadd.s32 %v2307, %v2326
    %vm2332 = vc.u32 %v2307, %v2326
    %v2333 = vadd.s32 %v2329, 1
    %v2334 = vsel %vm2332, %v2333, %v2329
    %v2335 = vadd.s32 %v2330, %v2334
    %v2336 = vadd.s32 %v2335, 536870912
    %v2337 = vshrl.u32 %v2336, 30
    %v2338 = vshll.u32 %v2337, 30
    %v2339 = vsub.s32 %v2335, %v2338
    %vm2340 = vcmp.lt.s32.totalorder %v2339, 0
    %v2341 = vsub.s32 0, %v2339
    %v2342 = vsel %vm2340, %v2341, %v2339
    %v2343 = vclz %v2342
    %v2344 = vsub.s32 %v2343, 2
    %vm2345 = vcmp.gt.s32.totalorder 0, %v2344
    %v2346 = vsel %vm2345, 0, %v2344
    %v2347 = vsub.s32 32, %v2346
    %v2348 = vshll.u32 %v2339, %v2346
    %v2349 = vshrl.u32 %v2331, %v2347
    %v2350 = vor.u32 %v2348, %v2349
    %v2351 = vsub.s32 4294967266, %v2346
    %v2352 = vadd.s32 %v2351, 127
    %v2353 = vshll.u32 %v2352, 23
    %v2354 = vor.u32 4788187, %v2353
    %v2355 = vand.u32 2147483647, %v2354
    %v2357 = vcvt.s32.f32 %v2350
    %v2358 = vmul.f32 %v2357, %v2355
    %v2359 = vxor.u32 %v2358, 2147483648
    %v2360 = vsel %vm2239, %v2359, %v2358
    %v2361 = vsub.s32 4, %v2337
    %v2362 = vsel %vm2239, %v2361, %v2337
    %v2363 = vsel %vm2238, %v1882, %v2360
    %v2364 = vsel %vm2238, 0, %v2362
    %v2365 = vmul.f32 %v2363, %v2363
    %v2366 = vmul.f32 %v2365, -0.001358992
    %v2367 = vadd.f32 %v2366, 0.041655596
    %v2368 = vmul.f32 %v2365, %v2367
    %v2369 = vadd.f32 %v2368, -0.4999988
    %v2370 = vmul.f32 %v2365, %v2369
    %v2371 = vadd.f32 1.0, %v2370
    %v2372 = vmul.f32 %v2363, %v2363
    %v2373 = vmul.f32 %v2372, -0.00019511016
    %v2374 = vadd.f32 %v2373, 0.008332121
    %v2375 = vmul.f32 %v2372, %v2374
    %v2376 = vadd.f32 %v2375, -0.16666654
    %v2377 = vmul.f32 %v2372, %v2376
    %v2378 = vadd.f32 %v2377, 1.0
    %v2379 = vmul.f32 %v2378, %v2363
    %vm2380 = vweird.f32 %v1882
    %v2381 = vadd.s32 %v2364, 3
    %v2382 = vand.u32 %v2381, 3
    %vm2383 = vcmp.lt.s32.totalorder %v2382, 2
    %vm2384 = vcmp.eq.s32.totalorder %v2382, 0
    %v2385 = vxor.u32 %v2379, 2147483648
    %v2386 = vsel %vm2384, %v2371, %v2385
    %vm2387 = vcmp.eq.s32.totalorder %v2382, 2
    %v2388 = vxor.u32 %v2371, 2147483648
    %v2389 = vsel %vm2387, %v2388, %v2379
    %v2390 = vsel %vm2383, %v2386, %v2389
    %v2391 = vsel %vm2380, nan, %v2390
    %v2392 = vand.u32 2147483647, %v1883
    %vm2393 = vcmp.le.f32.partialorder %v2392, 0.7853982
    %vm2394 = vcmp.lt.s32.totalorder %v1883, 0
    %v2395 = vand.u32 %v1883, 2139095040
    %v2396 = vshrl.u32 %v2395, 23
    %v2397 = vsub.s32 %v2396, 127
    %v2398 = vand.u32 2147483647, %v1883
    %v2399 = vand.u32 %v2398, 8388607
    %v2400 = vor.u32 %v2399, 8388608
    %v2401 = vsub.s32 0, %v2400
    %v2402 = vadd.s32 %v2397, 1
    %vm2403 = vcmp.gt.s32.totalorder %v2402, 0
    %v2404 = vsel %vm2403, %v2402, 0
    %v2405 = vshrl.u32 %v2404, 5
    %v2406 = vand.u32 %v2404, 31
    %v2407 = vsub.s32 32, %v2406
    %v2408 = vshrl.u32 683565275, %v2407
    %v2409 = vshll.u32 683565275, %v2406
    %v2410 = vshrl.u32 2475754826, %v2407
    %v2411 = vor.u32 %v2409, %v2410
    %v2412 = vshll.u32 2475754826, %v2406
    %v2413 = vshrl.u32 2131351028, %v2407
    %v2414 = vor.u32 %v2412, %v2413
    %v2415 = vshll.u32 2131351028, %v2406
    %v2416 = vshrl.u32 2102212464, %v2407
    %v2417 = vor.u32 %v2415, %v2416
    %v2418 = vshll.u32 2102212464, %v2406
    %v2419 = vshrl.u32 920167782, %v2407
    %v2420 = vor.u32 %v2418, %v2419
    %v2421 = vshll.u32 920167782, %v2406
    %v2422 = vshrl.u32 1326507024, %v2407
    %v2423 = vor.u32 %v2421, %v2422
    %vm2424 = vcmp.lt.s32.totalorder %v2405, 1
    %vm2425 = vcmp.lt.s32.totalorder %v2405, 2
    %vm2426 = vcmp.lt.s32.totalorder %v2405, 3
    %vm2427 = vcmp.lt.s32.totalorder %v2405, 4
    %v2428 = vsel %vm2424, %v2408, %v2411
    %v2429 = vsel %vm2427, %v2417, 2102212464
    %v2430 = vsel %vm2426, %v2414, %v2429
    %v2431 = vsel %vm2425, %v2428, %v2430
    %v2432 = vsel %vm2424, %v2411, %v2414
    %v2433 = vsel %vm2427, %v2420, 920167782
    %v2434 = vsel %vm2426, %v2417, %v2433
    %v2435 = vsel %vm2425, %v2432, %v2434
    %v2436 = vsel %vm2424, %v2414, %v2417
    %v2437 = vsel %vm2427, %v2423, 1326507024
    %v2438 = vsel %vm2426, %v2420, %v2437
    %v2439 = vsel %vm2425, %v2436, %v2438
    %v2440 = vshll.u32 %v2400, 8
    %v2441 = vand.u32 %v2440, 65535
    %v2442 = vshrl.u32 %v2440, 16
    %v2443 = vand.u32 %v2439, 65535
    %v2444 = vshrl.u32 %v2439, 16
    %v2445 = vmul.u32 %v2441, %v2443
    %v2446 = vmul.u32 %v2441, %v2444
    %v2447 = vmul.u32 %v2442, %v2443
    %v2448 = vmul.u32 %v2442, %v2444
    %v2449 = vshll.u32 %v2446, 16
    %v2450 = vshrl.u32 %v2446, 16
    %v2451 = vshll.u32 %v2447, 16
    %v2452 = vshrl.u32 %v2447, 16
    %vm2453 = vc.u32 %v2445, %v2449
    %v2454 = vsel %vm2453, 1, 0
    %v2455 = vadd.s32 %v2445, %v2449
    %v2456 = vadd.s32 %v2448, %v2454
    %vm2457 = vc.u32 %v2455, %v2451
    %v2458 = vsel %vm2457, 1, 0
    %v2459 = vadd.s32 %v2455, %v2451
    %v2460 = vadd.s32 %v2456, %v2458
    %v2461 = vadd.s32 %v2460, %v2450
    %v2462 = vadd.s32 %v2461, %v2452
    %v2463 = vand.u32 %v2440, 65535
    %v2464 = vshrl.u32 %v2440, 16
    %v2465 = vand.u32 %v2435, 65535
    %v2466 = vshrl.u32 %v2435, 16
    %v2467 = vmul.u32 %v2463, %v2465
    %v2468 = vmul.u32 %v2463, %v2466
    %v2469 = vmul.u32 %v2464, %v2465
    %v2470 = vmul.u32 %v2464, %v2466
    %v2471 = vshll.u32 %v2468, 16
    %v2472 = vshrl.u32 %v2468, 16
    %v2473 = vshll.u32 %v2469, 16
    %v2474 = vshrl.u32 %v2469, 16
    %vm2475 = vc.u32 %v2467, %v2471
    %v2476 = vsel %vm2475, 1, 0
    %v2477 = vadd.s32 %v2467, %v2471
    %v2478 = vadd.s32 %v2470, %v2476
    %vm2479 = vc.u32 %v2477, %v2473
    %v2480 = vsel %vm2479, 1, 0
    %v2481 = vadd.s32 %v2477, %v2473
    %v2482 = vadd.s32 %v2478, %v2480
    %v2483 = vadd.s32 %v2482, %v2472
    %v2484 = vadd.s32 %v2483, %v2474
    %v2485 = vmul.u32 %v2440, %v2431
    %v2486 = vadd.s32 %v2462, %v2481
    %vm2487 = vc.u32 %v2462, %v2481
    %v2488 = vadd.s32 %v2484, 1
    %v2489 = vsel %vm2487, %v2488, %v2484
    %v2490 = vadd.s32 %v2485, %v2489
    %v2491 = vadd.s32 %v2490, 536870912
    %v2492 = vshrl.u32 %v2491, 30
    %v2493 = vshll.u32 %v2492, 30
    %v2494 = vsub.s32 %v2490, %v2493
    %vm2495 = vcmp.lt.s32.totalorder %v2494, 0
    %v2496 = vsub.s32 0, %v2494
    %v2497 = vsel %vm2495, %v2496, %v2494
    %v2498 = vclz %v2497
    %v2499 = vsub.s32 %v2498, 2
    %vm2500 = vcmp.gt.s32.totalorder 0, %v2499
    %v2501 = vsel %vm2500, 0, %v2499
    %v2502 = vsub.s32 32, %v2501
    %v2503 = vshll.u32 %v2494, %v2501
    %v2504 = vshrl.u32 %v2486, %v2502
    %v2505 = vor.u32 %v2503, %v2504
    %v2506 = vsub.s32 4294967266, %v2501
    %v2507 = vadd.s32 %v2506, 127
    %v2508 = vshll.u32 %v2507, 23
    %v2509 = vor.u32 4788187, %v2508
    %v2510 = vand.u32 2147483647, %v2509
    %v2512 = vcvt.s32.f32 %v2505
    %v2513 = vmul.f32 %v2512, %v2510
    %v2514 = vxor.u32 %v2513, 2147483648
    %v2515 = vsel %vm2394, %v2514, %v2513
    %v2516 = vsub.s32 4, %v2492
    %v2517 = vsel %vm2394, %v2516, %v2492
    %v2518 = vsel %vm2393, %v1883, %v2515
    %v2519 = vsel %vm2393, 0, %v2517
    %v2520 = vmul.f32 %v2518, %v2518
    %v2521 = vmul.f32 %v2520, -0.001358992
    %v2522 = vadd.f32 %v2521, 0.041655596
    %v2523 = vmul.f32 %v2520, %v2522
    %v2524 = vadd.f32 %v2523, -0.4999988
    %v2525 = vmul.f32 %v2520, %v2524
    %v2526 = vadd.f32 1.0, %v2525
    %v2527 = vmul.f32 %v2518, %v2518
    %v2528 = vmul.f32 %v2527, -0.00019511016
    %v2529 = vadd.f32 %v2528, 0.008332121
    %v2530 = vmul.f32 %v2527, %v2529
    %v2531 = vadd.f32 %v2530, -0.16666654
    %v2532 = vmul.f32 %v2527, %v2531
    %v2533 = vadd.f32 %v2532, 1.0
    %v2534 = vmul.f32 %v2533, %v2518
    %vm2535 = vweird.f32 %v1883
    %v2536 = vadd.s32 %v2519, 3
    %v2537 = vand.u32 %v2536, 3
    %vm2538 = vcmp.lt.s32.totalorder %v2537, 2
    %vm2539 = vcmp.eq.s32.totalorder %v2537, 0
    %v2540 = vxor.u32 %v2534, 2147483648
    %v2541 = vsel %vm2539, %v2526, %v2540
    %vm2542 = vcmp.eq.s32.totalorder %v2537, 2
    %v2543 = vxor.u32 %v2526, 2147483648
    %v2544 = vsel %vm2542, %v2543, %v2534
    %v2545 = vsel %vm2538, %v2541, %v2544
    %v2546 = vsel %vm2535, nan, %v2545
    %v2547 = vmul.f32 %v1921, 0.5
    %v2548 = vmul.f32 %v1922, 0.5
    %v2549 = vmul.f32 %v2547, %v2082
    %v2550 = vmul.f32 %v2548, %v2236
    %v2551 = vmul.f32 %v2547, %v2391
    %v2552 = vmul.f32 %v2548, %v2546
    %v2553 = vmul.f32 %v1927, -0.5
    %v2554 = vmul.f32 %v1928, -0.5
    %v2555 = vmul.f32 %v2553, %v2391
    %v2556 = vmul.f32 %v2554, %v2546
    %v2557 = vmul.f32 %v1927, 0.5
    %v2558 = vmul.f32 %v1928, 0.5
    %v2559 = vmul.f32 %v2557, %v2082
    %v2560 = vmul.f32 %v2558, %v2236
    %v2561 = vsub.f32 %v1911, %v2549
    %v2562 = vsub.f32 %v1912, %v2550
    %v2563 = vsub.f32 %v2561, %v2555
    %v2564 = vsub.f32 %v2562, %v2556
    %v2565 = vsub.f32 %v1915, %v2551
    %v2566 = vsub.f32 %v1916, %v2552
    %v2567 = vsub.f32 %v2565, %v2559
    %v2568 = vsub.f32 %v2566, %v2560
    %v2569 = vadd.f32 %v1911, %v2549
    %v2570 = vadd.f32 %v1912, %v2550
    %v2571 = vsub.f32 %v2569, %v2555
    %v2572 = vsub.f32 %v2570, %v2556
    %v2573 = vadd.f32 %v1915, %v2551
    %v2574 = vadd.f32 %v1916, %v2552
    %v2575 = vsub.f32 %v2573, %v2559
    %v2576 = vsub.f32 %v2574, %v2560
    %v2577 = vadd.f32 %v2569, %v2555
    %v2578 = vadd.f32 %v2570, %v2556
    %v2579 = vadd.f32 %v2573, %v2559
    %v2580 = vadd.f32 %v2574, %v2560
    %v2581 = vadd.f32 %v2561, %v2555
    %v2582 = vadd.f32 %v2562, %v2556
    %v2583 = vadd.f32 %v2565, %v2559
    %v2584 = vadd.f32 %v2566, %v2560
    %v2585 = vmin.f32 %v2563, %v2571
    %v2586 = vmin.f32 %v2564, %v2572
    %v2587 = vmin.f32 %v2577, %v2581
    %v2588 = vmin.f32 %v2578, %v2582
    %v2589 = vmin.f32 %v2585, %v2587
    %v2590 = vmin.f32 %v2586, %v2588
    %v2591 = vmin.f32 %v2567, %v2575
    %v2592 = vmin.f32 %v2568, %v2576
    %v2593 = vmin.f32 %v2579, %v2583
    %v2594 = vmin.f32 %v2580, %v2584
    %v2595 = vmin.f32 %v2591, %v2593
    %v2596 = vmin.f32 %v2592, %v2594
    %v2597 = vmax.f32 %v2563, %v2571
    %v2598 = vmax.f32 %v2564, %v2572
    %v2599 = vmax.f32 %v2577, %v2581
    %v2600 = vmax.f32 %v2578, %v2582
    %v2601 = vmax.f32 %v2597, %v2599
    %v2602 = vmax.f32 %v2598, %v2600
    %v2603 = vmax.f32 %v2567, %v2575
    %v2604 = vmax.f32 %v2568, %v2576
    %v2605 = vmax.f32 %v2579, %v2583
    %v2606 = vmax.f32 %v2580, %v2584
    %v2607 = vmax.f32 %v2603, %v2605
    %v2608 = vmax.f32 %v2604, %v2606
    %v2609 = vsel %vm911, %v2601, %v2607
    %v2610 = vsel %vm911, %v2602, %v2608
    %v2611 = vsel %vm837, %v2595, %v2609
    %v2612 = vsel %vm837, %v2596, %v2610
    %v2613 = vsel %vm763, %v2589, %v2611
    %v2614 = vsel %vm763, %v2590, %v2612
    %vm2615 = vcmask 31744
    %2616 = vst.msk [vmem:[%s6] sm:$0xff] %vm2615, %v2613
    %2617 = vst.msk [vmem:[%s6 + $0x8] sm:$0xff] %vm2615, %v2614
    %v2618 = vcvt.s32.f32 %v32
    %v2619 = vcvt.s32.f32 %v33
    %v2620 = vcvt.s32.f32 %v36
    %v2621 = vcvt.s32.f32 %v37
    %v2622 = vsub.f32 %v2571, %v2563
    %v2623 = vsub.f32 %v2572, %v2564
    %v2624 = vsub.f32 %v2620, %v2567
    %v2625 = vsub.f32 %v2621, %v2567
    %v2626 = vsub.f32 %v2620, %v2568
    %v2627 = vsub.f32 %v2621, %v2568
    %v2628 = vmul.f32 %v2622, %v2624
    %v2629 = vmul.f32 %v2622, %v2625
    %v2630 = vmul.f32 %v2623, %v2626
    %v2631 = vmul.f32 %v2623, %v2627
    %v2632 = vsub.f32 %v2575, %v2567
    %v2633 = vsub.f32 %v2576, %v2568
    %v2634 = vsub.f32 %v2618, %v2563
    %v2635 = vsub.f32 %v2619, %v2563
    %v2636 = vsub.f32 %v2618, %v2564
    %v2637 = vsub.f32 %v2619, %v2564
    %v2638 = vmul.f32 %v2632, %v2634
    %v2639 = vmul.f32 %v2632, %v2635
    %v2640 = vmul.f32 %v2633, %v2636
    %v2641 = vmul.f32 %v2633, %v2637
    %v2642 = vsub.f32 %v2628, %v2638
    %v2643 = vsub.f32 %v2629, %v2639
    %v2644 = vsub.f32 %v2630, %v2640
    %v2645 = vsub.f32 %v2631, %v2641
    %v2646 = vsub.f32 %v2577, %v2571
    %v2647 = vsub.f32 %v2578, %v2572
    %v2648 = vsub.f32 %v2620, %v2575
    %v2649 = vsub.f32 %v2621, %v2575
    %v2650 = vsub.f32 %v2620, %v2576
    %v2651 = vsub.f32 %v2621, %v2576
    %v2652 = vmul.f32 %v2646, %v2648
    %v2653 = vmul.f32 %v2646, %v2649
    %v2654 = vmul.f32 %v2647, %v2650
    %v2655 = vmul.f32 %v2647, %v2651
    %v2656 = vsub.f32 %v2579, %v2575
    %v2657 = vsub.f32 %v2580, %v2576
    %v2658 = vsub.f32 %v2618, %v2571
    %v2659 = vsub.f32 %v2619, %v2571
    %v2660 = vsub.f32 %v2618, %v2572
    %v2661 = vsub.f32 %v2619, %v2572
    %v2662 = vmul.f32 %v2656, %v2658
    %v2663 = vmul.f32 %v2656, %v2659
    %v2664 = vmul.f32 %v2657, %v2660
    %v2665 = vmul.f32 %v2657, %v2661
    %v2666 = vsub.f32 %v2652, %v2662
    %v2667 = vsub.f32 %v2653, %v2663
    %v2668 = vsub.f32 %v2654, %v2664
    %v2669 = vsub.f32 %v2655, %v2665
    %v2670 = vsub.f32 %v2581, %v2577
    %v2671 = vsub.f32 %v2582, %v2578
    %v2672 = vsub.f32 %v2620, %v2579
    %v2673 = vsub.f32 %v2621, %v2579
    %v2674 = vsub.f32 %v2620, %v2580
    %v2675 = vsub.f32 %v2621, %v2580
    %v2676 = vmul.f32 %v2670, %v2672
    %v2677 = vmul.f32 %v2670, %v2673
    %v2678 = vmul.f32 %v2671, %v2674
    %v2679 = vmul.f32 %v2671, %v2675
    %v2680 = vsub.f32 %v2583, %v2579
    %v2681 = vsub.f32 %v2584, %v2580
    %v2682 = vsub.f32 %v2618, %v2577
    %v2683 = vsub.f32 %v2619, %v2577
    %v2684 = vsub.f32 %v2618, %v2578
    %v2685 = vsub.f32 %v2619, %v2578
    %v2686 = vmul.f32 %v2680, %v2682
    %v2687 = vmul.f32 %v2680, %v2683
    %v2688 = vmul.f32 %v2681, %v2684
    %v2689 = vmul.f32 %v2681, %v2685
    %v2690 = vsub.f32 %v2676, %v2686
    %v2691 = vsub.f32 %v2677, %v2687
    %v2692 = vsub.f32 %v2678, %v2688
    %v2693 = vsub.f32 %v2679, %v2689
    %v2694 = vsub.f32 %v2563, %v2581
    %v2695 = vsub.f32 %v2564, %v2582
    %v2696 = vsub.f32 %v2620, %v2583
    %v2697 = vsub.f32 %v2621, %v2583
    %v2698 = vsub.f32 %v2620, %v2584
    %v2699 = vsub.f32 %v2621, %v2584
    %v2700 = vmul.f32 %v2694, %v2696
    %v2701 = vmul.f32 %v2694, %v2697
    %v2702 = vmul.f32 %v2695, %v2698
    %v2703 = vmul.f32 %v2695, %v2699
    %v2704 = vsub.f32 %v2567, %v2583
    %v2705 = vsub.f32 %v2568, %v2584
    %v2706 = vsub.f32 %v2618, %v2581
    %v2707 = vsub.f32 %v2619, %v2581
    %v2708 = vsub.f32 %v2618, %v2582
    %v2709 = vsub.f32 %v2619, %v2582
    %v2710 = vmul.f32 %v2704, %v2706
    %v2711 = vmul.f32 %v2704, %v2707
    %v2712 = vmul.f32 %v2705, %v2708
    %v2713 = vmul.f32 %v2705, %v2709
    %v2714 = vsub.f32 %v2700, %v2710
    %v2715 = vsub.f32 %v2701, %v2711
    %v2716 = vsub.f32 %v2702, %v2712
    %v2717 = vsub.f32 %v2703, %v2713
    %vm2718 = vcmp.ge.f32.partialorder %v2642, 0.0
    %vm2719 = vcmp.ge.f32.partialorder %v2643, 0.0
    %vm2720 = vcmp.ge.f32.partialorder %v2644, 0.0
    %vm2721 = vcmp.ge.f32.partialorder %v2645, 0.0
    %vm2722 = vcmp.ge.f32.partialorder %v2666, 0.0
    %vm2723 = vcmp.ge.f32.partialorder %v2667, 0.0
    %vm2724 = vcmp.ge.f32.partialorder %v2668, 0.0
    %vm2725 = vcmp.ge.f32.partialorder %v2669, 0.0
    %vm2726 = vmand %vm2718, %vm2722
    %vm2727 = vmand %vm2719, %vm2723
    %vm2728 = vmand %vm2720, %vm2724
    %vm2729 = vmand %vm2721, %vm2725
    %vm2730 = vcmp.ge.f32.partialorder %v2690, 0.0
    %vm2731 = vcmp.ge.f32.partialorder %v2691, 0.0
    %vm2732 = vcmp.ge.f32.partialorder %v2692, 0.0
    %vm2733 = vcmp.ge.f32.partialorder %v2693, 0.0
    %vm2734 = vmand %vm2726, %vm2730
    %vm2735 = vmand %vm2727, %vm2731
    %vm2736 = vmand %vm2728, %vm2732
    %vm2737 = vmand %vm2729, %vm2733
    %vm2738 = vcmp.ge.f32.partialorder %v2714, 0.0
    %vm2739 = vcmp.ge.f32.partialorder %v2715, 0.0
    %vm2740 = vcmp.ge.f32.partialorder %v2716, 0.0
    %vm2741 = vcmp.ge.f32.partialorder %v2717, 0.0
    %vm2742 = vmand %vm2734, %vm2738
    %vm2743 = vmand %vm2735, %vm2739
    %vm2744 = vmand %vm2736, %vm2740
    %vm2745 = vmand %vm2737, %vm2741
    %vm2746 = vcmp.le.f32.partialorder %v2642, 0.0
    %vm2747 = vcmp.le.f32.partialorder %v2643, 0.0
    %vm2748 = vcmp.le.f32.partialorder %v2644, 0.0
    %vm2749 = vcmp.le.f32.partialorder %v2645, 0.0
    %vm2750 = vcmp.le.f32.partialorder %v2666, 0.0
    %vm2751 = vcmp.le.f32.partialorder %v2667, 0.0
    %vm2752 = vcmp.le.f32.partialorder %v2668, 0.0
    %vm2753 = vcmp.le.f32.partialorder %v2669, 0.0
    %vm2754 = vmand %vm2746, %vm2750
    %vm2755 = vmand %vm2747, %vm2751
    %vm2756 = vmand %vm2748, %vm2752
    %vm2757 = vmand %vm2749, %vm2753
    %vm2758 = vcmp.le.f32.partialorder %v2690, 0.0
    %vm2759 = vcmp.le.f32.partialorder %v2691, 0.0
    %vm2760 = vcmp.le.f32.partialorder %v2692, 0.0
    %vm2761 = vcmp.le.f32.partialorder %v2693, 0.0
    %vm2762 = vmand %vm2754, %vm2758
    %vm2763 = vmand %vm2755, %vm2759
    %vm2764 = vmand %vm2756, %vm2760
    %vm2765 = vmand %vm2757, %vm2761
    %vm2766 = vcmp.le.f32.partialorder %v2714, 0.0
    %vm2767 = vcmp.le.f32.partialorder %v2715, 0.0
    %vm2768 = vcmp.le.f32.partialorder %v2716, 0.0
    %vm2769 = vcmp.le.f32.partialorder %v2717, 0.0
    %vm2770 = vmand %vm2762, %vm2766
    %vm2771 = vmand %vm2763, %vm2767
    %vm2772 = vmand %vm2764, %vm2768
    %vm2773 = vmand %vm2765, %vm2769
    %vm2774 = vmor %vm2742, %vm2770
    %vm2775 = vmor %vm2743, %vm2771
    %vm2776 = vmor %vm2744, %vm2772
    %vm2777 = vmor %vm2745, %vm2773
    %v2778 = vsel %vm2774, 1.0, 0.0
    %v2779 = vsel %vm2775, 1.0, 0.0
    %v2780 = vsel %vm2776, 1.0, 0.0
    %v2781 = vsel %vm2777, 1.0, 0.0
    %2782 = vst [vmem:[%s7] sm:$0xff] %v2778
    %2783 = vst [vmem:[%s7 + $0x8] sm:$0xff] %v2779
    %2784 = vst [vmem:[%s7 + $0x10] sm:$0xff] %v2780
    %2785 = vst [vmem:[%s7 + $0x18] sm:$0xff] %v2781
    // Predicated region
    $region22: #{obb_rpn_forward.1} parent=1 // pred_check
      _
    $region23: #{obb_rpn_forward.1} parent=1 // pred_check_branch
      %2787 = sbr.rel (0) target = $region25
    $region24: #{obb_rpn_forward.1} parent=1 // pred_region
      %2789 = vsyncadd [#allocation3], 0
      %s2791 = sshll.u32 [#allocation2], 4
      %s2792 = int_to_ptr.vmem [resolvable:$true] %s2791
      %s2793 = sshll.u32 %s5, 4
      %s2794 = int_to_ptr.hbm [resolvable:$true] %s2793
      %2796 = dma.vmem_to_hbm [thread:$0]  %s2792, 32, %s2794, [#allocation3]
    $region25: #{obb_rpn_forward.1} parent=1 // pred_fallthru
      _
    // Predicated region
    $region26: #{obb_rpn_forward.1} parent=1 // pred_check
      _
    $region27: #{obb_rpn_forward.1} parent=1 // pred_check_branch
      %2798 = sbr.rel (0) target = $region29
    $region28: #{obb_rpn_forward.1} parent=1 // pred_region
      _
    $region29: #{obb_rpn_forward.1} parent=1 // pred_fallthru
      _
    // Predicated region
    $region30: #{obb_rpn_forward.1} parent=1 // pred_check
      _
    $region31: #{obb_rpn_forward.1} parent=1 // pred_check_branch
      %2800 = sbr.rel (0) target = $region33
    $region32: #{obb_rpn_forward.1} parent=1 // pred_region
      _
    $region33: #{obb_rpn_forward.1} parent=1 // pred_fallthru
      _
    // Predicated region
    $region34: #{obb_rpn_forward.1} parent=1 // pred_check
      _
    $region35: #{obb_rpn_forward.1} parent=1 // pred_check_branch
      %2802 = sbr.rel (0) target = $region37
    $region36: #{obb_rpn_forward.1} parent=1 // pred_region
      %2804 = dma.done [#allocation3], 32
    $region37: #{obb_rpn_forward.1} parent=1 // pred_fallthru
      _
    // Predicated region
    $region38: #{obb_rpn_forward.1} parent=1 // pred_check
      _
    $region39: #{obb_rpn_forward.1} parent=1 // pred_check_branch
      %2806 = sbr.rel (0) target = $region41
    $region40: #{obb_rpn_forward.1} parent=1 // pred_region
      _
    $region41: #{obb_rpn_forward.1} parent=1 // pred_fallthru
      _
    // Predicated region
    $region42: #{obb_rpn_forward.1} parent=1 // pred_check
      _
    $region43: #{obb_rpn_forward.1} parent=1 // pred_check_branch
      %2808 = sbr.rel (0) target = $region45
    $region44: #{obb_rpn_forward.1} parent=1 // pred_region
      _
    $region45: #{obb_rpn_forward.1} parent=1 // pred_fallthru
      _
    %2809 = vsyncpa [#allocation3], 1

</llo_original>
